<compile_context>
chip_gen: v5e
topology: v5e:2x2
jax: 0.10.0
libtpu: 0.0.40
codegen_flags: <defaults>
</compile_context>

<pallas_src>
import math
from functools import partial

import jax
import jax.numpy as jnp
import numpy as np
from jax import lax
from jax.experimental import pallas as pl
from jax.experimental.pallas import tpu as pltpu


def _round_up(x, m):
    return ((x + m - 1) // m) * m


_VMEM_LIMIT = 64 * 1024 * 1024   # raise scoped VMEM limit (<= physical on all TPU gens)
_NEG_INF = -1e30


# ---------------------------------------------------------------------------
# Stage A: AdaLN-Zero (norm1) + QKV projection + per-head q/k LayerNorm
# ---------------------------------------------------------------------------
def _adaln_qkv_kernel(x_ref, shift_ref, scale_ref, eshift_ref, escale_ref,
                      g_ref, b_ref, wq_ref, wk_ref, wv_ref,
                      ha_ref, hat_ref, qg_ref, qb_ref, kg_ref, kb_ref,
                      q_out, k_out, v_out,
                      *, head_dim, text_len, norm_eps, qk_eps, seq_tile):
    i = pl.program_id(1)
    tm = x_ref.shape[1]

    x = x_ref[0]                                        # (TM, D), native dtype
    xf = x.astype(jnp.float32)

    row = seq_tile * i + lax.broadcasted_iota(jnp.int32, (tm, 1), 0)
    is_text = row < text_len                            # (TM, 1)

    shift = jnp.where(is_text, eshift_ref[0], shift_ref[0])    # (TM, D) f32
    scale = jnp.where(is_text, escale_ref[0], scale_ref[0])

    mu = jnp.mean(xf, axis=-1, keepdims=True)
    var = jnp.mean(jnp.square(xf - mu), axis=-1, keepdims=True)
    n1 = (xf - mu) * lax.rsqrt(var + norm_eps) * g_ref[...] + b_ref[...]
    n1 = n1 * (1.0 + scale) + shift
    n1c = n1.astype(x.dtype)                            # MXU input dtype (bf16 stays bf16)

    q = jnp.dot(n1c, wq_ref[...], preferred_element_type=jnp.float32)
    k = jnp.dot(n1c, wk_ref[...], preferred_element_type=jnp.float32)
    v = jnp.dot(n1c, wv_ref[...], preferred_element_type=jnp.float32)

    ha = ha_ref[...]          # (D, H) head-assignment matrix
    hat = hat_ref[...]        # (H, D)
    inv_hd = 1.0 / head_dim

    def head_ln(t, gamma, beta):
        # Per-head LayerNorm over head_dim via two tiny segment matmuls
        # (no per-head loop, no reshapes; stays lane-dense on D).
        mean = jnp.dot(jnp.dot(t, ha, preferred_element_type=jnp.float32) * inv_hd,
                       hat, preferred_element_type=jnp.float32)
        tc = t - mean
        var_h = jnp.dot(jnp.dot(tc * tc, ha, preferred_element_type=jnp.float32) * inv_hd,
                        hat, preferred_element_type=jnp.float32)
        return tc * lax.rsqrt(var_h + qk_eps) * gamma + beta

    q_out[0] = head_ln(q, qg_ref[...], qb_ref[...]).astype(q_out.dtype)
    k_out[0] = head_ln(k, kg_ref[...], kb_ref[...]).astype(k_out.dtype)
    v_out[0] = v.astype(v_out.dtype)


# ---------------------------------------------------------------------------
# Stage B: flash attention (online softmax) over the padded sequence
# ---------------------------------------------------------------------------
def _flash_attn_kernel(q_ref, k_ref, v_ref, o_ref, m_scr, l_scr, acc_scr,
                       *, seq_len, kv_tile, sm_scale):
    ki = pl.program_id(3)

    @pl.when(ki == 0)
    def _():
        m_scr[...] = jnp.full(m_scr.shape, _NEG_INF, m_scr.dtype)
        l_scr[...] = jnp.zeros(l_scr.shape, l_scr.dtype)
        acc_scr[...] = jnp.zeros(acc_scr.shape, acc_scr.dtype)

    q = q_ref[0, 0]                                     # (TQ, hd)
    k = k_ref[0, 0]                                     # (TK, hd)
    v = v_ref[0, 0]                                     # (TK, hd)

    s = jnp.dot(q, k.T, preferred_element_type=jnp.float32) * sm_scale     # (TQ, TK) f32
    kpos = ki * kv_tile + lax.broadcasted_iota(jnp.int32, s.shape, 1)
    s = jnp.where(kpos < seq_len, s, _NEG_INF)          # mask padded keys

    m_prev = m_scr[...]
    m_new = jnp.maximum(m_prev, jnp.max(s, axis=-1, keepdims=True))
    alpha = jnp.exp(m_prev - m_new)
    p = jnp.exp(s - m_new)
    l_scr[...] = alpha * l_scr[...] + jnp.sum(p, axis=-1, keepdims=True)
    acc_scr[...] = alpha * acc_scr[...] + jnp.dot(p.astype(v.dtype), v,
                                                  preferred_element_type=jnp.float32)
    m_scr[...] = m_new

    @pl.when(ki == pl.num_programs(3) - 1)
    def _():
        inv_l = pl.reciprocal(l_scr[...], approx=False)
        o_ref[0, 0] = (acc_scr[...] * inv_l).astype(o_ref.dtype)


# ---------------------------------------------------------------------------
# Stage C: out-projection + gated residual + AdaLN-Zero (norm2) + K-tiled FFN
# ---------------------------------------------------------------------------
def _out_proj_ffn_kernel(attn_ref, x_ref, wo_ref, bo_ref,
                         gate1_ref, egate1_ref,
                         shift2_ref, scale2_ref, gate2_ref,
                         eshift2_ref, escale2_ref, egate2_ref,
                         g2_ref, b2_ref,
                         w1_ref, b1_ref, w2_ref, fb2_ref,
                         out_ref,
                         h2_scr, n2_scr, acc_scr,
                         *, text_len, norm_eps, seq_tile):
    i = pl.program_id(1)
    kf = pl.program_id(2)
    tm = x_ref.shape[1]

    row = seq_tile * i + lax.broadcasted_iota(jnp.int32, (tm, 1), 0)
    is_text = row < text_len

    @pl.when(kf == 0)
    def _():
        # attention output projection + gated residual 1
        attn = jnp.dot(attn_ref[0], wo_ref[...],
                       preferred_element_type=jnp.float32) + bo_ref[...]
        gate = jnp.where(is_text, egate1_ref[0], gate1_ref[0])
        h2 = x_ref[0].astype(jnp.float32) + gate * attn
        h2_scr[...] = h2
        # norm2 (AdaLN-Zero)
        mu = jnp.mean(h2, axis=-1, keepdims=True)
        var = jnp.mean(jnp.square(h2 - mu), axis=-1, keepdims=True)
        shift = jnp.where(is_text, eshift2_ref[0], shift2_ref[0])
        scale = jnp.where(is_text, escale2_ref[0], scale2_ref[0])
        n2 = (h2 - mu) * lax.rsqrt(var + norm_eps) * g2_ref[...] + b2_ref[...]
        n2 = n2 * (1.0 + scale) + shift
        n2_scr[...] = n2.astype(n2_scr.dtype)
        acc_scr[...] = jnp.zeros(acc_scr.shape, acc_scr.dtype)

    # Feed-forward, K-tiled over the hidden (Dff) dimension -> weights are streamed
    # through VMEM instead of being resident.
    h1 = jnp.dot(n2_scr[...], w1_ref[...], preferred_element_type=jnp.float32) + b1_ref[...]
    h1 = jax.nn.gelu(h1, approximate=True)              # gelu-approximate (tanh)
    acc_scr[...] += jnp.dot(h1.astype(n2_scr.dtype), w2_ref[...],
                            preferred_element_type=jnp.float32)

    @pl.when(kf == pl.num_programs(2) - 1)
    def _():
        gate_ff = jnp.where(is_text, egate2_ref[0], gate2_ref[0])
        out = h2_scr[...] + gate_ff * (acc_scr[...] + fb2_ref[...])
        out_ref[0] = out.astype(out_ref.dtype)


# ---------------------------------------------------------------------------
# Wrapper
# ---------------------------------------------------------------------------
def cog_tau_block(hidden_states, encoder_hidden_states, temb, params, *,
                  num_heads, head_dim, norm_eps=1e-5, qk_eps=1e-6,
                  seq_tile=512, ff_tile=2048):
    B, Sv, D = hidden_states.shape
    St = encoder_hidden_states.shape[1]
    S = St + Sv
    assert num_heads * head_dim == D
    dt = hidden_states.dtype
    f32 = jnp.float32

    # ---- AdaLN conditioning silu(temb) @ W + b: tiny, hoisted out of the kernels ----
    temb_f = temb.astype(f32)
    temb_act = temb_f * jax.nn.sigmoid(temb_f)

    def conditioning(lw, lb):
        emb = jnp.dot(temb_act, lw.astype(f32),
                      precision=lax.Precision.HIGHEST) + lb.astype(f32)     # (B, 6D)
        return [c[:, None, :] for c in jnp.split(emb, 6, axis=-1)]          # 6 x (B, 1, D)

    shift1, scale1, gate1, eshift1, escale1, egate1 = conditioning(params['n1_lw'], params['n1_lb'])
    shift2, scale2, gate2, eshift2, escale2, egate2 = conditioning(params['n2_lw'], params['n2_lb'])

    # head-assignment matrix + tiled qk-norm affines for per-head LayerNorm in stage A
    head_mat = jnp.repeat(jnp.eye(num_heads, dtype=f32), head_dim, axis=0)  # (D, H)
    head_mat_t = head_mat.T                                                 # (H, D)
    nqg_full = jnp.tile(params['nq_g'].astype(f32), (1, num_heads))         # (1, D)
    nqb_full = jnp.tile(params['nq_b'].astype(f32), (1, num_heads))
    nkg_full = jnp.tile(params['nk_g'].astype(f32), (1, num_heads))
    nkb_full = jnp.tile(params['nk_b'].astype(f32), (1, num_heads))

    # ---- concat [text ; video] once (as the PyTorch block does) and pad the sequence ----
    x = jnp.concatenate([encoder_hidden_states, hidden_states], axis=1)     # (B, S, D)
    TM = min(seq_tile, _round_up(S, 8))
    S_pad = _round_up(S, TM)
    if S_pad != S:
        x = jnp.pad(x, ((0, 0), (0, S_pad - S), (0, 0)))
    n_seq = S_pad // TM

    Dff = params['ff_w1'].shape[1]
    TF = ff_tile if (Dff % ff_tile == 0 and ff_tile % 128 == 0) else Dff
    n_ff = Dff // TF

    # ---------------- Stage A: AdaLN-1 + QKV + qk-norm ----------------
    seq_spec_a = pl.BlockSpec((1, TM, D), lambda b, i: (b, i, 0))
    cond_spec_a = pl.BlockSpec((1, 1, D), lambda b, i: (b, 0, 0))

    def full_a(shape):
        return pl.BlockSpec(shape, lambda b, i: (0,) * len(shape))

    qkv_shape = jax.ShapeDtypeStruct((B, S_pad, D), dt)
    kernel_a = partial(_adaln_qkv_kernel, head_dim=head_dim, text_len=St,
                       norm_eps=norm_eps, qk_eps=qk_eps, seq_tile=TM)
    q, k, v = pl.pallas_call(
        kernel_a,
        out_shape=(qkv_shape, qkv_shape, qkv_shape),
        grid=(B, n_seq),
        in_specs=[seq_spec_a,
                  cond_spec_a, cond_spec_a, cond_spec_a, cond_spec_a,
                  full_a((1, D)), full_a((1, D)),
                  full_a((D, D)), full_a((D, D)), full_a((D, D)),
                  full_a((D, num_heads)), full_a((num_heads, D)),
                  full_a((1, D)), full_a((1, D)), full_a((1, D)), full_a((1, D))],
        out_specs=(seq_spec_a, seq_spec_a, seq_spec_a),
        compiler_params=pltpu.CompilerParams(
            dimension_semantics=("parallel", "parallel"),
            vmem_limit_bytes=_VMEM_LIMIT),
    )(x, shift1, scale1, eshift1, escale1,
      params['n1_g'], params['n1_b'],
      params['wq'], params['wk'], params['wv'],
      head_mat, head_mat_t, nqg_full, nqb_full, nkg_full, nkb_full)

    # ---------------- Stage B: flash attention ----------------
    q4 = jnp.transpose(q.reshape(B, S_pad, num_heads, head_dim), (0, 2, 1, 3))
    k4 = jnp.transpose(k.reshape(B, S_pad, num_heads, head_dim), (0, 2, 1, 3))
    v4 = jnp.transpose(v.reshape(B, S_pad, num_heads, head_dim), (0, 2, 1, 3))

    q_spec = pl.BlockSpec((1, 1, TM, head_dim), lambda b, h, qi, ki: (b, h, qi, 0))
    kv_spec = pl.BlockSpec((1, 1, TM, head_dim), lambda b, h, qi, ki: (b, h, ki, 0))
    kernel_b = partial(_flash_attn_kernel, seq_len=S, kv_tile=TM,
                       sm_scale=1.0 / math.sqrt(head_dim))
    attn4 = pl.pallas_call(
        kernel_b,
        out_shape=jax.ShapeDtypeStruct((B, num_heads, S_pad, head_dim), dt),
        grid=(B, num_heads, n_seq, n_seq),
        in_specs=[q_spec, kv_spec, kv_spec],
        out_specs=q_spec,
        scratch_shapes=[pltpu.VMEM((TM, 1), f32),
                        pltpu.VMEM((TM, 1), f32),
                        pltpu.VMEM((TM, head_dim), f32)],
        compiler_params=pltpu.CompilerParams(
            dimension_semantics=("parallel", "parallel", "parallel", "arbitrary"),
            vmem_limit_bytes=_VMEM_LIMIT),
    )(q4, k4, v4)
    attn = jnp.transpose(attn4, (0, 2, 1, 3)).reshape(B, S_pad, D)

    # ---------------- Stage C: out-proj + AdaLN-2 + FFN ----------------
    seq_spec_c = pl.BlockSpec((1, TM, D), lambda b, i, kf: (b, i, 0))
    cond_spec_c = pl.BlockSpec((1, 1, D), lambda b, i, kf: (b, 0, 0))

    def full_c(shape):
        return pl.BlockSpec(shape, lambda b, i, kf: (0,) * len(shape))

    w1_spec = pl.BlockSpec((D, TF), lambda b, i, kf: (0, kf))
    b1_spec = pl.BlockSpec((1, TF), lambda b, i, kf: (0, kf))
    w2_spec = pl.BlockSpec((TF, D), lambda b, i, kf: (kf, 0))

    kernel_c = partial(_out_proj_ffn_kernel, text_len=St, norm_eps=norm_eps, seq_tile=TM)
    out = pl.pallas_call(
        kernel_c,
        out_shape=jax.ShapeDtypeStruct((B, S_pad, D), dt),
        grid=(B, n_seq, n_ff),
        in_specs=[seq_spec_c, seq_spec_c,
                  full_c((D, D)), full_c((1, D)),
                  cond_spec_c, cond_spec_c,
                  cond_spec_c, cond_spec_c, cond_spec_c,
                  cond_spec_c, cond_spec_c, cond_spec_c,
                  full_c((1, D)), full_c((1, D)),
                  w1_spec, b1_spec, w2_spec, full_c((1, D))],
        out_specs=seq_spec_c,
        scratch_shapes=[pltpu.VMEM((TM, D), f32),      # h2 (post-residual-1), f32
                        pltpu.VMEM((TM, D), dt),       # norm2 output, MXU input dtype
                        pltpu.VMEM((TM, D), f32)],     # FFN accumulator, f32
        input_output_aliases={1: 0},                   # out reuses the padded residual buffer
        compiler_params=pltpu.CompilerParams(
            dimension_semantics=("parallel", "parallel", "arbitrary"),
            vmem_limit_bytes=_VMEM_LIMIT),
    )(attn, x, params['wo'], params['bo'],
      gate1, egate1,
      shift2, scale2, gate2, eshift2, escale2, egate2,
      params['n2_g'], params['n2_b'],
      params['ff_w1'], params['ff_b1'], params['ff_w2'], params['ff_b2'])

    hs_out = out[:, St:S, :]
    enc_out = out[:, :St, :]
    return hs_out, enc_out


# ---------------------------------------------------------------------------
# Parameters / reference
# ---------------------------------------------------------------------------
def init_params(key, dim, time_embed_dim, head_dim, ff_inner):
    ks = jax.random.split(key, 12)
    s = 0.1

    def nrm(k, shape):
        return jax.random.normal(k, shape, jnp.float32) * s

    return dict(
        # norm1 (LayerNormZero): Linear(time_embed_dim, 6*dim, bias=True) + LayerNorm(dim, affine)
        n1_lw=nrm(ks[0], (time_embed_dim, 6 * dim)),
        n1_lb=nrm(ks[1], (1, 6 * dim)),
        n1_g=jnp.ones((1, dim), jnp.float32),
        n1_b=jnp.zeros((1, dim), jnp.float32),
        # attention: to_q/k/v (bias=False), qk LayerNorm(head_dim, eps=1e-6), to_out (bias=True)
        wq=nrm(ks[2], (dim, dim)),
        wk=nrm(ks[3], (dim, dim)),
        wv=nrm(ks[4], (dim, dim)),
        nq_g=jnp.ones((1, head_dim), jnp.float32),
        nq_b=jnp.zeros((1, head_dim), jnp.float32),
        nk_g=jnp.ones((1, head_dim), jnp.float32),
        nk_b=jnp.zeros((1, head_dim), jnp.float32),
        wo=nrm(ks[5], (dim, dim)),
        bo=nrm(ks[6], (1, dim)),
        # norm2 (LayerNormZero)
        n2_lw=nrm(ks[7], (time_embed_dim, 6 * dim)),
        n2_lb=nrm(ks[8], (1, 6 * dim)),
        n2_g=jnp.ones((1, dim), jnp.float32),
        n2_b=jnp.zeros((1, dim), jnp.float32),
        # feed-forward: Linear(dim, ff_inner) -> GELU(tanh) -> Linear(ff_inner, dim)
        ff_w1=nrm(ks[9], (dim, ff_inner)),
        ff_b1=nrm(ks[10], (1, ff_inner)),
        ff_w2=nrm(ks[11], (ff_inner, dim)),
        ff_b2=jnp.zeros((1, dim), jnp.float32),
    )


def reference(hs, enc, temb, p, num_heads, head_dim, norm_eps=1e-5, qk_eps=1e-6):
    """Pure-JAX reference mirroring the PyTorch CogTauBlock forward (rotary/kvcache=None)."""
    def ln(x, g, b, eps):
        mu = x.mean(-1, keepdims=True)
        var = ((x - mu) ** 2).mean(-1, keepdims=True)
        return (x - mu) / jnp.sqrt(var + eps) * g + b

    def silu(x):
        return x * jax.nn.sigmoid(x)

    D = hs.shape[-1]
    St = enc.shape[1]

    def adaln(lw, lb, g, b, h, e):
        emb = silu(temb) @ lw + lb[0]
        shift, scale, gate, e_shift, e_scale, e_gate = jnp.split(emb, 6, axis=1)
        nh = ln(h, g[0], b[0], norm_eps) * (1 + scale)[:, None] + shift[:, None]
        ne = ln(e, g[0], b[0], norm_eps) * (1 + e_scale)[:, None] + e_shift[:, None]
        return nh, ne, gate[:, None], e_gate[:, None]

    nh, ne, g1, eg1 = adaln(p['n1_lw'], p['n1_lb'], p['n1_g'], p['n1_b'], hs, enc)
    x = jnp.concatenate([ne, nh], axis=1)
    B, S, _ = x.shape
    q = (x @ p['wq']).reshape(B, S, num_heads, head_dim).transpose(0, 2, 1, 3)
    k = (x @ p['wk']).reshape(B, S, num_heads, head_dim).transpose(0, 2, 1, 3)
    v = (x @ p['wv']).reshape(B, S, num_heads, head_dim).transpose(0, 2, 1, 3)
    q = ln(q, p['nq_g'][0], p['nq_b'][0], qk_eps)
    k = ln(k, p['nk_g'][0], p['nk_b'][0], qk_eps)
    s = jnp.einsum('bhqd,bhkd->bhqk', q, k) / math.sqrt(head_dim)
    pmat = jax.nn.softmax(s, axis=-1)
    o = jnp.einsum('bhqk,bhkd->bhqd', pmat, v).transpose(0, 2, 1, 3).reshape(B, S, D)
    o = o @ p['wo'] + p['bo'][0]
    hs2 = hs + g1 * o[:, St:]
    enc2 = enc + eg1 * o[:, :St]

    nh, ne, g2, eg2 = adaln(p['n2_lw'], p['n2_lb'], p['n2_g'], p['n2_b'], hs2, enc2)
    y = jnp.concatenate([ne, nh], axis=1)
    h1 = jax.nn.gelu(y @ p['ff_w1'] + p['ff_b1'][0], approximate=True)
    ff = h1 @ p['ff_w2'] + p['ff_b2'][0]
    hs3 = hs2 + g2 * ff[:, St:]
    enc3 = enc2 + eg2 * ff[:, :St]
    return hs3, enc3


if __name__ == "__main__":
    key = jax.random.PRNGKey(0)
    B = 2
    St, Sv = 11, 45                    # text + video tokens (S=56, padded to 64 inside)
    dim, heads, head_dim = 128, 4, 32
    time_embed_dim = 64
    ff_inner = 4 * dim

    k1, k2, k3, k4 = jax.random.split(key, 4)
    hidden_states = jax.random.normal(k1, (B, Sv, dim), jnp.float32)
    encoder_hidden_states = jax.random.normal(k2, (B, St, dim), jnp.float32)
    temb = jax.random.normal(k3, (B, time_embed_dim), jnp.float32)
    params = init_params(k4, dim, time_embed_dim, head_dim, ff_inner)

    # Small tiles so the test exercises multiple sequence tiles, the kv reduction axis,
    # the padded-key mask and the Dff reduction axis.  Production: seq_tile=512,
    # ff_tile=2048 (halve on v7x).
    fwd = jax.jit(partial(cog_tau_block, num_heads=heads, head_dim=head_dim,
                          seq_tile=32, ff_tile=128))
    out_hs, out_enc = fwd(hidden_states, encoder_hidden_states, temb, params)
    jax.block_until_ready((out_hs, out_enc))

    with jax.default_matmul_precision("highest"):
        ref_hs, ref_enc = reference(hidden_states, encoder_hidden_states, temb, params,
                                    heads, head_dim)
    np.testing.assert_allclose(np.asarray(out_hs), np.asarray(ref_hs), rtol=1e-2, atol=1e-2)
    np.testing.assert_allclose(np.asarray(out_enc), np.asarray(ref_enc), rtol=1e-2, atol=1e-2)

    print("KERNEL_OK")
</pallas_src>

<mosaic_0001>
module attributes {stable_mosaic.version = 11 : i64} {
  func.func @_adaln_qkv_kernel(%arg0: i32, %arg1: i32, %arg2: memref<1x32x128xf32, #tpu.memory_space<vmem>>, %arg3: memref<1x1x128xf32, #tpu.memory_space<vmem>>, %arg4: memref<1x1x128xf32, #tpu.memory_space<vmem>>, %arg5: memref<1x1x128xf32, #tpu.memory_space<vmem>>, %arg6: memref<1x1x128xf32, #tpu.memory_space<vmem>>, %arg7: memref<1x128xf32, #tpu.memory_space<vmem>>, %arg8: memref<1x128xf32, #tpu.memory_space<vmem>>, %arg9: memref<128x128xf32, #tpu.memory_space<vmem>>, %arg10: memref<128x128xf32, #tpu.memory_space<vmem>>, %arg11: memref<128x128xf32, #tpu.memory_space<vmem>>, %arg12: memref<128x4xf32, #tpu.memory_space<vmem>>, %arg13: memref<4x128xf32, #tpu.memory_space<vmem>>, %arg14: memref<1x128xf32, #tpu.memory_space<vmem>>, %arg15: memref<1x128xf32, #tpu.memory_space<vmem>>, %arg16: memref<1x128xf32, #tpu.memory_space<vmem>>, %arg17: memref<1x128xf32, #tpu.memory_space<vmem>>, %arg18: memref<1x32x128xf32, #tpu.memory_space<vmem>>, %arg19: memref<1x32x128xf32, #tpu.memory_space<vmem>>, %arg20: memref<1x32x128xf32, #tpu.memory_space<vmem>>) attributes {dimension_semantics = [#tpu.dimension_semantics<parallel>, #tpu.dimension_semantics<parallel>], iteration_bounds = array<i64: 2, 2>, scalar_prefetch = 0 : i64, scratch_operands = 0 : i64, tpu.core_type = #tpu.core_type<tc>, window_params = [{transform_indices = @transform_0, window_bounds = array<i64: 1, 32, 128>}, {transform_indices = @transform_1, window_bounds = array<i64: 1, 1, 128>}, {transform_indices = @transform_2, window_bounds = array<i64: 1, 1, 128>}, {transform_indices = @transform_3, window_bounds = array<i64: 1, 1, 128>}, {transform_indices = @transform_4, window_bounds = array<i64: 1, 1, 128>}, {pipeline_mode = #tpu.pipeline_mode<synchronous>, transform_indices = @transform_5, window_bounds = array<i64: 1, 128>}, {pipeline_mode = #tpu.pipeline_mode<synchronous>, transform_indices = @transform_6, window_bounds = array<i64: 1, 128>}, {pipeline_mode = #tpu.pipeline_mode<synchronous>, transform_indices = @transform_7, window_bounds = array<i64: 128, 128>}, {pipeline_mode = #tpu.pipeline_mode<synchronous>, transform_indices = @transform_8, window_bounds = array<i64: 128, 128>}, {pipeline_mode = #tpu.pipeline_mode<synchronous>, transform_indices = @transform_9, window_bounds = array<i64: 128, 128>}, {pipeline_mode = #tpu.pipeline_mode<synchronous>, transform_indices = @transform_10, window_bounds = array<i64: 128, 4>}, {pipeline_mode = #tpu.pipeline_mode<synchronous>, transform_indices = @transform_11, window_bounds = array<i64: 4, 128>}, {pipeline_mode = #tpu.pipeline_mode<synchronous>, transform_indices = @transform_12, window_bounds = array<i64: 1, 128>}, {pipeline_mode = #tpu.pipeline_mode<synchronous>, transform_indices = @transform_13, window_bounds = array<i64: 1, 128>}, {pipeline_mode = #tpu.pipeline_mode<synchronous>, transform_indices = @transform_14, window_bounds = array<i64: 1, 128>}, {pipeline_mode = #tpu.pipeline_mode<synchronous>, transform_indices = @transform_15, window_bounds = array<i64: 1, 128>}, {transform_indices = @transform_16, window_bounds = array<i64: 1, 32, 128>}, {transform_indices = @transform_17, window_bounds = array<i64: 1, 32, 128>}, {transform_indices = @transform_18, window_bounds = array<i64: 1, 32, 128>}]} {
    %c0 = arith.constant 0 : index
    %c0_0 = arith.constant 0 : index
    %c0_1 = arith.constant 0 : index
    %0 = vector.load %arg2[%c0, %c0_0, %c0_1] : memref<1x32x128xf32, #tpu.memory_space<vmem>>, vector<1x32x128xf32>
    %1 = vector.shape_cast %0 : vector<1x32x128xf32> to vector<32x128xf32>
    %c32_i32 = arith.constant 32 : i32
    %2 = arith.muli %c32_i32, %arg1 : i32
    %3 = tpu.iota {dimensions = array<i32: 0>} : vector<32x1xi32>
    %4 = vector.broadcast %2 : i32 to vector<32x1xi32>
    %5 = arith.addi %4, %3 : vector<32x1xi32>
    %c11_i32 = arith.constant 11 : i32
    %6 = vector.broadcast %c11_i32 : i32 to vector<32x1xi32>
    %7 = arith.cmpi slt, %5, %6 : vector<32x1xi32>
    %c0_2 = arith.constant 0 : index
    %c0_3 = arith.constant 0 : index
    %c0_4 = arith.constant 0 : index
    %8 = vector.load %arg5[%c0_2, %c0_3, %c0_4] : memref<1x1x128xf32, #tpu.memory_space<vmem>>, vector<1x1x128xf32>
    %9 = vector.shape_cast %8 : vector<1x1x128xf32> to vector<1x128xf32>
    %c0_5 = arith.constant 0 : index
    %c0_6 = arith.constant 0 : index
    %c0_7 = arith.constant 0 : index
    %10 = vector.load %arg3[%c0_5, %c0_6, %c0_7] : memref<1x1x128xf32, #tpu.memory_space<vmem>>, vector<1x1x128xf32>
    %11 = vector.shape_cast %10 : vector<1x1x128xf32> to vector<1x128xf32>
    %12 = vector.shape_cast %7 : vector<32x1xi1> to vector<32x1xi1>
    %13 = vector.broadcast %12 : vector<32x1xi1> to vector<32x128xi1>
    %14 = vector.shape_cast %9 : vector<1x128xf32> to vector<1x128xf32>
    %15 = vector.broadcast %14 : vector<1x128xf32> to vector<32x128xf32>
    %16 = vector.shape_cast %11 : vector<1x128xf32> to vector<1x128xf32>
    %17 = vector.broadcast %16 : vector<1x128xf32> to vector<32x128xf32>
    %18 = arith.select %13, %15, %17 : vector<32x128xi1>, vector<32x128xf32>
    %c0_8 = arith.constant 0 : index
    %c0_9 = arith.constant 0 : index
    %c0_10 = arith.constant 0 : index
    %19 = vector.load %arg6[%c0_8, %c0_9, %c0_10] : memref<1x1x128xf32, #tpu.memory_space<vmem>>, vector<1x1x128xf32>
    %20 = vector.shape_cast %19 : vector<1x1x128xf32> to vector<1x128xf32>
    %c0_11 = arith.constant 0 : index
    %c0_12 = arith.constant 0 : index
    %c0_13 = arith.constant 0 : index
    %21 = vector.load %arg4[%c0_11, %c0_12, %c0_13] : memref<1x1x128xf32, #tpu.memory_space<vmem>>, vector<1x1x128xf32>
    %22 = vector.shape_cast %21 : vector<1x1x128xf32> to vector<1x128xf32>
    %23 = vector.shape_cast %7 : vector<32x1xi1> to vector<32x1xi1>
    %24 = vector.broadcast %23 : vector<32x1xi1> to vector<32x128xi1>
    %25 = vector.shape_cast %20 : vector<1x128xf32> to vector<1x128xf32>
    %26 = vector.broadcast %25 : vector<1x128xf32> to vector<32x128xf32>
    %27 = vector.shape_cast %22 : vector<1x128xf32> to vector<1x128xf32>
    %28 = vector.broadcast %27 : vector<1x128xf32> to vector<32x128xf32>
    %29 = arith.select %24, %26, %28 : vector<32x128xi1>, vector<32x128xf32>
    %cst = arith.constant dense<0.000000e+00> : vector<32xf32>
    %30 = vector.multi_reduction <add>, %1, %cst [1] : vector<32x128xf32> to vector<32xf32>
    %31 = vector.shape_cast %30 : vector<32xf32> to vector<32x1xf32>
    %cst_14 = arith.constant 1.280000e+02 : f32
    %32 = vector.broadcast %cst_14 : f32 to vector<32x1xf32>
    %33 = arith.divf %31, %32 : vector<32x1xf32>
    %34 = vector.broadcast %33 : vector<32x1xf32> to vector<32x128xf32>
    %35 = arith.subf %1, %34 : vector<32x128xf32>
    %36 = arith.mulf %35, %35 : vector<32x128xf32>
    %cst_15 = arith.constant dense<0.000000e+00> : vector<32xf32>
    %37 = vector.multi_reduction <add>, %36, %cst_15 [1] : vector<32x128xf32> to vector<32xf32>
    %38 = vector.shape_cast %37 : vector<32xf32> to vector<32x1xf32>
    %cst_16 = arith.constant 1.280000e+02 : f32
    %39 = vector.broadcast %cst_16 : f32 to vector<32x1xf32>
    %40 = arith.divf %38, %39 : vector<32x1xf32>
    %41 = vector.broadcast %33 : vector<32x1xf32> to vector<32x128xf32>
    %42 = arith.subf %1, %41 : vector<32x128xf32>
    %cst_17 = arith.constant 9.99999974E-6 : f32
    %43 = vector.broadcast %cst_17 : f32 to vector<32x1xf32>
    %44 = arith.addf %40, %43 : vector<32x1xf32>
    %45 = math.rsqrt %44 : vector<32x1xf32>
    %46 = vector.broadcast %45 : vector<32x1xf32> to vector<32x128xf32>
    %47 = arith.mulf %42, %46 : vector<32x128xf32>
    %c0_18 = arith.constant 0 : index
    %c0_19 = arith.constant 0 : index
    %48 = vector.load %arg7[%c0_18, %c0_19] : memref<1x128xf32, #tpu.memory_space<vmem>>, vector<1x128xf32>
    %49 = vector.broadcast %48 : vector<1x128xf32> to vector<32x128xf32>
    %50 = arith.mulf %47, %49 : vector<32x128xf32>
    %c0_20 = arith.constant 0 : index
    %c0_21 = arith.constant 0 : index
    %51 = vector.load %arg8[%c0_20, %c0_21] : memref<1x128xf32, #tpu.memory_space<vmem>>, vector<1x128xf32>
    %52 = vector.broadcast %51 : vector<1x128xf32> to vector<32x128xf32>
    %53 = arith.addf %50, %52 : vector<32x128xf32>
    %cst_22 = arith.constant 1.000000e+00 : f32
    %54 = vector.broadcast %cst_22 : f32 to vector<32x128xf32>
    %55 = arith.addf %54, %29 : vector<32x128xf32>
    %56 = arith.mulf %53, %55 : vector<32x128xf32>
    %57 = arith.addf %56, %18 : vector<32x128xf32>
    %c0_23 = arith.constant 0 : index
    %c0_24 = arith.constant 0 : index
    %58 = vector.load %arg9[%c0_23, %c0_24] : memref<128x128xf32, #tpu.memory_space<vmem>>, vector<128x128xf32>
    %cst_25 = arith.constant dense<0.000000e+00> : vector<32x128xf32>
    %59 = tpu.matmul %57, %58, %cst_25 {dimension_numbers = #tpu.dot_dimension_numbers<[1], [0], [0], [1], [0, 0, 1, 1], [], []>} : vector<32x128xf32>, vector<128x128xf32>, vector<32x128xf32> -> vector<32x128xf32>
    %c0_26 = arith.constant 0 : index
    %c0_27 = arith.constant 0 : index
    %60 = vector.load %arg10[%c0_26, %c0_27] : memref<128x128xf32, #tpu.memory_space<vmem>>, vector<128x128xf32>
    %cst_28 = arith.constant dense<0.000000e+00> : vector<32x128xf32>
    %61 = tpu.matmul %57, %60, %cst_28 {dimension_numbers = #tpu.dot_dimension_numbers<[1], [0], [0], [1], [0, 0, 1, 1], [], []>} : vector<32x128xf32>, vector<128x128xf32>, vector<32x128xf32> -> vector<32x128xf32>
    %c0_29 = arith.constant 0 : index
    %c0_30 = arith.constant 0 : index
    %62 = vector.load %arg11[%c0_29, %c0_30] : memref<128x128xf32, #tpu.memory_space<vmem>>, vector<128x128xf32>
    %cst_31 = arith.constant dense<0.000000e+00> : vector<32x128xf32>
    %63 = tpu.matmul %57, %62, %cst_31 {dimension_numbers = #tpu.dot_dimension_numbers<[1], [0], [0], [1], [0, 0, 1, 1], [], []>} : vector<32x128xf32>, vector<128x128xf32>, vector<32x128xf32> -> vector<32x128xf32>
    %c0_32 = arith.constant 0 : index
    %c0_33 = arith.constant 0 : index
    %64 = vector.load %arg12[%c0_32, %c0_33] : memref<128x4xf32, #tpu.memory_space<vmem>>, vector<128x4xf32>
    %c0_34 = arith.constant 0 : index
    %c0_35 = arith.constant 0 : index
    %65 = vector.load %arg13[%c0_34, %c0_35] : memref<4x128xf32, #tpu.memory_space<vmem>>, vector<4x128xf32>
    %c0_36 = arith.constant 0 : index
    %c0_37 = arith.constant 0 : index
    %66 = vector.load %arg14[%c0_36, %c0_37] : memref<1x128xf32, #tpu.memory_space<vmem>>, vector<1x128xf32>
    %c0_38 = arith.constant 0 : index
    %c0_39 = arith.constant 0 : index
    %67 = vector.load %arg15[%c0_38, %c0_39] : memref<1x128xf32, #tpu.memory_space<vmem>>, vector<1x128xf32>
    %cst_40 = arith.constant dense<0.000000e+00> : vector<32x4xf32>
    %68 = tpu.matmul %59, %64, %cst_40 {dimension_numbers = #tpu.dot_dimension_numbers<[1], [0], [0], [1], [0, 0, 1, 1], [], []>} : vector<32x128xf32>, vector<128x4xf32>, vector<32x4xf32> -> vector<32x4xf32>
    %cst_41 = arith.constant 3.125000e-02 : f32
    %69 = vector.broadcast %cst_41 : f32 to vector<32x4xf32>
    %70 = arith.mulf %68, %69 : vector<32x4xf32>
    %cst_42 = arith.constant dense<0.000000e+00> : vector<32x128xf32>
    %71 = tpu.matmul %70, %65, %cst_42 {dimension_numbers = #tpu.dot_dimension_numbers<[1], [0], [0], [1], [0, 0, 1, 1], [], []>} : vector<32x4xf32>, vector<4x128xf32>, vector<32x128xf32> -> vector<32x128xf32>
    %72 = arith.subf %59, %71 : vector<32x128xf32>
    %73 = arith.mulf %72, %72 : vector<32x128xf32>
    %cst_43 = arith.constant dense<0.000000e+00> : vector<32x4xf32>
    %74 = tpu.matmul %73, %64, %cst_43 {dimension_numbers = #tpu.dot_dimension_numbers<[1], [0], [0], [1], [0, 0, 1, 1], [], []>} : vector<32x128xf32>, vector<128x4xf32>, vector<32x4xf32> -> vector<32x4xf32>
    %cst_44 = arith.constant 3.125000e-02 : f32
    %75 = vector.broadcast %cst_44 : f32 to vector<32x4xf32>
    %76 = arith.mulf %74, %75 : vector<32x4xf32>
    %cst_45 = arith.constant dense<0.000000e+00> : vector<32x128xf32>
    %77 = tpu.matmul %76, %65, %cst_45 {dimension_numbers = #tpu.dot_dimension_numbers<[1], [0], [0], [1], [0, 0, 1, 1], [], []>} : vector<32x4xf32>, vector<4x128xf32>, vector<32x128xf32> -> vector<32x128xf32>
    %cst_46 = arith.constant 9.99999997E-7 : f32
    %78 = vector.broadcast %cst_46 : f32 to vector<32x128xf32>
    %79 = arith.addf %77, %78 : vector<32x128xf32>
    %80 = math.rsqrt %79 : vector<32x128xf32>
    %81 = arith.mulf %72, %80 : vector<32x128xf32>
    %82 = vector.broadcast %66 : vector<1x128xf32> to vector<32x128xf32>
    %83 = arith.mulf %81, %82 : vector<32x128xf32>
    %84 = vector.broadcast %67 : vector<1x128xf32> to vector<32x128xf32>
    %85 = arith.addf %83, %84 : vector<32x128xf32>
    %c0_47 = arith.constant 0 : index
    %c0_48 = arith.constant 0 : index
    %c0_49 = arith.constant 0 : index
    %86 = vector.load %arg18[%c0_47, %c0_48, %c0_49] : memref<1x32x128xf32, #tpu.memory_space<vmem>>, vector<1x32x128xf32>
    %87 = vector.shape_cast %86 : vector<1x32x128xf32> to vector<32x128xf32>
    %88 = vector.shape_cast %85 : vector<32x128xf32> to vector<1x32x128xf32>
    tpu.vector_store %arg18[%c0_47, %c0_48, %c0_49], %88 {strides = array<i32>} : memref<1x32x128xf32, #tpu.memory_space<vmem>>, vector<1x32x128xf32>,
    %c0_50 = arith.constant 0 : index
    %c0_51 = arith.constant 0 : index
    %89 = vector.load %arg16[%c0_50, %c0_51] : memref<1x128xf32, #tpu.memory_space<vmem>>, vector<1x128xf32>
    %c0_52 = arith.constant 0 : index
    %c0_53 = arith.constant 0 : index
    %90 = vector.load %arg17[%c0_52, %c0_53] : memref<1x128xf32, #tpu.memory_space<vmem>>, vector<1x128xf32>
    %cst_54 = arith.constant dense<0.000000e+00> : vector<32x4xf32>
    %91 = tpu.matmul %61, %64, %cst_54 {dimension_numbers = #tpu.dot_dimension_numbers<[1], [0], [0], [1], [0, 0, 1, 1], [], []>} : vector<32x128xf32>, vector<128x4xf32>, vector<32x4xf32> -> vector<32x4xf32>
    %cst_55 = arith.constant 3.125000e-02 : f32
    %92 = vector.broadcast %cst_55 : f32 to vector<32x4xf32>
    %93 = arith.mulf %91, %92 : vector<32x4xf32>
    %cst_56 = arith.constant dense<0.000000e+00> : vector<32x128xf32>
    %94 = tpu.matmul %93, %65, %cst_56 {dimension_numbers = #tpu.dot_dimension_numbers<[1], [0], [0], [1], [0, 0, 1, 1], [], []>} : vector<32x4xf32>, vector<4x128xf32>, vector<32x128xf32> -> vector<32x128xf32>
    %95 = arith.subf %61, %94 : vector<32x128xf32>
    %96 = arith.mulf %95, %95 : vector<32x128xf32>
    %cst_57 = arith.constant dense<0.000000e+00> : vector<32x4xf32>
    %97 = tpu.matmul %96, %64, %cst_57 {dimension_numbers = #tpu.dot_dimension_numbers<[1], [0], [0], [1], [0, 0, 1, 1], [], []>} : vector<32x128xf32>, vector<128x4xf32>, vector<32x4xf32> -> vector<32x4xf32>
    %cst_58 = arith.constant 3.125000e-02 : f32
    %98 = vector.broadcast %cst_58 : f32 to vector<32x4xf32>
    %99 = arith.mulf %97, %98 : vector<32x4xf32>
    %cst_59 = arith.constant dense<0.000000e+00> : vector<32x128xf32>
    %100 = tpu.matmul %99, %65, %cst_59 {dimension_numbers = #tpu.dot_dimension_numbers<[1], [0], [0], [1], [0, 0, 1, 1], [], []>} : vector<32x4xf32>, vector<4x128xf32>, vector<32x128xf32> -> vector<32x128xf32>
    %cst_60 = arith.constant 9.99999997E-7 : f32
    %101 = vector.broadcast %cst_60 : f32 to vector<32x128xf32>
    %102 = arith.addf %100, %101 : vector<32x128xf32>
    %103 = math.rsqrt %102 : vector<32x128xf32>
    %104 = arith.mulf %95, %103 : vector<32x128xf32>
    %105 = vector.broadcast %89 : vector<1x128xf32> to vector<32x128xf32>
    %106 = arith.mulf %104, %105 : vector<32x128xf32>
    %107 = vector.broadcast %90 : vector<1x128xf32> to vector<32x128xf32>
    %108 = arith.addf %106, %107 : vector<32x128xf32>
    %c0_61 = arith.constant 0 : index
    %c0_62 = arith.constant 0 : index
    %c0_63 = arith.constant 0 : index
    %109 = vector.load %arg19[%c0_61, %c0_62, %c0_63] : memref<1x32x128xf32, #tpu.memory_space<vmem>>, vector<1x32x128xf32>
    %110 = vector.shape_cast %109 : vector<1x32x128xf32> to vector<32x128xf32>
    %111 = vector.shape_cast %108 : vector<32x128xf32> to vector<1x32x128xf32>
    tpu.vector_store %arg19[%c0_61, %c0_62, %c0_63], %111 {strides = array<i32>} : memref<1x32x128xf32, #tpu.memory_space<vmem>>, vector<1x32x128xf32>,
    %c0_64 = arith.constant 0 : index
    %c0_65 = arith.constant 0 : index
    %c0_66 = arith.constant 0 : index
    %112 = vector.load %arg20[%c0_64, %c0_65, %c0_66] : memref<1x32x128xf32, #tpu.memory_space<vmem>>, vector<1x32x128xf32>
    %113 = vector.shape_cast %112 : vector<1x32x128xf32> to vector<32x128xf32>
    %114 = vector.shape_cast %63 : vector<32x128xf32> to vector<1x32x128xf32>
    tpu.vector_store %arg20[%c0_64, %c0_65, %c0_66], %114 {strides = array<i32>} : memref<1x32x128xf32, #tpu.memory_space<vmem>>, vector<1x32x128xf32>,
    return
  }
  func.func @transform_0(%arg0: i32, %arg1: i32) -> (i32, i32, i32) {
    %c0_i32 = arith.constant 0 : i32
    %c0_i32_0 = arith.constant 0 : i32
    return %arg0, %arg1, %c0_i32 : i32, i32, i32
  }
  func.func @transform_1(%arg0: i32, %arg1: i32) -> (i32, i32, i32) {
    %c0_i32 = arith.constant 0 : i32
    %c0_i32_0 = arith.constant 0 : i32
    %c0_i32_1 = arith.constant 0 : i32
    return %arg0, %c0_i32, %c0_i32_0 : i32, i32, i32
  }
  func.func @transform_2(%arg0: i32, %arg1: i32) -> (i32, i32, i32) {
    %c0_i32 = arith.constant 0 : i32
    %c0_i32_0 = arith.constant 0 : i32
    %c0_i32_1 = arith.constant 0 : i32
    return %arg0, %c0_i32, %c0_i32_0 : i32, i32, i32
  }
  func.func @transform_3(%arg0: i32, %arg1: i32) -> (i32, i32, i32) {
    %c0_i32 = arith.constant 0 : i32
    %c0_i32_0 = arith.constant 0 : i32
    %c0_i32_1 = arith.constant 0 : i32
    return %arg0, %c0_i32, %c0_i32_0 : i32, i32, i32
  }
  func.func @transform_4(%arg0: i32, %arg1: i32) -> (i32, i32, i32) {
    %c0_i32 = arith.constant 0 : i32
    %c0_i32_0 = arith.constant 0 : i32
    %c0_i32_1 = arith.constant 0 : i32
    return %arg0, %c0_i32, %c0_i32_0 : i32, i32, i32
  }
  func.func @transform_5(%arg0: i32, %arg1: i32) -> (i32, i32) {
    %c0_i32 = arith.constant 0 : i32
    %c0_i32_0 = arith.constant 0 : i32
    %c0_i32_1 = arith.constant 0 : i32
    return %c0_i32, %c0_i32_0 : i32, i32
  }
  func.func @transform_6(%arg0: i32, %arg1: i32) -> (i32, i32) {
    %c0_i32 = arith.constant 0 : i32
    %c0_i32_0 = arith.constant 0 : i32
    %c0_i32_1 = arith.constant 0 : i32
    return %c0_i32, %c0_i32_0 : i32, i32
  }
  func.func @transform_7(%arg0: i32, %arg1: i32) -> (i32, i32) {
    %c0_i32 = arith.constant 0 : i32
    %c0_i32_0 = arith.constant 0 : i32
    %c0_i32_1 = arith.constant 0 : i32
    return %c0_i32, %c0_i32_0 : i32, i32
  }
  func.func @transform_8(%arg0: i32, %arg1: i32) -> (i32, i32) {
    %c0_i32 = arith.constant 0 : i32
    %c0_i32_0 = arith.constant 0 : i32
    %c0_i32_1 = arith.constant 0 : i32
    return %c0_i32, %c0_i32_0 : i32, i32
  }
  func.func @transform_9(%arg0: i32, %arg1: i32) -> (i32, i32) {
    %c0_i32 = arith.constant 0 : i32
    %c0_i32_0 = arith.constant 0 : i32
    %c0_i32_1 = arith.constant 0 : i32
    return %c0_i32, %c0_i32_0 : i32, i32
  }
  func.func @transform_10(%arg0: i32, %arg1: i32) -> (i32, i32) {
    %c0_i32 = arith.constant 0 : i32
    %c0_i32_0 = arith.constant 0 : i32
    %c0_i32_1 = arith.constant 0 : i32
    return %c0_i32, %c0_i32_0 : i32, i32
  }
  func.func @transform_11(%arg0: i32, %arg1: i32) -> (i32, i32) {
    %c0_i32 = arith.constant 0 : i32
    %c0_i32_0 = arith.constant 0 : i32
    %c0_i32_1 = arith.constant 0 : i32
    return %c0_i32, %c0_i32_0 : i32, i32
  }
  func.func @transform_12(%arg0: i32, %arg1: i32) -> (i32, i32) {
    %c0_i32 = arith.constant 0 : i32
    %c0_i32_0 = arith.constant 0 : i32
    %c0_i32_1 = arith.constant 0 : i32
    return %c0_i32, %c0_i32_0 : i32, i32
  }
  func.func @transform_13(%arg0: i32, %arg1: i32) -> (i32, i32) {
    %c0_i32 = arith.constant 0 : i32
    %c0_i32_0 = arith.constant 0 : i32
    %c0_i32_1 = arith.constant 0 : i32
    return %c0_i32, %c0_i32_0 : i32, i32
  }
  func.func @transform_14(%arg0: i32, %arg1: i32) -> (i32, i32) {
    %c0_i32 = arith.constant 0 : i32
    %c0_i32_0 = arith.constant 0 : i32
    %c0_i32_1 = arith.constant 0 : i32
    return %c0_i32, %c0_i32_0 : i32, i32
  }
  func.func @transform_15(%arg0: i32, %arg1: i32) -> (i32, i32) {
    %c0_i32 = arith.constant 0 : i32
    %c0_i32_0 = arith.constant 0 : i32
    %c0_i32_1 = arith.constant 0 : i32
    return %c0_i32, %c0_i32_0 : i32, i32
  }
  func.func @transform_16(%arg0: i32, %arg1: i32) -> (i32, i32, i32) {
    %c0_i32 = arith.constant 0 : i32
    %c0_i32_0 = arith.constant 0 : i32
    return %arg0, %arg1, %c0_i32 : i32, i32, i32
  }
  func.func @transform_17(%arg0: i32, %arg1: i32) -> (i32, i32, i32) {
    %c0_i32 = arith.constant 0 : i32
    %c0_i32_0 = arith.constant 0 : i32
    return %arg0, %arg1, %c0_i32 : i32, i32, i32
  }
  func.func @transform_18(%arg0: i32, %arg1: i32) -> (i32, i32, i32) {
    %c0_i32 = arith.constant 0 : i32
    %c0_i32_0 = arith.constant 0 : i32
    return %arg0, %arg1, %c0_i32 : i32, i32, i32
  }
}

module attributes {stable_mosaic.version = 11 : i64} {
  func.func @_flash_attn_kernel(%arg0: i32, %arg1: i32, %arg2: i32, %arg3: i32, %arg4: memref<1x1x32x32xf32, #tpu.memory_space<vmem>>, %arg5: memref<1x1x32x32xf32, #tpu.memory_space<vmem>>, %arg6: memref<1x1x32x32xf32, #tpu.memory_space<vmem>>, %arg7: memref<1x1x32x32xf32, #tpu.memory_space<vmem>>, %arg8: memref<32x1xf32, #tpu.memory_space<vmem>>, %arg9: memref<32x1xf32, #tpu.memory_space<vmem>>, %arg10: memref<32x32xf32, #tpu.memory_space<vmem>>) attributes {dimension_semantics = [#tpu.dimension_semantics<parallel>, #tpu.dimension_semantics<parallel>, #tpu.dimension_semantics<parallel>, #tpu.dimension_semantics<arbitrary>], iteration_bounds = array<i64: 2, 4, 2, 2>, scalar_prefetch = 0 : i64, scratch_operands = 3 : i64, tpu.core_type = #tpu.core_type<tc>, window_params = [{transform_indices = @transform_0, window_bounds = array<i64: 1, 1, 32, 32>}, {transform_indices = @transform_1, window_bounds = array<i64: 1, 1, 32, 32>}, {transform_indices = @transform_2, window_bounds = array<i64: 1, 1, 32, 32>}, {transform_indices = @transform_3, window_bounds = array<i64: 1, 1, 32, 32>}]} {
    %c0_i32 = arith.constant 0 : i32
    %0 = arith.cmpi eq, %arg3, %c0_i32 : i32
    %1 = arith.extui %0 : i1 to i32
    %c0_i32_0 = arith.constant 0 : i32
    %2 = arith.cmpi ne, %1, %c0_i32_0 : i32
    scf.if %2 {
      %cst_30 = arith.constant -1.000000e+30 : f32
      %46 = vector.broadcast %cst_30 : f32 to vector<32x1xf32>
      %c0_31 = arith.constant 0 : index
      %c0_32 = arith.constant 0 : index
      %47 = vector.load %arg8[%c0_31, %c0_32] : memref<32x1xf32, #tpu.memory_space<vmem>>, vector<32x1xf32>
      tpu.vector_store %arg8[%c0_31, %c0_32], %46 {strides = array<i32>} : memref<32x1xf32, #tpu.memory_space<vmem>>, vector<32x1xf32>,
      %cst_33 = arith.constant 0.000000e+00 : f32
      %48 = vector.broadcast %cst_33 : f32 to vector<32x1xf32>
      %c0_34 = arith.constant 0 : index
      %c0_35 = arith.constant 0 : index
      %49 = vector.load %arg9[%c0_34, %c0_35] : memref<32x1xf32, #tpu.memory_space<vmem>>, vector<32x1xf32>
      tpu.vector_store %arg9[%c0_34, %c0_35], %48 {strides = array<i32>} : memref<32x1xf32, #tpu.memory_space<vmem>>, vector<32x1xf32>,
      %cst_36 = arith.constant 0.000000e+00 : f32
      %50 = vector.broadcast %cst_36 : f32 to vector<32x32xf32>
      %c0_37 = arith.constant 0 : index
      %c0_38 = arith.constant 0 : index
      %51 = vector.load %arg10[%c0_37, %c0_38] : memref<32x32xf32, #tpu.memory_space<vmem>>, vector<32x32xf32>
      tpu.vector_store %arg10[%c0_37, %c0_38], %50 {strides = array<i32>} : memref<32x32xf32, #tpu.memory_space<vmem>>, vector<32x32xf32>,
    } else {
    }
    %c0 = arith.constant 0 : index
    %c0_1 = arith.constant 0 : index
    %c0_2 = arith.constant 0 : index
    %c0_3 = arith.constant 0 : index
    %3 = vector.load %arg4[%c0, %c0_1, %c0_2, %c0_3] : memref<1x1x32x32xf32, #tpu.memory_space<vmem>>, vector<1x1x32x32xf32>
    %4 = vector.shape_cast %3 : vector<1x1x32x32xf32> to vector<32x32xf32>
    %c0_4 = arith.constant 0 : index
    %c0_5 = arith.constant 0 : index
    %c0_6 = arith.constant 0 : index
    %c0_7 = arith.constant 0 : index
    %5 = vector.load %arg5[%c0_4, %c0_5, %c0_6, %c0_7] : memref<1x1x32x32xf32, #tpu.memory_space<vmem>>, vector<1x1x32x32xf32>
    %6 = vector.shape_cast %5 : vector<1x1x32x32xf32> to vector<32x32xf32>
    %c0_8 = arith.constant 0 : index
    %c0_9 = arith.constant 0 : index
    %c0_10 = arith.constant 0 : index
    %c0_11 = arith.constant 0 : index
    %7 = vector.load %arg6[%c0_8, %c0_9, %c0_10, %c0_11] : memref<1x1x32x32xf32, #tpu.memory_space<vmem>>, vector<1x1x32x32xf32>
    %8 = vector.shape_cast %7 : vector<1x1x32x32xf32> to vector<32x32xf32>
    %9 = tpu.transpose %6, [1, 0] : vector<32x32xf32> -> vector<32x32xf32>
    %cst = arith.constant dense<0.000000e+00> : vector<32x32xf32>
    %10 = tpu.matmul %4, %9, %cst {dimension_numbers = #tpu.dot_dimension_numbers<[1], [0], [0], [1], [0, 0, 1, 1], [], []>} : vector<32x32xf32>, vector<32x32xf32>, vector<32x32xf32> -> vector<32x32xf32>
    %cst_12 = arith.constant 0.176776692 : f32
    %11 = vector.broadcast %cst_12 : f32 to vector<32x32xf32>
    %12 = arith.mulf %10, %11 : vector<32x32xf32>
    %c32_i32 = arith.constant 32 : i32
    %13 = arith.muli %arg3, %c32_i32 : i32
    %14 = tpu.iota {dimensions = array<i32: 1>} : vector<32x32xi32>
    %15 = vector.broadcast %13 : i32 to vector<32x32xi32>
    %16 = arith.addi %15, %14 : vector<32x32xi32>
    %c56_i32 = arith.constant 56 : i32
    %17 = vector.broadcast %c56_i32 : i32 to vector<32x32xi32>
    %18 = arith.cmpi slt, %16, %17 : vector<32x32xi32>
    %cst_13 = arith.constant -1.000000e+30 : f32
    %19 = vector.broadcast %cst_13 : f32 to vector<32x32xf32>
    %20 = arith.select %18, %12, %19 : vector<32x32xi1>, vector<32x32xf32>
    %c0_14 = arith.constant 0 : index
    %c0_15 = arith.constant 0 : index
    %21 = vector.load %arg8[%c0_14, %c0_15] : memref<32x1xf32, #tpu.memory_space<vmem>>, vector<32x1xf32>
    %cst_16 = arith.constant dense<0xFF800000> : vector<32xf32>
    %22 = vector.multi_reduction <maximumf>, %20, %cst_16 [1] : vector<32x32xf32> to vector<32xf32>
    %23 = vector.shape_cast %22 : vector<32xf32> to vector<32x1xf32>
    %24 = arith.maximumf %21, %23 : vector<32x1xf32>
    %25 = arith.subf %21, %24 : vector<32x1xf32>
    %26 = math.exp %25 : vector<32x1xf32>
    %27 = vector.broadcast %24 : vector<32x1xf32> to vector<32x32xf32>
    %28 = arith.subf %20, %27 : vector<32x32xf32>
    %29 = math.exp %28 : vector<32x32xf32>
    %c0_17 = arith.constant 0 : index
    %c0_18 = arith.constant 0 : index
    %30 = vector.load %arg9[%c0_17, %c0_18] : memref<32x1xf32, #tpu.memory_space<vmem>>, vector<32x1xf32>
    %31 = arith.mulf %26, %30 : vector<32x1xf32>
    %cst_19 = arith.constant dense<0.000000e+00> : vector<32xf32>
    %32 = vector.multi_reduction <add>, %29, %cst_19 [1] : vector<32x32xf32> to vector<32xf32>
    %33 = vector.shape_cast %32 : vector<32xf32> to vector<32x1xf32>
    %34 = arith.addf %31, %33 : vector<32x1xf32>
    %c0_20 = arith.constant 0 : index
    %c0_21 = arith.constant 0 : index
    %35 = vector.load %arg9[%c0_20, %c0_21] : memref<32x1xf32, #tpu.memory_space<vmem>>, vector<32x1xf32>
    tpu.vector_store %arg9[%c0_20, %c0_21], %34 {strides = array<i32>} : memref<32x1xf32, #tpu.memory_space<vmem>>, vector<32x1xf32>,
    %c0_22 = arith.constant 0 : index
    %c0_23 = arith.constant 0 : index
    %36 = vector.load %arg10[%c0_22, %c0_23] : memref<32x32xf32, #tpu.memory_space<vmem>>, vector<32x32xf32>
    %37 = vector.broadcast %26 : vector<32x1xf32> to vector<32x32xf32>
    %38 = arith.mulf %37, %36 : vector<32x32xf32>
    %cst_24 = arith.constant dense<0.000000e+00> : vector<32x32xf32>
    %39 = tpu.matmul %29, %8, %cst_24 {dimension_numbers = #tpu.dot_dimension_numbers<[1], [0], [0], [1], [0, 0, 1, 1], [], []>} : vector<32x32xf32>, vector<32x32xf32>, vector<32x32xf32> -> vector<32x32xf32>
    %40 = arith.addf %38, %39 : vector<32x32xf32>
    %c0_25 = arith.constant 0 : index
    %c0_26 = arith.constant 0 : index
    %41 = vector.load %arg10[%c0_25, %c0_26] : memref<32x32xf32, #tpu.memory_space<vmem>>, vector<32x32xf32>
    tpu.vector_store %arg10[%c0_25, %c0_26], %40 {strides = array<i32>} : memref<32x32xf32, #tpu.memory_space<vmem>>, vector<32x32xf32>,
    %c0_27 = arith.constant 0 : index
    %c0_28 = arith.constant 0 : index
    %42 = vector.load %arg8[%c0_27, %c0_28] : memref<32x1xf32, #tpu.memory_space<vmem>>, vector<32x1xf32>
    tpu.vector_store %arg8[%c0_27, %c0_28], %24 {strides = array<i32>} : memref<32x1xf32, #tpu.memory_space<vmem>>, vector<32x1xf32>,
    %c1_i32 = arith.constant 1 : i32
    %43 = arith.cmpi eq, %arg3, %c1_i32 : i32
    %44 = arith.extui %43 : i1 to i32
    %c0_i32_29 = arith.constant 0 : i32
    %45 = arith.cmpi ne, %44, %c0_i32_29 : i32
    scf.if %45 {
      %c0_30 = arith.constant 0 : index
      %c0_31 = arith.constant 0 : index
      %46 = vector.load %arg9[%c0_30, %c0_31] : memref<32x1xf32, #tpu.memory_space<vmem>>, vector<32x1xf32>
      %47 = tpu.reciprocal %46 : vector<32x1xf32> -> vector<32x1xf32>
      %c0_32 = arith.constant 0 : index
      %c0_33 = arith.constant 0 : index
      %48 = vector.load %arg10[%c0_32, %c0_33] : memref<32x32xf32, #tpu.memory_space<vmem>>, vector<32x32xf32>
      %49 = vector.broadcast %47 : vector<32x1xf32> to vector<32x32xf32>
      %50 = arith.mulf %48, %49 : vector<32x32xf32>
      %c0_34 = arith.constant 0 : index
      %c0_35 = arith.constant 0 : index
      %c0_36 = arith.constant 0 : index
      %c0_37 = arith.constant 0 : index
      %51 = vector.load %arg7[%c0_34, %c0_35, %c0_36, %c0_37] : memref<1x1x32x32xf32, #tpu.memory_space<vmem>>, vector<1x1x32x32xf32>
      %52 = vector.shape_cast %51 : vector<1x1x32x32xf32> to vector<32x32xf32>
      %53 = vector.shape_cast %50 : vector<32x32xf32> to vector<1x1x32x32xf32>
      tpu.vector_store %arg7[%c0_34, %c0_35, %c0_36, %c0_37], %53 {strides = array<i32>} : memref<1x1x32x32xf32, #tpu.memory_space<vmem>>, vector<1x1x32x32xf32>,
    } else {
    }
    return
  }
  func.func @transform_0(%arg0: i32, %arg1: i32, %arg2: i32, %arg3: i32) -> (i32, i32, i32, i32) {
    %c0_i32 = arith.constant 0 : i32
    %c0_i32_0 = arith.constant 0 : i32
    return %arg0, %arg1, %arg2, %c0_i32 : i32, i32, i32, i32
  }
  func.func @transform_1(%arg0: i32, %arg1: i32, %arg2: i32, %arg3: i32) -> (i32, i32, i32, i32) {
    %c0_i32 = arith.constant 0 : i32
    %c0_i32_0 = arith.constant 0 : i32
    return %arg0, %arg1, %arg3, %c0_i32 : i32, i32, i32, i32
  }
  func.func @transform_2(%arg0: i32, %arg1: i32, %arg2: i32, %arg3: i32) -> (i32, i32, i32, i32) {
    %c0_i32 = arith.constant 0 : i32
    %c0_i32_0 = arith.constant 0 : i32
    return %arg0, %arg1, %arg3, %c0_i32 : i32, i32, i32, i32
  }
  func.func @transform_3(%arg0: i32, %arg1: i32, %arg2: i32, %arg3: i32) -> (i32, i32, i32, i32) {
    %c0_i32 = arith.constant 0 : i32
    %c0_i32_0 = arith.constant 0 : i32
    return %arg0, %arg1, %arg2, %c0_i32 : i32, i32, i32, i32
  }
}

module attributes {stable_mosaic.version = 11 : i64} {
  func.func @_out_proj_ffn_kernel(%arg0: i32, %arg1: i32, %arg2: i32, %arg3: memref<1x32x128xf32, #tpu.memory_space<vmem>>, %arg4: memref<1x32x128xf32, #tpu.memory_space<vmem>>, %arg5: memref<128x128xf32, #tpu.memory_space<vmem>>, %arg6: memref<1x128xf32, #tpu.memory_space<vmem>>, %arg7: memref<1x1x128xf32, #tpu.memory_space<vmem>>, %arg8: memref<1x1x128xf32, #tpu.memory_space<vmem>>, %arg9: memref<1x1x128xf32, #tpu.memory_space<vmem>>, %arg10: memref<1x1x128xf32, #tpu.memory_space<vmem>>, %arg11: memref<1x1x128xf32, #tpu.memory_space<vmem>>, %arg12: memref<1x1x128xf32, #tpu.memory_space<vmem>>, %arg13: memref<1x1x128xf32, #tpu.memory_space<vmem>>, %arg14: memref<1x1x128xf32, #tpu.memory_space<vmem>>, %arg15: memref<1x128xf32, #tpu.memory_space<vmem>>, %arg16: memref<1x128xf32, #tpu.memory_space<vmem>>, %arg17: memref<128x128xf32, #tpu.memory_space<vmem>>, %arg18: memref<1x128xf32, #tpu.memory_space<vmem>>, %arg19: memref<128x128xf32, #tpu.memory_space<vmem>>, %arg20: memref<1x128xf32, #tpu.memory_space<vmem>>, %arg21: memref<1x32x128xf32, #tpu.memory_space<vmem>>, %arg22: memref<32x128xf32, #tpu.memory_space<vmem>>, %arg23: memref<32x128xf32, #tpu.memory_space<vmem>>, %arg24: memref<32x128xf32, #tpu.memory_space<vmem>>) attributes {dimension_semantics = [#tpu.dimension_semantics<parallel>, #tpu.dimension_semantics<parallel>, #tpu.dimension_semantics<arbitrary>], iteration_bounds = array<i64: 2, 2, 4>, scalar_prefetch = 0 : i64, scratch_operands = 3 : i64, tpu.core_type = #tpu.core_type<tc>, window_params = [{transform_indices = @transform_0, window_bounds = array<i64: 1, 32, 128>}, {transform_indices = @transform_1, window_bounds = array<i64: 1, 32, 128>}, {pipeline_mode = #tpu.pipeline_mode<synchronous>, transform_indices = @transform_2, window_bounds = array<i64: 128, 128>}, {pipeline_mode = #tpu.pipeline_mode<synchronous>, transform_indices = @transform_3, window_bounds = array<i64: 1, 128>}, {transform_indices = @transform_4, window_bounds = array<i64: 1, 1, 128>}, {transform_indices = @transform_5, window_bounds = array<i64: 1, 1, 128>}, {transform_indices = @transform_6, window_bounds = array<i64: 1, 1, 128>}, {transform_indices = @transform_7, window_bounds = array<i64: 1, 1, 128>}, {transform_indices = @transform_8, window_bounds = array<i64: 1, 1, 128>}, {transform_indices = @transform_9, window_bounds = array<i64: 1, 1, 128>}, {transform_indices = @transform_10, window_bounds = array<i64: 1, 1, 128>}, {transform_indices = @transform_11, window_bounds = array<i64: 1, 1, 128>}, {pipeline_mode = #tpu.pipeline_mode<synchronous>, transform_indices = @transform_12, window_bounds = array<i64: 1, 128>}, {pipeline_mode = #tpu.pipeline_mode<synchronous>, transform_indices = @transform_13, window_bounds = array<i64: 1, 128>}, {transform_indices = @transform_14, window_bounds = array<i64: 128, 128>}, {transform_indices = @transform_15, window_bounds = array<i64: 1, 128>}, {transform_indices = @transform_16, window_bounds = array<i64: 128, 128>}, {pipeline_mode = #tpu.pipeline_mode<synchronous>, transform_indices = @transform_17, window_bounds = array<i64: 1, 128>}, {transform_indices = @transform_18, window_bounds = array<i64: 1, 32, 128>}]} {
    %c32_i32 = arith.constant 32 : i32
    %0 = arith.muli %c32_i32, %arg1 : i32
    %1 = tpu.iota {dimensions = array<i32: 0>} : vector<32x1xi32>
    %2 = vector.broadcast %0 : i32 to vector<32x1xi32>
    %3 = arith.addi %2, %1 : vector<32x1xi32>
    %c11_i32 = arith.constant 11 : i32
    %4 = vector.broadcast %c11_i32 : i32 to vector<32x1xi32>
    %5 = arith.cmpi slt, %3, %4 : vector<32x1xi32>
    %c0_i32 = arith.constant 0 : i32
    %6 = arith.cmpi eq, %arg2, %c0_i32 : i32
    %7 = arith.extui %6 : i1 to i32
    %c0_i32_0 = arith.constant 0 : i32
    %8 = arith.cmpi ne, %7, %c0_i32_0 : i32
    scf.if %8 {
      %c0_18 = arith.constant 0 : index
      %c0_19 = arith.constant 0 : index
      %c0_20 = arith.constant 0 : index
      %36 = vector.load %arg3[%c0_18, %c0_19, %c0_20] : memref<1x32x128xf32, #tpu.memory_space<vmem>>, vector<1x32x128xf32>
      %37 = vector.shape_cast %36 : vector<1x32x128xf32> to vector<32x128xf32>
      %c0_21 = arith.constant 0 : index
      %c0_22 = arith.constant 0 : index
      %38 = vector.load %arg5[%c0_21, %c0_22] : memref<128x128xf32, #tpu.memory_space<vmem>>, vector<128x128xf32>
      %cst_23 = arith.constant dense<0.000000e+00> : vector<32x128xf32>
      %39 = tpu.matmul %37, %38, %cst_23 {dimension_numbers = #tpu.dot_dimension_numbers<[1], [0], [0], [1], [0, 0, 1, 1], [], []>} : vector<32x128xf32>, vector<128x128xf32>, vector<32x128xf32> -> vector<32x128xf32>
      %c0_24 = arith.constant 0 : index
      %c0_25 = arith.constant 0 : index
      %40 = vector.load %arg6[%c0_24, %c0_25] : memref<1x128xf32, #tpu.memory_space<vmem>>, vector<1x128xf32>
      %41 = vector.broadcast %40 : vector<1x128xf32> to vector<32x128xf32>
      %42 = arith.addf %39, %41 : vector<32x128xf32>
      %c0_26 = arith.constant 0 : index
      %c0_27 = arith.constant 0 : index
      %c0_28 = arith.constant 0 : index
      %43 = vector.load %arg8[%c0_26, %c0_27, %c0_28] : memref<1x1x128xf32, #tpu.memory_space<vmem>>, vector<1x1x128xf32>
      %44 = vector.shape_cast %43 : vector<1x1x128xf32> to vector<1x128xf32>
      %c0_29 = arith.constant 0 : index
      %c0_30 = arith.constant 0 : index
      %c0_31 = arith.constant 0 : index
      %45 = vector.load %arg7[%c0_29, %c0_30, %c0_31] : memref<1x1x128xf32, #tpu.memory_space<vmem>>, vector<1x1x128xf32>
      %46 = vector.shape_cast %45 : vector<1x1x128xf32> to vector<1x128xf32>
      %47 = vector.shape_cast %5 : vector<32x1xi1> to vector<32x1xi1>
      %48 = vector.broadcast %47 : vector<32x1xi1> to vector<32x128xi1>
      %49 = vector.shape_cast %44 : vector<1x128xf32> to vector<1x128xf32>
      %50 = vector.broadcast %49 : vector<1x128xf32> to vector<32x128xf32>
      %51 = vector.shape_cast %46 : vector<1x128xf32> to vector<1x128xf32>
      %52 = vector.broadcast %51 : vector<1x128xf32> to vector<32x128xf32>
      %53 = arith.select %48, %50, %52 : vector<32x128xi1>, vector<32x128xf32>
      %c0_32 = arith.constant 0 : index
      %c0_33 = arith.constant 0 : index
      %c0_34 = arith.constant 0 : index
      %54 = vector.load %arg4[%c0_32, %c0_33, %c0_34] : memref<1x32x128xf32, #tpu.memory_space<vmem>>, vector<1x32x128xf32>
      %55 = vector.shape_cast %54 : vector<1x32x128xf32> to vector<32x128xf32>
      %56 = arith.mulf %53, %42 : vector<32x128xf32>
      %57 = arith.addf %55, %56 : vector<32x128xf32>
      %c0_35 = arith.constant 0 : index
      %c0_36 = arith.constant 0 : index
      %58 = vector.load %arg22[%c0_35, %c0_36] : memref<32x128xf32, #tpu.memory_space<vmem>>, vector<32x128xf32>
      tpu.vector_store %arg22[%c0_35, %c0_36], %57 {strides = array<i32>} : memref<32x128xf32, #tpu.memory_space<vmem>>, vector<32x128xf32>,
      %cst_37 = arith.constant dense<0.000000e+00> : vector<32xf32>
      %59 = vector.multi_reduction <add>, %57, %cst_37 [1] : vector<32x128xf32> to vector<32xf32>
      %60 = vector.shape_cast %59 : vector<32xf32> to vector<32x1xf32>
      %cst_38 = arith.constant 1.280000e+02 : f32
      %61 = vector.broadcast %cst_38 : f32 to vector<32x1xf32>
      %62 = arith.divf %60, %61 : vector<32x1xf32>
      %63 = vector.broadcast %62 : vector<32x1xf32> to vector<32x128xf32>
      %64 = arith.subf %57, %63 : vector<32x128xf32>
      %65 = arith.mulf %64, %64 : vector<32x128xf32>
      %cst_39 = arith.constant dense<0.000000e+00> : vector<32xf32>
      %66 = vector.multi_reduction <add>, %65, %cst_39 [1] : vector<32x128xf32> to vector<32xf32>
      %67 = vector.shape_cast %66 : vector<32xf32> to vector<32x1xf32>
      %cst_40 = arith.constant 1.280000e+02 : f32
      %68 = vector.broadcast %cst_40 : f32 to vector<32x1xf32>
      %69 = arith.divf %67, %68 : vector<32x1xf32>
      %c0_41 = arith.constant 0 : index
      %c0_42 = arith.constant 0 : index
      %c0_43 = arith.constant 0 : index
      %70 = vector.load %arg12[%c0_41, %c0_42, %c0_43] : memref<1x1x128xf32, #tpu.memory_space<vmem>>, vector<1x1x128xf32>
      %71 = vector.shape_cast %70 : vector<1x1x128xf32> to vector<1x128xf32>
      %c0_44 = arith.constant 0 : index
      %c0_45 = arith.constant 0 : index
      %c0_46 = arith.constant 0 : index
      %72 = vector.load %arg9[%c0_44, %c0_45, %c0_46] : memref<1x1x128xf32, #tpu.memory_space<vmem>>, vector<1x1x128xf32>
      %73 = vector.shape_cast %72 : vector<1x1x128xf32> to vector<1x128xf32>
      %74 = vector.shape_cast %5 : vector<32x1xi1> to vector<32x1xi1>
      %75 = vector.broadcast %74 : vector<32x1xi1> to vector<32x128xi1>
      %76 = vector.shape_cast %71 : vector<1x128xf32> to vector<1x128xf32>
      %77 = vector.broadcast %76 : vector<1x128xf32> to vector<32x128xf32>
      %78 = vector.shape_cast %73 : vector<1x128xf32> to vector<1x128xf32>
      %79 = vector.broadcast %78 : vector<1x128xf32> to vector<32x128xf32>
      %80 = arith.select %75, %77, %79 : vector<32x128xi1>, vector<32x128xf32>
      %c0_47 = arith.constant 0 : index
      %c0_48 = arith.constant 0 : index
      %c0_49 = arith.constant 0 : index
      %81 = vector.load %arg13[%c0_47, %c0_48, %c0_49] : memref<1x1x128xf32, #tpu.memory_space<vmem>>, vector<1x1x128xf32>
      %82 = vector.shape_cast %81 : vector<1x1x128xf32> to vector<1x128xf32>
      %c0_50 = arith.constant 0 : index
      %c0_51 = arith.constant 0 : index
      %c0_52 = arith.constant 0 : index
      %83 = vector.load %arg10[%c0_50, %c0_51, %c0_52] : memref<1x1x128xf32, #tpu.memory_space<vmem>>, vector<1x1x128xf32>
      %84 = vector.shape_cast %83 : vector<1x1x128xf32> to vector<1x128xf32>
      %85 = vector.shape_cast %5 : vector<32x1xi1> to vector<32x1xi1>
      %86 = vector.broadcast %85 : vector<32x1xi1> to vector<32x128xi1>
      %87 = vector.shape_cast %82 : vector<1x128xf32> to vector<1x128xf32>
      %88 = vector.broadcast %87 : vector<1x128xf32> to vector<32x128xf32>
      %89 = vector.shape_cast %84 : vector<1x128xf32> to vector<1x128xf32>
      %90 = vector.broadcast %89 : vector<1x128xf32> to vector<32x128xf32>
      %91 = arith.select %86, %88, %90 : vector<32x128xi1>, vector<32x128xf32>
      %92 = vector.broadcast %62 : vector<32x1xf32> to vector<32x128xf32>
      %93 = arith.subf %57, %92 : vector<32x128xf32>
      %cst_53 = arith.constant 9.99999974E-6 : f32
      %94 = vector.broadcast %cst_53 : f32 to vector<32x1xf32>
      %95 = arith.addf %69, %94 : vector<32x1xf32>
      %96 = math.rsqrt %95 : vector<32x1xf32>
      %97 = vector.broadcast %96 : vector<32x1xf32> to vector<32x128xf32>
      %98 = arith.mulf %93, %97 : vector<32x128xf32>
      %c0_54 = arith.constant 0 : index
      %c0_55 = arith.constant 0 : index
      %99 = vector.load %arg15[%c0_54, %c0_55] : memref<1x128xf32, #tpu.memory_space<vmem>>, vector<1x128xf32>
      %100 = vector.broadcast %99 : vector<1x128xf32> to vector<32x128xf32>
      %101 = arith.mulf %98, %100 : vector<32x128xf32>
      %c0_56 = arith.constant 0 : index
      %c0_57 = arith.constant 0 : index
      %102 = vector.load %arg16[%c0_56, %c0_57] : memref<1x128xf32, #tpu.memory_space<vmem>>, vector<1x128xf32>
      %103 = vector.broadcast %102 : vector<1x128xf32> to vector<32x128xf32>
      %104 = arith.addf %101, %103 : vector<32x128xf32>
      %cst_58 = arith.constant 1.000000e+00 : f32
      %105 = vector.broadcast %cst_58 : f32 to vector<32x128xf32>
      %106 = arith.addf %105, %91 : vector<32x128xf32>
      %107 = arith.mulf %104, %106 : vector<32x128xf32>
      %108 = arith.addf %107, %80 : vector<32x128xf32>
      %c0_59 = arith.constant 0 : index
      %c0_60 = arith.constant 0 : index
      %109 = vector.load %arg23[%c0_59, %c0_60] : memref<32x128xf32, #tpu.memory_space<vmem>>, vector<32x128xf32>
      tpu.vector_store %arg23[%c0_59, %c0_60], %108 {strides = array<i32>} : memref<32x128xf32, #tpu.memory_space<vmem>>, vector<32x128xf32>,
      %cst_61 = arith.constant 0.000000e+00 : f32
      %110 = vector.broadcast %cst_61 : f32 to vector<32x128xf32>
      %c0_62 = arith.constant 0 : index
      %c0_63 = arith.constant 0 : index
      %111 = vector.load %arg24[%c0_62, %c0_63] : memref<32x128xf32, #tpu.memory_space<vmem>>, vector<32x128xf32>
      tpu.vector_store %arg24[%c0_62, %c0_63], %110 {strides = array<i32>} : memref<32x128xf32, #tpu.memory_space<vmem>>, vector<32x128xf32>,
    } else {
    }
    %c0 = arith.constant 0 : index
    %c0_1 = arith.constant 0 : index
    %9 = vector.load %arg23[%c0, %c0_1] : memref<32x128xf32, #tpu.memory_space<vmem>>, vector<32x128xf32>
    %c0_2 = arith.constant 0 : index
    %c0_3 = arith.constant 0 : index
    %10 = vector.load %arg17[%c0_2, %c0_3] : memref<128x128xf32, #tpu.memory_space<vmem>>, vector<128x128xf32>
    %cst = arith.constant dense<0.000000e+00> : vector<32x128xf32>
    %11 = tpu.matmul %9, %10, %cst {dimension_numbers = #tpu.dot_dimension_numbers<[1], [0], [0], [1], [0, 0, 1, 1], [], []>} : vector<32x128xf32>, vector<128x128xf32>, vector<32x128xf32> -> vector<32x128xf32>
    %c0_4 = arith.constant 0 : index
    %c0_5 = arith.constant 0 : index
    %12 = vector.load %arg18[%c0_4, %c0_5] : memref<1x128xf32, #tpu.memory_space<vmem>>, vector<1x128xf32>
    %13 = vector.broadcast %12 : vector<1x128xf32> to vector<32x128xf32>
    %14 = arith.addf %11, %13 : vector<32x128xf32>
    %15 = arith.mulf %14, %14 : vector<32x128xf32>
    %16 = arith.mulf %14, %15 : vector<32x128xf32>
    %cst_6 = arith.constant 4.471500e-02 : f32
    %17 = vector.broadcast %cst_6 : f32 to vector<32x128xf32>
    %18 = arith.mulf %17, %16 : vector<32x128xf32>
    %19 = arith.addf %14, %18 : vector<32x128xf32>
    %cst_7 = arith.constant 0.797884583 : f32
    %20 = vector.broadcast %cst_7 : f32 to vector<32x128xf32>
    %21 = arith.mulf %20, %19 : vector<32x128xf32>
    %22 = math.tanh %21 : vector<32x128xf32>
    %cst_8 = arith.constant 1.000000e+00 : f32
    %23 = vector.broadcast %cst_8 : f32 to vector<32x128xf32>
    %24 = arith.addf %23, %22 : vector<32x128xf32>
    %cst_9 = arith.constant 5.000000e-01 : f32
    %25 = vector.broadcast %cst_9 : f32 to vector<32x128xf32>
    %26 = arith.mulf %25, %24 : vector<32x128xf32>
    %27 = arith.mulf %14, %26 : vector<32x128xf32>
    %c0_10 = arith.constant 0 : index
    %c0_11 = arith.constant 0 : index
    %28 = vector.load %arg24[%c0_10, %c0_11] : memref<32x128xf32, #tpu.memory_space<vmem>>, vector<32x128xf32>
    %c0_12 = arith.constant 0 : index
    %c0_13 = arith.constant 0 : index
    %29 = vector.load %arg19[%c0_12, %c0_13] : memref<128x128xf32, #tpu.memory_space<vmem>>, vector<128x128xf32>
    %cst_14 = arith.constant dense<0.000000e+00> : vector<32x128xf32>
    %30 = tpu.matmul %27, %29, %cst_14 {dimension_numbers = #tpu.dot_dimension_numbers<[1], [0], [0], [1], [0, 0, 1, 1], [], []>} : vector<32x128xf32>, vector<128x128xf32>, vector<32x128xf32> -> vector<32x128xf32>
    %31 = arith.addf %28, %30 : vector<32x128xf32>
    %c0_15 = arith.constant 0 : index
    %c0_16 = arith.constant 0 : index
    %32 = vector.load %arg24[%c0_15, %c0_16] : memref<32x128xf32, #tpu.memory_space<vmem>>, vector<32x128xf32>
    tpu.vector_store %arg24[%c0_15, %c0_16], %31 {strides = array<i32>} : memref<32x128xf32, #tpu.memory_space<vmem>>, vector<32x128xf32>,
    %c3_i32 = arith.constant 3 : i32
    %33 = arith.cmpi eq, %arg2, %c3_i32 : i32
    %34 = arith.extui %33 : i1 to i32
    %c0_i32_17 = arith.constant 0 : i32
    %35 = arith.cmpi ne, %34, %c0_i32_17 : i32
    scf.if %35 {
      %c0_18 = arith.constant 0 : index
      %c0_19 = arith.constant 0 : index
      %c0_20 = arith.constant 0 : index
      %36 = vector.load %arg14[%c0_18, %c0_19, %c0_20] : memref<1x1x128xf32, #tpu.memory_space<vmem>>, vector<1x1x128xf32>
      %37 = vector.shape_cast %36 : vector<1x1x128xf32> to vector<1x128xf32>
      %c0_21 = arith.constant 0 : index
      %c0_22 = arith.constant 0 : index
      %c0_23 = arith.constant 0 : index
      %38 = vector.load %arg11[%c0_21, %c0_22, %c0_23] : memref<1x1x128xf32, #tpu.memory_space<vmem>>, vector<1x1x128xf32>
      %39 = vector.shape_cast %38 : vector<1x1x128xf32> to vector<1x128xf32>
      %40 = vector.shape_cast %5 : vector<32x1xi1> to vector<32x1xi1>
      %41 = vector.broadcast %40 : vector<32x1xi1> to vector<32x128xi1>
      %42 = vector.shape_cast %37 : vector<1x128xf32> to vector<1x128xf32>
      %43 = vector.broadcast %42 : vector<1x128xf32> to vector<32x128xf32>
      %44 = vector.shape_cast %39 : vector<1x128xf32> to vector<1x128xf32>
      %45 = vector.broadcast %44 : vector<1x128xf32> to vector<32x128xf32>
      %46 = arith.select %41, %43, %45 : vector<32x128xi1>, vector<32x128xf32>
      %c0_24 = arith.constant 0 : index
      %c0_25 = arith.constant 0 : index
      %47 = vector.load %arg22[%c0_24, %c0_25] : memref<32x128xf32, #tpu.memory_space<vmem>>, vector<32x128xf32>
      %c0_26 = arith.constant 0 : index
      %c0_27 = arith.constant 0 : index
      %48 = vector.load %arg24[%c0_26, %c0_27] : memref<32x128xf32, #tpu.memory_space<vmem>>, vector<32x128xf32>
      %c0_28 = arith.constant 0 : index
      %c0_29 = arith.constant 0 : index
      %49 = vector.load %arg20[%c0_28, %c0_29] : memref<1x128xf32, #tpu.memory_space<vmem>>, vector<1x128xf32>
      %50 = vector.broadcast %49 : vector<1x128xf32> to vector<32x128xf32>
      %51 = arith.addf %48, %50 : vector<32x128xf32>
      %52 = arith.mulf %46, %51 : vector<32x128xf32>
      %53 = arith.addf %47, %52 : vector<32x128xf32>
      %c0_30 = arith.constant 0 : index
      %c0_31 = arith.constant 0 : index
      %c0_32 = arith.constant 0 : index
      %54 = vector.load %arg21[%c0_30, %c0_31, %c0_32] : memref<1x32x128xf32, #tpu.memory_space<vmem>>, vector<1x32x128xf32>
      %55 = vector.shape_cast %54 : vector<1x32x128xf32> to vector<32x128xf32>
      %56 = vector.shape_cast %53 : vector<32x128xf32> to vector<1x32x128xf32>
      tpu.vector_store %arg21[%c0_30, %c0_31, %c0_32], %56 {strides = array<i32>} : memref<1x32x128xf32, #tpu.memory_space<vmem>>, vector<1x32x128xf32>,
    } else {
    }
    return
  }
  func.func @transform_0(%arg0: i32, %arg1: i32, %arg2: i32) -> (i32, i32, i32) {
    %c0_i32 = arith.constant 0 : i32
    %c0_i32_0 = arith.constant 0 : i32
    return %arg0, %arg1, %c0_i32 : i32, i32, i32
  }
  func.func @transform_1(%arg0: i32, %arg1: i32, %arg2: i32) -> (i32, i32, i32) {
    %c0_i32 = arith.constant 0 : i32
    %c0_i32_0 = arith.constant 0 : i32
    return %arg0, %arg1, %c0_i32 : i32, i32, i32
  }
  func.func @transform_2(%arg0: i32, %arg1: i32, %arg2: i32) -> (i32, i32) {
    %c0_i32 = arith.constant 0 : i32
    %c0_i32_0 = arith.constant 0 : i32
    %c0_i32_1 = arith.constant 0 : i32
    return %c0_i32, %c0_i32_0 : i32, i32
  }
  func.func @transform_3(%arg0: i32, %arg1: i32, %arg2: i32) -> (i32, i32) {
    %c0_i32 = arith.constant 0 : i32
    %c0_i32_0 = arith.constant 0 : i32
    %c0_i32_1 = arith.constant 0 : i32
    return %c0_i32, %c0_i32_0 : i32, i32
  }
  func.func @transform_4(%arg0: i32, %arg1: i32, %arg2: i32) -> (i32, i32, i32) {
    %c0_i32 = arith.constant 0 : i32
    %c0_i32_0 = arith.constant 0 : i32
    %c0_i32_1 = arith.constant 0 : i32
    return %arg0, %c0_i32, %c0_i32_0 : i32, i32, i32
  }
  func.func @transform_5(%arg0: i32, %arg1: i32, %arg2: i32) -> (i32, i32, i32) {
    %c0_i32 = arith.constant 0 : i32
    %c0_i32_0 = arith.constant 0 : i32
    %c0_i32_1 = arith.constant 0 : i32
    return %arg0, %c0_i32, %c0_i32_0 : i32, i32, i32
  }
  func.func @transform_6(%arg0: i32, %arg1: i32, %arg2: i32) -> (i32, i32, i32) {
    %c0_i32 = arith.constant 0 : i32
    %c0_i32_0 = arith.constant 0 : i32
    %c0_i32_1 = arith.constant 0 : i32
    return %arg0, %c0_i32, %c0_i32_0 : i32, i32, i32
  }
  func.func @transform_7(%arg0: i32, %arg1: i32, %arg2: i32) -> (i32, i32, i32) {
    %c0_i32 = arith.constant 0 : i32
    %c0_i32_0 = arith.constant 0 : i32
    %c0_i32_1 = arith.constant 0 : i32
    return %arg0, %c0_i32, %c0_i32_0 : i32, i32, i32
  }
  func.func @transform_8(%arg0: i32, %arg1: i32, %arg2: i32) -> (i32, i32, i32) {
    %c0_i32 = arith.constant 0 : i32
    %c0_i32_0 = arith.constant 0 : i32
    %c0_i32_1 = arith.constant 0 : i32
    return %arg0, %c0_i32, %c0_i32_0 : i32, i32, i32
  }
  func.func @transform_9(%arg0: i32, %arg1: i32, %arg2: i32) -> (i32, i32, i32) {
    %c0_i32 = arith.constant 0 : i32
    %c0_i32_0 = arith.constant 0 : i32
    %c0_i32_1 = arith.constant 0 : i32
    return %arg0, %c0_i32, %c0_i32_0 : i32, i32, i32
  }
  func.func @transform_10(%arg0: i32, %arg1: i32, %arg2: i32) -> (i32, i32, i32) {
    %c0_i32 = arith.constant 0 : i32
    %c0_i32_0 = arith.constant 0 : i32
    %c0_i32_1 = arith.constant 0 : i32
    return %arg0, %c0_i32, %c0_i32_0 : i32, i32, i32
  }
  func.func @transform_11(%arg0: i32, %arg1: i32, %arg2: i32) -> (i32, i32, i32) {
    %c0_i32 = arith.constant 0 : i32
    %c0_i32_0 = arith.constant 0 : i32
    %c0_i32_1 = arith.constant 0 : i32
    return %arg0, %c0_i32, %c0_i32_0 : i32, i32, i32
  }
  func.func @transform_12(%arg0: i32, %arg1: i32, %arg2: i32) -> (i32, i32) {
    %c0_i32 = arith.constant 0 : i32
    %c0_i32_0 = arith.constant 0 : i32
    %c0_i32_1 = arith.constant 0 : i32
    return %c0_i32, %c0_i32_0 : i32, i32
  }
  func.func @transform_13(%arg0: i32, %arg1: i32, %arg2: i32) -> (i32, i32) {
    %c0_i32 = arith.constant 0 : i32
    %c0_i32_0 = arith.constant 0 : i32
    %c0_i32_1 = arith.constant 0 : i32
    return %c0_i32, %c0_i32_0 : i32, i32
  }
  func.func @transform_14(%arg0: i32, %arg1: i32, %arg2: i32) -> (i32, i32) {
    %c0_i32 = arith.constant 0 : i32
    %c0_i32_0 = arith.constant 0 : i32
    return %c0_i32, %arg2 : i32, i32
  }
  func.func @transform_15(%arg0: i32, %arg1: i32, %arg2: i32) -> (i32, i32) {
    %c0_i32 = arith.constant 0 : i32
    %c0_i32_0 = arith.constant 0 : i32
    return %c0_i32, %arg2 : i32, i32
  }
  func.func @transform_16(%arg0: i32, %arg1: i32, %arg2: i32) -> (i32, i32) {
    %c0_i32 = arith.constant 0 : i32
    %c0_i32_0 = arith.constant 0 : i32
    return %arg2, %c0_i32 : i32, i32
  }
  func.func @transform_17(%arg0: i32, %arg1: i32, %arg2: i32) -> (i32, i32) {
    %c0_i32 = arith.constant 0 : i32
    %c0_i32_0 = arith.constant 0 : i32
    %c0_i32_1 = arith.constant 0 : i32
    return %c0_i32, %c0_i32_0 : i32, i32
  }
  func.func @transform_18(%arg0: i32, %arg1: i32, %arg2: i32) -> (i32, i32, i32) {
    %c0_i32 = arith.constant 0 : i32
    %c0_i32_0 = arith.constant 0 : i32
    return %arg0, %arg1, %c0_i32 : i32, i32, i32
  }
}

</mosaic_0001>

<llo_original>
// kernel: cog_tau_block.4
$region0: #{cog_tau_block.4}
  #allocation0 [shape = 'u32[]', space=smem, size = 0x4, offset = 0x4, fixed_abs, tag = 'smem constant byte address 0x4 - core index']
  #allocation1 [shape = 'u32[72,128]{1,0:T(1,128)}', space=vmem, size = 0x9000, scoped, tag = 'internal scratch']
  #allocation2 [shape = 'f32[32,1]{1,0:T(8,128)}', space=vmem, size = 0x4000, scoped, tag = 'scratch operand']
  #allocation3 [shape = 'f32[32,1]{1,0:T(8,128)}', space=vmem, size = 0x4000, scoped, tag = 'scratch operand']
  #allocation4 [shape = 'f32[32,32]{1,0:T(8,128)}', space=vmem, size = 0x4000, scoped, tag = 'scratch operand']
  %s0 = inlined_call_operand.vmem [shape: f32[2,4,64,32], index: 0, kind: input, shape index: {}]
  %s1 = inlined_call_operand.vmem [shape: f32[2,4,64,32], index: 1, kind: input, shape index: {}]
  %s2 = inlined_call_operand.vmem [shape: f32[2,4,64,32], index: 2, kind: input, shape index: {}]
  %s3 = inlined_call_operand.vmem [shape: f32[2,4,64,32], index: 3, kind: output, shape index: {}]
  %s4 = sld [smem:[#allocation0]]
  $region53: #{cog_tau_block.4} parent=0
    _
  %s6 = ssub.s32 1, %s4
  %s7 = scalar_select 0, %s6, %s4
  loop: start=0, step=1, limit=34
  $region2: #{cog_tau_block.4} parent=0 // loop_pre_header
    _
  $region3: #{cog_tau_block.4} parent=0 // loop_header
    %s9 = sphi 0, %s13
    %p10 = scmp.ge.s32.totalorder %s9, 34
    %s16 = sphi 0, %s42
    %s17 = sphi 0, %s38
    %s18 = sphi 0, %s34
    %s19 = sphi 0, %s30
    %s20 = sphi 0, %s16
    %s21 = sphi 0, %s17
    %s22 = sphi 0, %s18
    %s23 = sphi 0, %s19
    %s24 = sphi 0, %s20
    %s25 = sphi 0, %s21
    %s26 = sphi 0, %s22
    %s27 = sphi 0, %s23
    %s49 = sphi 0, %s51
    %s52 = sphi 0, %s49
    %s53 = sphi 0, %s52
    %s69 = sphi 0, %s53
    %s79 = sphi 0, %s81
    %s82 = sphi 0, %s79
    %s83 = sphi 0, %s82
    %s99 = sphi 0, %s83
    %s109 = sphi 0, %s111
    %s112 = sphi 0, %s109
    %s113 = sphi 0, %s112
    %s129 = sphi 0, %s113
    %s139 = sphi 0, %s141
    %s142 = sphi 0, %s139
    %s143 = sphi 0, %s142
    %s159 = sphi 0, %s143
  $region4: #{cog_tau_block.4} parent=0 // loop_header_branch
    %12 = sbr.rel (%p10) target = $region8
  $region5: #{cog_tau_block.4} parent=0 // loop_body
    %s14 = ssub.s32 %s9, 1
    %s15 = ssub.s32 %s9, 2
    %s28 = sadd.s32 1, %s19
    %p29 = scmp.ge.s32.totalorder %s28, 2
    %s30 = scalar_select %p29, 0, %s28
    %s31 = sadd.s32 1, %s18
    %s32 = scalar_select %p29, %s31, %s18
    %p33 = scmp.ge.s32.totalorder %s32, 2
    %s34 = scalar_select %p33, 0, %s32
    %s35 = sadd.s32 1, %s17
    %s36 = scalar_select %p33, %s35, %s17
    %p37 = scmp.ge.s32.totalorder %s36, 4
    %s38 = scalar_select %p37, 0, %s36
    %s39 = sadd.s32 1, %s16
    %s40 = scalar_select %p37, %s39, %s16
    %p41 = scmp.ge.s32.totalorder %s40, 2
    %s42 = scalar_select %p41, 0, %s40
    %s43 = ssub.s32 %s16, %s42
    %s44 = ssub.s32 %s17, %s38
    %s45 = sor.u32 %s43, %s44
    %s46 = ssub.s32 %s18, %s34
    %s47 = sor.u32 %s45, %s46
    %p48 = scmp.eq.s32.totalorder %s47, 0
    %s50 = sadd.s32 %s49, 1
    %s51 = scalar_select %p48, %s49, %s50
    %p54 = pneg %p48
    %p55 = scmp.eq.s32.totalorder %s9, 31
    %p56 = por %p54, %p55
    %p57 = scmp.ne.s32.totalorder %s49, %s52
    %p58 = scmp.eq.s32.totalorder %s9, 0
    %p59 = por %p57, %p58
    %p60 = scmp.ne.s32.totalorder %s49, %s52
    %p61 = scmp.eq.s32.totalorder %s14, 31
    %p62 = por %p60, %p61
    %p63 = scmp.ne.s32.totalorder %s52, %s53
    %p64 = scmp.eq.s32.totalorder %s14, 0
    %p65 = por %p63, %p64
    %p66 = scmp.ne.s32.totalorder %s52, %s53
    %p67 = scmp.eq.s32.totalorder %s15, 31
    %p68 = por %p66, %p67
    %p70 = scmp.ne.s32.totalorder %s53, %s69
    %p71 = scmp.eq.s32.totalorder %s15, 0
    %p72 = por %p70, %p71
    %s73 = ssub.s32 %s16, %s42
    %s74 = ssub.s32 %s17, %s38
    %s75 = sor.u32 %s73, %s74
    %s76 = ssub.s32 %s19, %s30
    %s77 = sor.u32 %s75, %s76
    %p78 = scmp.eq.s32.totalorder %s77, 0
    %s80 = sadd.s32 %s79, 1
    %s81 = scalar_select %p78, %s79, %s80
    %p84 = pneg %p78
    %p85 = scmp.eq.s32.totalorder %s9, 31
    %p86 = por %p84, %p85
    %p87 = scmp.ne.s32.totalorder %s79, %s82
    %p88 = scmp.eq.s32.totalorder %s9, 0
    %p89 = por %p87, %p88
    %p90 = scmp.ne.s32.totalorder %s79, %s82
    %p91 = scmp.eq.s32.totalorder %s14, 31
    %p92 = por %p90, %p91
    %p93 = scmp.ne.s32.totalorder %s82, %s83
    %p94 = scmp.eq.s32.totalorder %s14, 0
    %p95 = por %p93, %p94
    %p96 = scmp.ne.s32.totalorder %s82, %s83
    %p97 = scmp.eq.s32.totalorder %s15, 31
    %p98 = por %p96, %p97
    %p100 = scmp.ne.s32.totalorder %s83, %s99
    %p101 = scmp.eq.s32.totalorder %s15, 0
    %p102 = por %p100, %p101
    %s103 = ssub.s32 %s16, %s42
    %s104 = ssub.s32 %s17, %s38
    %s105 = sor.u32 %s103, %s104
    %s106 = ssub.s32 %s19, %s30
    %s107 = sor.u32 %s105, %s106
    %p108 = scmp.eq.s32.totalorder %s107, 0
    %s110 = sadd.s32 %s109, 1
    %s111 = scalar_select %p108, %s109, %s110
    %p114 = pneg %p108
    %p115 = scmp.eq.s32.totalorder %s9, 31
    %p116 = por %p114, %p115
    %p117 = scmp.ne.s32.totalorder %s109, %s112
    %p118 = scmp.eq.s32.totalorder %s9, 0
    %p119 = por %p117, %p118
    %p120 = scmp.ne.s32.totalorder %s109, %s112
    %p121 = scmp.eq.s32.totalorder %s14, 31
    %p122 = por %p120, %p121
    %p123 = scmp.ne.s32.totalorder %s112, %s113
    %p124 = scmp.eq.s32.totalorder %s14, 0
    %p125 = por %p123, %p124
    %p126 = scmp.ne.s32.totalorder %s112, %s113
    %p127 = scmp.eq.s32.totalorder %s15, 31
    %p128 = por %p126, %p127
    %p130 = scmp.ne.s32.totalorder %s113, %s129
    %p131 = scmp.eq.s32.totalorder %s15, 0
    %p132 = por %p130, %p131
    %s133 = ssub.s32 %s16, %s42
    %s134 = ssub.s32 %s17, %s38
    %s135 = sor.u32 %s133, %s134
    %s136 = ssub.s32 %s18, %s34
    %s137 = sor.u32 %s135, %s136
    %p138 = scmp.eq.s32.totalorder %s137, 0
    %s140 = sadd.s32 %s139, 1
    %s141 = scalar_select %p138, %s139, %s140
    %p144 = pneg %p138
    %p145 = scmp.eq.s32.totalorder %s9, 31
    %p146 = por %p144, %p145
    %p147 = scmp.ne.s32.totalorder %s139, %s142
    %p148 = scmp.eq.s32.totalorder %s9, 0
    %p149 = por %p147, %p148
    %p150 = scmp.ne.s32.totalorder %s139, %s142
    %p151 = scmp.eq.s32.totalorder %s14, 31
    %p152 = por %p150, %p151
    %p153 = scmp.ne.s32.totalorder %s142, %s143
    %p154 = scmp.eq.s32.totalorder %s14, 0
    %p155 = por %p153, %p154
    %p156 = scmp.ne.s32.totalorder %s142, %s143
    %p157 = scmp.eq.s32.totalorder %s15, 31
    %p158 = por %p156, %p157
    %p160 = scmp.ne.s32.totalorder %s143, %s159
    %p161 = scmp.eq.s32.totalorder %s15, 0
    %p162 = por %p160, %p161
    %p163 = scmp.le.s32.totalorder 1, %s9
    %p164 = scmp.lt.s32.totalorder %s9, 33
    %p165 = pnand %p163, %p164
    %p166 = pneg %p165
    // Predicated region
    $region9: #{cog_tau_block.4} parent=5 // pred_check
      _
    $region10: #{cog_tau_block.4} parent=5 // pred_check_branch
      %168 = sbr.rel (%p165) target = $region12
    $region11: #{cog_tau_block.4} parent=5 // pred_region
      %s169 = ssub.s32 %s9, 1
    $region12: #{cog_tau_block.4} parent=5 // pred_fallthru
      _
    %p170 = scmp.lt.s32.totalorder %s9, 32
    // Predicated region
    $region13: #{cog_tau_block.4} parent=5 // pred_check
      %p171 = pneg %p170
    $region14: #{cog_tau_block.4} parent=5 // pred_check_branch
      %173 = sbr.rel (%p171) target = $region16
    $region15: #{cog_tau_block.4} parent=5 // pred_region
      // Predicated region
      $region17: #{cog_tau_block.4} parent=15 // pred_check
        %p174 = pneg %p59
      $region18: #{cog_tau_block.4} parent=15 // pred_check_branch
        %176 = sbr.rel (%p174) target = $region20
      $region19: #{cog_tau_block.4} parent=15 // pred_region
        %s177 = smul.u32 4, %s18
        %p178 = scmp.lt.s32.totalorder %s16, 1
        %s179 = scalar_select %p178, %s16, 1
        %p180 = scmp.lt.s32.totalorder %s17, 3
        %s181 = scalar_select %p180, %s17, 3
        %p182 = scmp.lt.s32.totalorder %s177, 7
        %s183 = scalar_select %p182, %s177, 7
        %s184 = smul.addr %s181, 8
        %s185 = sadd.s32 %s183, %s184
        %s186 = smul.addr %s179, 32
        %s187 = sadd.s32 %s185, %s186
        %s188 = smul.addr %s187, 8
        %s189 = scalar_lea.vmem %s0, %s188
        %s190 = smul.u32 4, %s18
      $region20: #{cog_tau_block.4} parent=15 // pred_fallthru
        _
      // Predicated region
      $region21: #{cog_tau_block.4} parent=15 // pred_check
        %p191 = pneg %p89
      $region22: #{cog_tau_block.4} parent=15 // pred_check_branch
        %193 = sbr.rel (%p191) target = $region24
      $region23: #{cog_tau_block.4} parent=15 // pred_region
        %s194 = smul.u32 4, %s19
        %p195 = scmp.lt.s32.totalorder %s16, 1
        %s196 = scalar_select %p195, %s16, 1
        %p197 = scmp.lt.s32.totalorder %s17, 3
        %s198 = scalar_select %p197, %s17, 3
        %p199 = scmp.lt.s32.totalorder %s194, 7
        %s200 = scalar_select %p199, %s194, 7
        %s201 = smul.addr %s198, 8
        %s202 = sadd.s32 %s200, %s201
        %s203 = smul.addr %s196, 32
        %s204 = sadd.s32 %s202, %s203
        %s205 = smul.addr %s204, 8
        %s206 = scalar_lea.vmem %s1, %s205
        %s207 = smul.u32 4, %s19
      $region24: #{cog_tau_block.4} parent=15 // pred_fallthru
        _
      // Predicated region
      $region25: #{cog_tau_block.4} parent=15 // pred_check
        %p208 = pneg %p119
      $region26: #{cog_tau_block.4} parent=15 // pred_check_branch
        %210 = sbr.rel (%p208) target = $region28
      $region27: #{cog_tau_block.4} parent=15 // pred_region
        %s211 = smul.u32 4, %s19
        %p212 = scmp.lt.s32.totalorder %s16, 1
        %s213 = scalar_select %p212, %s16, 1
        %p214 = scmp.lt.s32.totalorder %s17, 3
        %s215 = scalar_select %p214, %s17, 3
        %p216 = scmp.lt.s32.totalorder %s211, 7
        %s217 = scalar_select %p216, %s211, 7
        %s218 = smul.addr %s215, 8
        %s219 = sadd.s32 %s217, %s218
        %s220 = smul.addr %s213, 32
        %s221 = sadd.s32 %s219, %s220
        %s222 = smul.addr %s221, 8
        %s223 = scalar_lea.vmem %s2, %s222
        %s224 = smul.u32 4, %s19
      $region28: #{cog_tau_block.4} parent=15 // pred_fallthru
        _
    $region16: #{cog_tau_block.4} parent=5 // pred_fallthru
      _
    %p225 = scmp.le.s32.totalorder 1, %s9
    %p226 = scmp.lt.s32.totalorder %s9, 33
    %p227 = pnand %p225, %p226
    %p228 = pneg %p227
    // Predicated region
    $region29: #{cog_tau_block.4} parent=5 // pred_check
      _
    $region30: #{cog_tau_block.4} parent=5 // pred_check_branch
      %230 = sbr.rel (%p227) target = $region32
    $region31: #{cog_tau_block.4} parent=5 // pred_region
      %s231 = ssub.s32 %s9, 1
      %s232 = smul.u32 4, %s22
      %p233 = scmp.lt.s32.totalorder %s20, 1
      %s234 = scalar_select %p233, %s20, 1
      %p235 = scmp.lt.s32.totalorder %s21, 3
      %s236 = scalar_select %p235, %s21, 3
      %p237 = scmp.lt.s32.totalorder %s232, 7
      %s238 = scalar_select %p237, %s232, 7
      %s239 = smul.addr %s236, 8
      %s240 = sadd.s32 %s238, %s239
      %s241 = smul.addr %s234, 32
      %s242 = sadd.s32 %s240, %s241
      %s243 = smul.addr %s242, 8
      %s244 = scalar_lea.vmem %s0, %s243
      %p245 = pneg %p65
      %p246 = pneg %p62
      %s247 = smul.u32 4, %s23
      %p248 = scmp.lt.s32.totalorder %s20, 1
      %s249 = scalar_select %p248, %s20, 1
      %p250 = scmp.lt.s32.totalorder %s21, 3
      %s251 = scalar_select %p250, %s21, 3
      %p252 = scmp.lt.s32.totalorder %s247, 7
      %s253 = scalar_select %p252, %s247, 7
      %s254 = smul.addr %s251, 8
      %s255 = sadd.s32 %s253, %s254
      %s256 = smul.addr %s249, 32
      %s257 = sadd.s32 %s255, %s256
      %s258 = smul.addr %s257, 8
      %s259 = scalar_lea.vmem %s1, %s258
      %p260 = pneg %p95
      %p261 = pneg %p92
      %s262 = smul.u32 4, %s23
      %p263 = scmp.lt.s32.totalorder %s20, 1
      %s264 = scalar_select %p263, %s20, 1
      %p265 = scmp.lt.s32.totalorder %s21, 3
      %s266 = scalar_select %p265, %s21, 3
      %p267 = scmp.lt.s32.totalorder %s262, 7
      %s268 = scalar_select %p267, %s262, 7
      %s269 = smul.addr %s266, 8
      %s270 = sadd.s32 %s268, %s269
      %s271 = smul.addr %s264, 32
      %s272 = sadd.s32 %s270, %s271
      %s273 = smul.addr %s272, 8
      %s274 = scalar_lea.vmem %s2, %s273
      %p275 = pneg %p125
      %p276 = pneg %p122
      %p277 = pneg %p155
      %p278 = pneg %p152
      %s279 = smul.u32 4, %s22
      %p280 = scmp.lt.s32.totalorder %s20, 1
      %s281 = scalar_select %p280, %s20, 1
      %p282 = scmp.lt.s32.totalorder %s21, 3
      %s283 = scalar_select %p282, %s21, 3
      %p284 = scmp.lt.s32.totalorder %s279, 7
      %s285 = scalar_select %p284, %s279, 7
      %s286 = smul.addr %s283, 8
      %s287 = sadd.s32 %s285, %s286
      %s288 = smul.addr %s281, 32
      %s289 = sadd.s32 %s287, %s288
      %s290 = smul.addr %s289, 8
      %s291 = scalar_lea.vmem %s3, %s290
      %s292 = smul.u32 4, %s22
      %p293 = scmp.lt.s32.totalorder %s20, 1
      %s294 = scalar_select %p293, %s20, 1
      %p295 = scmp.lt.s32.totalorder %s21, 3
      %s296 = scalar_select %p295, %s21, 3
      %p297 = scmp.lt.s32.totalorder %s292, 7
      %s298 = scalar_select %p297, %s292, 7
      %s299 = smul.addr %s296, 8
      %s300 = sadd.s32 %s298, %s299
      %s301 = smul.addr %s294, 32
      %s302 = sadd.s32 %s300, %s301
      %s303 = smul.addr %s302, 8
      %s304 = scalar_lea.vmem %s0, %s303
      %s305 = smul.u32 4, %s22
      %s306 = smul.u32 4, %s23
      %p307 = scmp.lt.s32.totalorder %s20, 1
      %s308 = scalar_select %p307, %s20, 1
      %p309 = scmp.lt.s32.totalorder %s21, 3
      %s310 = scalar_select %p309, %s21, 3
      %p311 = scmp.lt.s32.totalorder %s306, 7
      %s312 = scalar_select %p311, %s306, 7
      %s313 = smul.addr %s310, 8
      %s314 = sadd.s32 %s312, %s313
      %s315 = smul.addr %s308, 32
      %s316 = sadd.s32 %s314, %s315
      %s317 = smul.addr %s316, 8
      %s318 = scalar_lea.vmem %s1, %s317
      %s319 = smul.u32 4, %s23
      %s320 = smul.u32 4, %s23
      %p321 = scmp.lt.s32.totalorder %s20, 1
      %s322 = scalar_select %p321, %s20, 1
      %p323 = scmp.lt.s32.totalorder %s21, 3
      %s324 = scalar_select %p323, %s21, 3
      %p325 = scmp.lt.s32.totalorder %s320, 7
      %s326 = scalar_select %p325, %s320, 7
      %s327 = smul.addr %s324, 8
      %s328 = sadd.s32 %s326, %s327
      %s329 = smul.addr %s322, 32
      %s330 = sadd.s32 %s328, %s329
      %s331 = smul.addr %s330, 8
      %s332 = scalar_lea.vmem %s2, %s331
      %s333 = smul.u32 4, %s23
      %s334 = smul.u32 4, %s22
      %p335 = scmp.lt.s32.totalorder %s20, 1
      %s336 = scalar_select %p335, %s20, 1
      %p337 = scmp.lt.s32.totalorder %s21, 3
      %s338 = scalar_select %p337, %s21, 3
      %p339 = scmp.lt.s32.totalorder %s334, 7
      %s340 = scalar_select %p339, %s334, 7
      %s341 = smul.addr %s338, 8
      %s342 = sadd.s32 %s340, %s341
      %s343 = smul.addr %s336, 32
      %s344 = sadd.s32 %s342, %s343
      %s345 = smul.addr %s344, 8
      %s346 = scalar_lea.vmem %s3, %s345
      %s347 = smul.u32 4, %s22
      %p348 = scmp.eq.s32.totalorder %s23, 0
      // Predicated region
      $region33: #{cog_tau_block.4} parent=31 // pred_check
        %p349 = pneg %p348
      $region34: #{cog_tau_block.4} parent=31 // pred_check_branch
        %351 = sbr.rel (%p349) target = $region36
      $region35: #{cog_tau_block.4} parent=31 // pred_region
        %vm352 = vcmask 7168
        %353 = vst.msk [vmem:[#allocation2] sm:$0xff] %vm352, -1e+30
        %354 = vst.msk [vmem:[#allocation2 + $0x8] sm:$0xff] %vm352, -1e+30
        %355 = vst.msk [vmem:[#allocation2 + $0x10] sm:$0xff] %vm352, -1e+30
        %356 = vst.msk [vmem:[#allocation2 + $0x18] sm:$0xff] %vm352, -1e+30
        %357 = vst.msk [vmem:[#allocation3] sm:$0xff] %vm352, 0.0
        %358 = vst.msk [vmem:[#allocation3 + $0x8] sm:$0xff] %vm352, 0.0
        %359 = vst.msk [vmem:[#allocation3 + $0x10] sm:$0xff] %vm352, 0.0
        %360 = vst.msk [vmem:[#allocation3 + $0x18] sm:$0xff] %vm352, 0.0
        %vm361 = vcmask 261120
        %362 = vst.msk [vmem:[#allocation4] sm:$0xff] %vm361, 0.0
        %363 = vst.msk [vmem:[#allocation4 + $0x8] sm:$0xff] %vm361, 0.0
        %364 = vst.msk [vmem:[#allocation4 + $0x10] sm:$0xff] %vm361, 0.0
        %365 = vst.msk [vmem:[#allocation4 + $0x18] sm:$0xff] %vm361, 0.0
      $region36: #{cog_tau_block.4} parent=31 // pred_fallthru
        _
      %v366 = vld [vmem:[%s304] sm:$0xff]
      %v367 = vld [vmem:[%s304 + $0x8] sm:$0xff]
      %v368 = vld [vmem:[%s304 + $0x10] sm:$0xff]
      %v369 = vld [vmem:[%s304 + $0x18] sm:$0xff]
      %v370 = vld [vmem:[%s318] sm:$0xff]
      %v371 = vld [vmem:[%s318 + $0x8] sm:$0xff]
      %v372 = vld [vmem:[%s318 + $0x10] sm:$0xff]
      %v373 = vld [vmem:[%s318 + $0x18] sm:$0xff]
      %v374 = vld [vmem:[%s332] sm:$0xff]
      %v375 = vld [vmem:[%s332 + $0x8] sm:$0xff]
      %v376 = vld [vmem:[%s332 + $0x10] sm:$0xff]
      %v377 = vld [vmem:[%s332 + $0x18] sm:$0xff]
      %vm378 = vcmask 261120
      %v380 = vsel %vm378, %v366, 0
      %v383 = vsel %vm378, %v367, 0
      %v386 = vsel %vm378, %v368, 0
      %v389 = vsel %vm378, %v369, 0
      %v392 = vsel %vm378, %v370, 0
      %v395 = vsel %vm378, %v371, 0
      %v398 = vsel %vm378, %v372, 0
      %v401 = vsel %vm378, %v373, 0
      %403 = vmatpush.xpose.msra.mxu0 0.0
      %404 = vmatpush.xpose.msra.mxu0 0.0
      %405 = vmatpush.xpose.msra.mxu0 0.0
      %406 = vmatpush.xpose.msra.mxu0 0.0
      %407 = vmatpush.xpose.msra.mxu0 0.0
      %408 = vmatpush.xpose.msra.mxu0 0.0
      %409 = vmatpush.xpose.msra.mxu0 0.0
      %410 = vmatpush.xpose.msra.mxu0 0.0
      %411 = vmatpush.xpose.msra.mxu0 0.0
      %412 = vmatpush.xpose.msra.mxu0 0.0
      %413 = vmatpush.xpose.msra.mxu0 0.0
      %414 = vmatpush.xpose.msra.mxu0 0.0
      %415 = vmatpush.xpose.msra.mxu0 %v401
      %416 = vmatpush.xpose.msra.mxu0 %v398
      %417 = vmatpush.xpose.msra.mxu0 %v395
      %418 = vmatpush.xpose.msra.mxu0 %v392
      %419 = vmatmul.f32.gmra.mxu0 %v380
      %v420 = vpop.f32.mrf.mxu0
      %v421 = vadd.f32 0.0, %v420
      %422 = vmatmul.f32.gmra.mxu0 %v383
      %v423 = vpop.f32.mrf.mxu0
      %v424 = vadd.f32 0.0, %v423
      %425 = vmatmul.f32.gmra.mxu0 %v386
      %v426 = vpop.f32.mrf.mxu0
      %v427 = vadd.f32 0.0, %v426
      %428 = vmatmul.f32.gmra.mxu0 %v389
      %v429 = vpop.f32.mrf.mxu0
      %v430 = vadd.f32 0.0, %v429
      %431 = vdwg.mxu0
      %v432 = vmul.f32 %v421, 0.17677669
      %v433 = vmul.f32 %v424, 0.17677669
      %v434 = vmul.f32 %v427, 0.17677669
      %v435 = vmul.f32 %v430, 0.17677669
      %s436 = smul.u32 %s23, 32
      %v437 = vlaneseq
      %v438 = vand.u32 %v437, 127
      %v439 = vstv %s436
      %v440 = vadd.s32 %v439, %v438
      %vm441 = vcmp.lt.s32.totalorder %v440, 56
      %v442 = vsel %vm441, %v432, -1e+30
      %v443 = vsel %vm441, %v433, -1e+30
      %v444 = vsel %vm441, %v434, -1e+30
      %v445 = vsel %vm441, %v435, -1e+30
      %v446 = vld [vmem:[#allocation2] sm:$0xff]
      %v447 = vld [vmem:[#allocation2 + $0x8] sm:$0xff]
      %v448 = vld [vmem:[#allocation2 + $0x10] sm:$0xff]
      %v449 = vld [vmem:[#allocation2 + $0x18] sm:$0xff]
      %v450 = vsel %vm378, %v442, -inf
      %451 = vmax.xlane.f32.xlu0 %v450
      %v452 = vpop.xlane.xlu0 %451
      %v453 = vsel %vm378, %v443, -inf
      %454 = vmax.xlane.f32.xlu0 %v453
      %v455 = vpop.xlane.xlu0 %454
      %v456 = vsel %vm378, %v444, -inf
      %457 = vmax.xlane.f32.xlu0 %v456
      %v458 = vpop.xlane.xlu0 %457
      %v459 = vsel %vm378, %v445, -inf
      %460 = vmax.xlane.f32.xlu0 %v459
      %v461 = vpop.xlane.xlu0 %460
      %v462 = vmax.f32 %v446, %v452
      %v463 = vmax.f32 %v447, %v455
      %v464 = vmax.f32 %v448, %v458
      %v465 = vmax.f32 %v449, %v461
      %v466 = vsub.f32 %v446, %v462
      %v467 = vsub.f32 %v447, %v463
      %v468 = vsub.f32 %v448, %v464
      %v469 = vsub.f32 %v449, %v465
      %v470 = vmul.f32 %v466, 1.442695
      %v471 = vpow.pop %v470
      %v472 = vmul.f32 %v467, 1.442695
      %v473 = vpow.pop %v472
      %v474 = vmul.f32 %v468, 1.442695
      %v475 = vpow.pop %v474
      %v476 = vmul.f32 %v469, 1.442695
      %v477 = vpow.pop %v476
      %479 = vset.pattern.permute.xlu0 0
      %480 = vperm.xlu0 %479, %v462
      %v481 = vpop.permute.xlu0 %480
      %484 = vset.pattern.permute.xlu0 0
      %485 = vperm.xlu0 %484, %v463
      %v486 = vpop.permute.xlu0 %485
      %489 = vset.pattern.permute.xlu0 0
      %490 = vperm.xlu0 %489, %v464
      %v491 = vpop.permute.xlu0 %490
      %494 = vset.pattern.permute.xlu0 0
      %495 = vperm.xlu0 %494, %v465
      %v496 = vpop.permute.xlu0 %495
      %v498 = vsub.f32 %v442, %v481
      %v499 = vsub.f32 %v443, %v486
      %v500 = vsub.f32 %v444, %v491
      %v501 = vsub.f32 %v445, %v496
      %v502 = vmul.f32 %v498, 1.442695
      %v503 = vpow.pop %v502
      %v504 = vmul.f32 %v499, 1.442695
      %v505 = vpow.pop %v504
      %v506 = vmul.f32 %v500, 1.442695
      %v507 = vpow.pop %v506
      %v508 = vmul.f32 %v501, 1.442695
      %v509 = vpow.pop %v508
      %v510 = vld [vmem:[#allocation3] sm:$0xff]
      %v511 = vld [vmem:[#allocation3 + $0x8] sm:$0xff]
      %v512 = vld [vmem:[#allocation3 + $0x10] sm:$0xff]
      %v513 = vld [vmem:[#allocation3 + $0x18] sm:$0xff]
      %v514 = vmul.f32 %v471, %v510
      %v515 = vmul.f32 %v473, %v511
      %v516 = vmul.f32 %v475, %v512
      %v517 = vmul.f32 %v477, %v513
      %v518 = vsel %vm378, %v503, 0.0
      %519 = vadd.xlane.f32.xlu0 %v518
      %v520 = vpop.xlane.xlu0 %519
      %v521 = vsel %vm378, %v505, 0.0
      %522 = vadd.xlane.f32.xlu0 %v521
      %v523 = vpop.xlane.xlu0 %522
      %v524 = vsel %vm378, %v507, 0.0
      %525 = vadd.xlane.f32.xlu0 %v524
      %v526 = vpop.xlane.xlu0 %525
      %v527 = vsel %vm378, %v509, 0.0
      %528 = vadd.xlane.f32.xlu0 %v527
      %v529 = vpop.xlane.xlu0 %528
      %v530 = vadd.f32 %v514, %v520
      %v531 = vadd.f32 %v515, %v523
      %v532 = vadd.f32 %v516, %v526
      %v533 = vadd.f32 %v517, %v529
      %vm534 = vcmask 7168
      %535 = vst.msk [vmem:[#allocation3] sm:$0xff] %vm534, %v530
      %536 = vst.msk [vmem:[#allocation3 + $0x8] sm:$0xff] %vm534, %v531
      %537 = vst.msk [vmem:[#allocation3 + $0x10] sm:$0xff] %vm534, %v532
      %538 = vst.msk [vmem:[#allocation3 + $0x18] sm:$0xff] %vm534, %v533
      %v539 = vld [vmem:[#allocation4] sm:$0xff]
      %v540 = vld [vmem:[#allocation4 + $0x8] sm:$0xff]
      %v541 = vld [vmem:[#allocation4 + $0x10] sm:$0xff]
      %v542 = vld [vmem:[#allocation4 + $0x18] sm:$0xff]
      %544 = vset.pattern.permute.xlu0 0
      %545 = vperm.xlu0 %544, %v471
      %v546 = vpop.permute.xlu0 %545
      %549 = vset.pattern.permute.xlu0 0
      %550 = vperm.xlu0 %549, %v473
      %v551 = vpop.permute.xlu0 %550
      %554 = vset.pattern.permute.xlu0 0
      %555 = vperm.xlu0 %554, %v475
      %v556 = vpop.permute.xlu0 %555
      %559 = vset.pattern.permute.xlu0 0
      %560 = vperm.xlu0 %559, %v477
      %v561 = vpop.permute.xlu0 %560
      %v563 = vmul.f32 %v546, %v539
      %v564 = vmul.f32 %v551, %v540
      %v565 = vmul.f32 %v556, %v541
      %v566 = vmul.f32 %v561, %v542
      %v568 = vsel %vm378, %v503, 0
      %v571 = vsel %vm378, %v505, 0
      %v574 = vsel %vm378, %v507, 0
      %v577 = vsel %vm378, %v509, 0
      %579 = vmatpush.msra.mxu0 0.0
      %580 = vmatpush.msra.mxu0 0.0
      %581 = vmatpush.msra.mxu0 0.0
      %582 = vmatpush.msra.mxu0 0.0
      %583 = vmatpush.msra.mxu0 0.0
      %584 = vmatpush.msra.mxu0 0.0
      %585 = vmatpush.msra.mxu0 0.0
      %586 = vmatpush.msra.mxu0 0.0
      %587 = vmatpush.msra.mxu0 0.0
      %588 = vmatpush.msra.mxu0 0.0
      %589 = vmatpush.msra.mxu0 0.0
      %590 = vmatpush.msra.mxu0 0.0
      %591 = vmatpush.msra.mxu0 %v377
      %592 = vmatpush.msra.mxu0 %v376
      %593 = vmatpush.msra.mxu0 %v375
      %594 = vmatpush.msra.mxu0 %v374
      %595 = vmatmul.f32.gmra.mxu0 %v568
      %v596 = vpop.f32.mrf.mxu0
      %v597 = vadd.f32 0.0, %v596
      %598 = vmatmul.f32.gmra.mxu0 %v571
      %v599 = vpop.f32.mrf.mxu0
      %v600 = vadd.f32 0.0, %v599
      %601 = vmatmul.f32.gmra.mxu0 %v574
      %v602 = vpop.f32.mrf.mxu0
      %v603 = vadd.f32 0.0, %v602
      %604 = vmatmul.f32.gmra.mxu0 %v577
      %v605 = vpop.f32.mrf.mxu0
      %v606 = vadd.f32 0.0, %v605
      %607 = vdwg.mxu0
      %v608 = vadd.f32 %v563, %v597
      %v609 = vadd.f32 %v564, %v600
      %v610 = vadd.f32 %v565, %v603
      %v611 = vadd.f32 %v566, %v606
      %612 = vst.msk [vmem:[#allocation4] sm:$0xff] %vm378, %v608
      %613 = vst.msk [vmem:[#allocation4 + $0x8] sm:$0xff] %vm378, %v609
      %614 = vst.msk [vmem:[#allocation4 + $0x10] sm:$0xff] %vm378, %v610
      %615 = vst.msk [vmem:[#allocation4 + $0x18] sm:$0xff] %vm378, %v611
      %616 = vst.msk [vmem:[#allocation2] sm:$0xff] %vm534, %v462
      %617 = vst.msk [vmem:[#allocation2 + $0x8] sm:$0xff] %vm534, %v463
      %618 = vst.msk [vmem:[#allocation2 + $0x10] sm:$0xff] %vm534, %v464
      %619 = vst.msk [vmem:[#allocation2 + $0x18] sm:$0xff] %vm534, %v465
      %p620 = scmp.eq.s32.totalorder %s23, 1
      // Predicated region
      $region37: #{cog_tau_block.4} parent=31 // pred_check
        %p621 = pneg %p620
      $region38: #{cog_tau_block.4} parent=31 // pred_check_branch
        %623 = sbr.rel (%p621) target = $region40
      $region39: #{cog_tau_block.4} parent=31 // pred_region
        %v624 = vld [vmem:[#allocation3] sm:$0xff]
        %v625 = vld [vmem:[#allocation3 + $0x8] sm:$0xff]
        %v626 = vld [vmem:[#allocation3 + $0x10] sm:$0xff]
        %v627 = vld [vmem:[#allocation3 + $0x18] sm:$0xff]
        %v628 = vrcp.pop %v624
        %v629 = vmul.f32 %v624, %v628
        %v630 = vsub.f32 1.0, %v629
        %v631 = vmul.f32 %v628, %v630
        %v632 = vadd.f32 %v628, %v631
        %vm633 = vweird.f32 %v624
        %vm634 = vweird.f32 %v628
        %vm635 = vmor %vm633, %vm634
        %v636 = vsel %vm635, %v628, %v632
        %v637 = vand.u32 2147483647, %v624
        %vm638 = vcmp.eq.f32.partialorder %v637, 8.507059e+37
        %v639 = vand.u32 %v624, 2147483648
        %v640 = vor.u32 1.1754944e-38, %v639
        %v641 = vsel %vm638, %v640, %v636
        %v642 = vrcp.pop %v625
        %v643 = vmul.f32 %v625, %v642
        %v644 = vsub.f32 1.0, %v643
        %v645 = vmul.f32 %v642, %v644
        %v646 = vadd.f32 %v642, %v645
        %vm647 = vweird.f32 %v625
        %vm648 = vweird.f32 %v642
        %vm649 = vmor %vm647, %vm648
        %v650 = vsel %vm649, %v642, %v646
        %v651 = vand.u32 2147483647, %v625
        %vm652 = vcmp.eq.f32.partialorder %v651, 8.507059e+37
        %v653 = vand.u32 %v625, 2147483648
        %v654 = vor.u32 1.1754944e-38, %v653
        %v655 = vsel %vm652, %v654, %v650
        %v656 = vrcp.pop %v626
        %v657 = vmul.f32 %v626, %v656
        %v658 = vsub.f32 1.0, %v657
        %v659 = vmul.f32 %v656, %v658
        %v660 = vadd.f32 %v656, %v659
        %vm661 = vweird.f32 %v626
        %vm662 = vweird.f32 %v656
        %vm663 = vmor %vm661, %vm662
        %v664 = vsel %vm663, %v656, %v660
        %v665 = vand.u32 2147483647, %v626
        %vm666 = vcmp.eq.f32.partialorder %v665, 8.507059e+37
        %v667 = vand.u32 %v626, 2147483648
        %v668 = vor.u32 1.1754944e-38, %v667
        %v669 = vsel %vm666, %v668, %v664
        %v670 = vrcp.pop %v627
        %v671 = vmul.f32 %v627, %v670
        %v672 = vsub.f32 1.0, %v671
        %v673 = vmul.f32 %v670, %v672
        %v674 = vadd.f32 %v670, %v673
        %vm675 = vweird.f32 %v627
        %vm676 = vweird.f32 %v670
        %vm677 = vmor %vm675, %vm676
        %v678 = vsel %vm677, %v670, %v674
        %v679 = vand.u32 2147483647, %v627
        %vm680 = vcmp.eq.f32.partialorder %v679, 8.507059e+37
        %v681 = vand.u32 %v627, 2147483648
        %v682 = vor.u32 1.1754944e-38, %v681
        %v683 = vsel %vm680, %v682, %v678
        %v684 = vld [vmem:[#allocation4] sm:$0xff]
        %v685 = vld [vmem:[#allocation4 + $0x8] sm:$0xff]
        %v686 = vld [vmem:[#allocation4 + $0x10] sm:$0xff]
        %v687 = vld [vmem:[#allocation4 + $0x18] sm:$0xff]
        %689 = vset.pattern.permute.xlu0 0
        %690 = vperm.xlu0 %689, %v641
        %v691 = vpop.permute.xlu0 %690
        %694 = vset.pattern.permute.xlu0 0
        %695 = vperm.xlu0 %694, %v655
        %v696 = vpop.permute.xlu0 %695
        %699 = vset.pattern.permute.xlu0 0
        %700 = vperm.xlu0 %699, %v669
        %v701 = vpop.permute.xlu0 %700
        %704 = vset.pattern.permute.xlu0 0
        %705 = vperm.xlu0 %704, %v683
        %v706 = vpop.permute.xlu0 %705
        %v708 = vmul.f32 %v684, %v691
        %v709 = vmul.f32 %v685, %v696
        %v710 = vmul.f32 %v686, %v701
        %v711 = vmul.f32 %v687, %v706
        %712 = vst.msk [vmem:[%s346] sm:$0xff] %vm378, %v708
        %713 = vst.msk [vmem:[%s346 + $0x8] sm:$0xff] %vm378, %v709
        %714 = vst.msk [vmem:[%s346 + $0x10] sm:$0xff] %vm378, %v710
        %715 = vst.msk [vmem:[%s346 + $0x18] sm:$0xff] %vm378, %v711
      $region40: #{cog_tau_block.4} parent=31 // pred_fallthru
        _
      %s716 = smul.u32 4, %s22
      %p717 = scmp.lt.s32.totalorder %s20, 1
      %s718 = scalar_select %p717, %s20, 1
      %p719 = scmp.lt.s32.totalorder %s21, 3
      %s720 = scalar_select %p719, %s21, 3
      %p721 = scmp.lt.s32.totalorder %s716, 7
      %s722 = scalar_select %p721, %s716, 7
      %s723 = smul.addr %s720, 8
      %s724 = sadd.s32 %s722, %s723
      %s725 = smul.addr %s718, 32
      %s726 = sadd.s32 %s724, %s725
      %s727 = smul.addr %s726, 8
      %s728 = scalar_lea.vmem %s3, %s727
      // Predicated region
      $region41: #{cog_tau_block.4} parent=31 // pred_check
        %p729 = pneg %p152
      $region42: #{cog_tau_block.4} parent=31 // pred_check_branch
        %731 = sbr.rel (%p729) target = $region44
      $region43: #{cog_tau_block.4} parent=31 // pred_region
        %s732 = smul.u32 4, %s22
      $region44: #{cog_tau_block.4} parent=31 // pred_fallthru
        _
    $region32: #{cog_tau_block.4} parent=5 // pred_fallthru
      _
    %p733 = scmp.le.s32.totalorder 2, %s9
    // Predicated region
    $region45: #{cog_tau_block.4} parent=5 // pred_check
      %p734 = pneg %p733
    $region46: #{cog_tau_block.4} parent=5 // pred_check_branch
      %736 = sbr.rel (%p734) target = $region48
    $region47: #{cog_tau_block.4} parent=5 // pred_region
      %s737 = ssub.s32 %s9, 2
      // Predicated region
      $region49: #{cog_tau_block.4} parent=47 // pred_check
        %p738 = pneg %p158
      $region50: #{cog_tau_block.4} parent=47 // pred_check_branch
        %740 = sbr.rel (%p738) target = $region52
      $region51: #{cog_tau_block.4} parent=47 // pred_region
        %s741 = smul.u32 4, %s26
        %p742 = scmp.lt.s32.totalorder %s24, 1
        %s743 = scalar_select %p742, %s24, 1
        %p744 = scmp.lt.s32.totalorder %s25, 3
        %s745 = scalar_select %p744, %s25, 3
        %p746 = scmp.lt.s32.totalorder %s741, 7
        %s747 = scalar_select %p746, %s741, 7
        %s748 = smul.addr %s745, 8
        %s749 = sadd.s32 %s747, %s748
        %s750 = smul.addr %s743, 32
        %s751 = sadd.s32 %s749, %s750
        %s752 = smul.addr %s751, 8
        %s753 = scalar_lea.vmem %s3, %s752
      $region52: #{cog_tau_block.4} parent=47 // pred_fallthru
        _
    $region48: #{cog_tau_block.4} parent=5 // pred_fallthru
      _
  $region6: #{cog_tau_block.4} parent=0 // loop_footer
    %s13 = sadd.s32 1, %s9
  $region7: #{cog_tau_block.4} parent=0 // loop_footer_branch
    %8 = sbr.rel target = $region3
  $region8: #{cog_tau_block.4} parent=0 // loop_exit
    _

// kernel: cog_tau_block.3
$region0: #{cog_tau_block.3}
  #allocation0 [shape = 'u32[]', space=smem, size = 0x4, offset = 0x4, fixed_abs, tag = 'smem constant byte address 0x4 - core index']
  #allocation1 [shape = 'u32[72,128]{1,0:T(1,128)}', space=vmem, size = 0x9000, scoped, tag = 'internal scratch']
  %s0 = inlined_call_operand.vmem [shape: f32[2,64,128], index: 0, kind: input, shape index: {}]
  %s1 = inlined_call_operand.vmem [shape: f32[2,1,128], index: 1, kind: input, shape index: {}]
  %s2 = inlined_call_operand.vmem [shape: f32[2,1,128], index: 2, kind: input, shape index: {}]
  %s3 = inlined_call_operand.vmem [shape: f32[2,1,128], index: 3, kind: input, shape index: {}]
  %s4 = inlined_call_operand.vmem [shape: f32[2,1,128], index: 4, kind: input, shape index: {}]
  %s5 = inlined_call_operand.vmem [shape: f32[1,128], index: 5, kind: input, shape index: {}]
  %s6 = inlined_call_operand.vmem [shape: f32[1,128], index: 6, kind: input, shape index: {}]
  %s7 = inlined_call_operand.vmem [shape: f32[128,128], index: 7, kind: input, shape index: {}]
  %s8 = inlined_call_operand.vmem [shape: f32[128,128], index: 8, kind: input, shape index: {}]
  %s9 = inlined_call_operand.vmem [shape: f32[128,128], index: 9, kind: input, shape index: {}]
  %s10 = inlined_call_operand.vmem [shape: f32[128,4], index: 10, kind: input, shape index: {}]
  %s11 = inlined_call_operand.vmem [shape: f32[4,128], index: 11, kind: input, shape index: {}]
  %s12 = inlined_call_operand.vmem [shape: f32[1,128], index: 12, kind: input, shape index: {}]
  %s13 = inlined_call_operand.vmem [shape: f32[1,128], index: 13, kind: input, shape index: {}]
  %s14 = inlined_call_operand.vmem [shape: f32[1,128], index: 14, kind: input, shape index: {}]
  %s15 = inlined_call_operand.vmem [shape: f32[1,128], index: 15, kind: input, shape index: {}]
  %s16 = inlined_call_operand.vmem [shape: f32[2,64,128], index: 16, kind: output, shape index: {0}]
  %s17 = inlined_call_operand.vmem [shape: f32[2,64,128], index: 17, kind: output, shape index: {1}]
  %s18 = inlined_call_operand.vmem [shape: f32[2,64,128], index: 18, kind: output, shape index: {2}]
  %19 = xla_tuple %s16, %s17, %s18
  %s20 = sld [smem:[#allocation0]]
  $region113: #{cog_tau_block.3} parent=0
    _
  %s22 = ssub.s32 1, %s20
  %s23 = scalar_select 0, %s22, %s20
  loop: start=0, step=1, limit=6
  $region2: #{cog_tau_block.3} parent=0 // loop_pre_header
    _
  $region3: #{cog_tau_block.3} parent=0 // loop_header
    %s25 = sphi 0, %s29
    %p26 = scmp.ge.s32.totalorder %s25, 6
    %s32 = sphi 0, %s44
    %s33 = sphi 0, %s40
    %s34 = sphi 0, %s32
    %s35 = sphi 0, %s33
    %s36 = sphi 0, %s34
    %s37 = sphi 0, %s35
    %s49 = sphi 0, %s51
    %s52 = sphi 0, %s49
    %s53 = sphi 0, %s52
    %s69 = sphi 0, %s53
    %s75 = sphi 0, %s77
    %s78 = sphi 0, %s75
    %s79 = sphi 0, %s78
    %s95 = sphi 0, %s79
    %s101 = sphi 0, %s103
    %s104 = sphi 0, %s101
    %s105 = sphi 0, %s104
    %s121 = sphi 0, %s105
    %s127 = sphi 0, %s129
    %s130 = sphi 0, %s127
    %s131 = sphi 0, %s130
    %s147 = sphi 0, %s131
    %s153 = sphi 0, %s155
    %s156 = sphi 0, %s153
    %s157 = sphi 0, %s156
    %s173 = sphi 0, %s157
    %s177 = sphi 0, %s177
    %s179 = sphi 0, %s177
    %s180 = sphi 0, %s179
    %s194 = sphi 0, %s180
    %s198 = sphi 0, %s198
    %s200 = sphi 0, %s198
    %s201 = sphi 0, %s200
    %s215 = sphi 0, %s201
    %s219 = sphi 0, %s219
    %s221 = sphi 0, %s219
    %s222 = sphi 0, %s221
    %s236 = sphi 0, %s222
    %s240 = sphi 0, %s240
    %s242 = sphi 0, %s240
    %s243 = sphi 0, %s242
    %s257 = sphi 0, %s243
    %s261 = sphi 0, %s261
    %s263 = sphi 0, %s261
    %s264 = sphi 0, %s263
    %s278 = sphi 0, %s264
    %s282 = sphi 0, %s282
    %s284 = sphi 0, %s282
    %s285 = sphi 0, %s284
    %s299 = sphi 0, %s285
    %s303 = sphi 0, %s303
    %s305 = sphi 0, %s303
    %s306 = sphi 0, %s305
    %s320 = sphi 0, %s306
    %s324 = sphi 0, %s324
    %s326 = sphi 0, %s324
    %s327 = sphi 0, %s326
    %s341 = sphi 0, %s327
    %s345 = sphi 0, %s345
    %s347 = sphi 0, %s345
    %s348 = sphi 0, %s347
    %s362 = sphi 0, %s348
    %s366 = sphi 0, %s366
    %s368 = sphi 0, %s366
    %s369 = sphi 0, %s368
    %s383 = sphi 0, %s369
    %s387 = sphi 0, %s387
    %s389 = sphi 0, %s387
    %s390 = sphi 0, %s389
    %s404 = sphi 0, %s390
    %s412 = sphi 0, %s414
    %s415 = sphi 0, %s412
    %s416 = sphi 0, %s415
    %s432 = sphi 0, %s416
    %s440 = sphi 0, %s442
    %s443 = sphi 0, %s440
    %s444 = sphi 0, %s443
    %s460 = sphi 0, %s444
    %s468 = sphi 0, %s470
    %s471 = sphi 0, %s468
    %s472 = sphi 0, %s471
    %s488 = sphi 0, %s472
  $region4: #{cog_tau_block.3} parent=0 // loop_header_branch
    %28 = sbr.rel (%p26) target = $region8
  $region5: #{cog_tau_block.3} parent=0 // loop_body
    %s30 = ssub.s32 %s25, 1
    %s31 = ssub.s32 %s25, 2
    %s38 = sadd.s32 1, %s33
    %p39 = scmp.ge.s32.totalorder %s38, 2
    %s40 = scalar_select %p39, 0, %s38
    %s41 = sadd.s32 1, %s32
    %s42 = scalar_select %p39, %s41, %s32
    %p43 = scmp.ge.s32.totalorder %s42, 2
    %s44 = scalar_select %p43, 0, %s42
    %s45 = ssub.s32 %s32, %s44
    %s46 = ssub.s32 %s33, %s40
    %s47 = sor.u32 %s45, %s46
    %p48 = scmp.eq.s32.totalorder %s47, 0
    %s50 = sadd.s32 %s49, 1
    %s51 = scalar_select %p48, %s49, %s50
    %p54 = pneg %p48
    %p55 = scmp.eq.s32.totalorder %s25, 3
    %p56 = por %p54, %p55
    %p57 = scmp.ne.s32.totalorder %s49, %s52
    %p58 = scmp.eq.s32.totalorder %s25, 0
    %p59 = por %p57, %p58
    %p60 = scmp.ne.s32.totalorder %s49, %s52
    %p61 = scmp.eq.s32.totalorder %s30, 3
    %p62 = por %p60, %p61
    %p63 = scmp.ne.s32.totalorder %s52, %s53
    %p64 = scmp.eq.s32.totalorder %s30, 0
    %p65 = por %p63, %p64
    %p66 = scmp.ne.s32.totalorder %s52, %s53
    %p67 = scmp.eq.s32.totalorder %s31, 3
    %p68 = por %p66, %p67
    %p70 = scmp.ne.s32.totalorder %s53, %s69
    %p71 = scmp.eq.s32.totalorder %s31, 0
    %p72 = por %p70, %p71
    %s73 = ssub.s32 %s32, %s44
    %p74 = scmp.eq.s32.totalorder %s73, 0
    %s76 = sadd.s32 %s75, 1
    %s77 = scalar_select %p74, %s75, %s76
    %p80 = pneg %p74
    %p81 = scmp.eq.s32.totalorder %s25, 3
    %p82 = por %p80, %p81
    %p83 = scmp.ne.s32.totalorder %s75, %s78
    %p84 = scmp.eq.s32.totalorder %s25, 0
    %p85 = por %p83, %p84
    %p86 = scmp.ne.s32.totalorder %s75, %s78
    %p87 = scmp.eq.s32.totalorder %s30, 3
    %p88 = por %p86, %p87
    %p89 = scmp.ne.s32.totalorder %s78, %s79
    %p90 = scmp.eq.s32.totalorder %s30, 0
    %p91 = por %p89, %p90
    %p92 = scmp.ne.s32.totalorder %s78, %s79
    %p93 = scmp.eq.s32.totalorder %s31, 3
    %p94 = por %p92, %p93
    %p96 = scmp.ne.s32.totalorder %s79, %s95
    %p97 = scmp.eq.s32.totalorder %s31, 0
    %p98 = por %p96, %p97
    %s99 = ssub.s32 %s32, %s44
    %p100 = scmp.eq.s32.totalorder %s99, 0
    %s102 = sadd.s32 %s101, 1
    %s103 = scalar_select %p100, %s101, %s102
    %p106 = pneg %p100
    %p107 = scmp.eq.s32.totalorder %s25, 3
    %p108 = por %p106, %p107
    %p109 = scmp.ne.s32.totalorder %s101, %s104
    %p110 = scmp.eq.s32.totalorder %s25, 0
    %p111 = por %p109, %p110
    %p112 = scmp.ne.s32.totalorder %s101, %s104
    %p113 = scmp.eq.s32.totalorder %s30, 3
    %p114 = por %p112, %p113
    %p115 = scmp.ne.s32.totalorder %s104, %s105
    %p116 = scmp.eq.s32.totalorder %s30, 0
    %p117 = por %p115, %p116
    %p118 = scmp.ne.s32.totalorder %s104, %s105
    %p119 = scmp.eq.s32.totalorder %s31, 3
    %p120 = por %p118, %p119
    %p122 = scmp.ne.s32.totalorder %s105, %s121
    %p123 = scmp.eq.s32.totalorder %s31, 0
    %p124 = por %p122, %p123
    %s125 = ssub.s32 %s32, %s44
    %p126 = scmp.eq.s32.totalorder %s125, 0
    %s128 = sadd.s32 %s127, 1
    %s129 = scalar_select %p126, %s127, %s128
    %p132 = pneg %p126
    %p133 = scmp.eq.s32.totalorder %s25, 3
    %p134 = por %p132, %p133
    %p135 = scmp.ne.s32.totalorder %s127, %s130
    %p136 = scmp.eq.s32.totalorder %s25, 0
    %p137 = por %p135, %p136
    %p138 = scmp.ne.s32.totalorder %s127, %s130
    %p139 = scmp.eq.s32.totalorder %s30, 3
    %p140 = por %p138, %p139
    %p141 = scmp.ne.s32.totalorder %s130, %s131
    %p142 = scmp.eq.s32.totalorder %s30, 0
    %p143 = por %p141, %p142
    %p144 = scmp.ne.s32.totalorder %s130, %s131
    %p145 = scmp.eq.s32.totalorder %s31, 3
    %p146 = por %p144, %p145
    %p148 = scmp.ne.s32.totalorder %s131, %s147
    %p149 = scmp.eq.s32.totalorder %s31, 0
    %p150 = por %p148, %p149
    %s151 = ssub.s32 %s32, %s44
    %p152 = scmp.eq.s32.totalorder %s151, 0
    %s154 = sadd.s32 %s153, 1
    %s155 = scalar_select %p152, %s153, %s154
    %p158 = pneg %p152
    %p159 = scmp.eq.s32.totalorder %s25, 3
    %p160 = por %p158, %p159
    %p161 = scmp.ne.s32.totalorder %s153, %s156
    %p162 = scmp.eq.s32.totalorder %s25, 0
    %p163 = por %p161, %p162
    %p164 = scmp.ne.s32.totalorder %s153, %s156
    %p165 = scmp.eq.s32.totalorder %s30, 3
    %p166 = por %p164, %p165
    %p167 = scmp.ne.s32.totalorder %s156, %s157
    %p168 = scmp.eq.s32.totalorder %s30, 0
    %p169 = por %p167, %p168
    %p170 = scmp.ne.s32.totalorder %s156, %s157
    %p171 = scmp.eq.s32.totalorder %s31, 3
    %p172 = por %p170, %p171
    %p174 = scmp.ne.s32.totalorder %s157, %s173
    %p175 = scmp.eq.s32.totalorder %s31, 0
    %p176 = por %p174, %p175
    %s178 = sadd.s32 %s177, 1
    %p181 = scmp.eq.s32.totalorder %s25, 3
    %p182 = scmp.ne.s32.totalorder %s177, %s179
    %p183 = scmp.eq.s32.totalorder %s25, 0
    %p184 = por %p182, %p183
    %p185 = scmp.ne.s32.totalorder %s177, %s179
    %p186 = scmp.eq.s32.totalorder %s30, 3
    %p187 = por %p185, %p186
    %p188 = scmp.ne.s32.totalorder %s179, %s180
    %p189 = scmp.eq.s32.totalorder %s30, 0
    %p190 = por %p188, %p189
    %p191 = scmp.ne.s32.totalorder %s179, %s180
    %p192 = scmp.eq.s32.totalorder %s31, 3
    %p193 = por %p191, %p192
    %p195 = scmp.ne.s32.totalorder %s180, %s194
    %p196 = scmp.eq.s32.totalorder %s31, 0
    %p197 = por %p195, %p196
    %s199 = sadd.s32 %s198, 1
    %p202 = scmp.eq.s32.totalorder %s25, 3
    %p203 = scmp.ne.s32.totalorder %s198, %s200
    %p204 = scmp.eq.s32.totalorder %s25, 0
    %p205 = por %p203, %p204
    %p206 = scmp.ne.s32.totalorder %s198, %s200
    %p207 = scmp.eq.s32.totalorder %s30, 3
    %p208 = por %p206, %p207
    %p209 = scmp.ne.s32.totalorder %s200, %s201
    %p210 = scmp.eq.s32.totalorder %s30, 0
    %p211 = por %p209, %p210
    %p212 = scmp.ne.s32.totalorder %s200, %s201
    %p213 = scmp.eq.s32.totalorder %s31, 3
    %p214 = por %p212, %p213
    %p216 = scmp.ne.s32.totalorder %s201, %s215
    %p217 = scmp.eq.s32.totalorder %s31, 0
    %p218 = por %p216, %p217
    %s220 = sadd.s32 %s219, 1
    %p223 = scmp.eq.s32.totalorder %s25, 3
    %p224 = scmp.ne.s32.totalorder %s219, %s221
    %p225 = scmp.eq.s32.totalorder %s25, 0
    %p226 = por %p224, %p225
    %p227 = scmp.ne.s32.totalorder %s219, %s221
    %p228 = scmp.eq.s32.totalorder %s30, 3
    %p229 = por %p227, %p228
    %p230 = scmp.ne.s32.totalorder %s221, %s222
    %p231 = scmp.eq.s32.totalorder %s30, 0
    %p232 = por %p230, %p231
    %p233 = scmp.ne.s32.totalorder %s221, %s222
    %p234 = scmp.eq.s32.totalorder %s31, 3
    %p235 = por %p233, %p234
    %p237 = scmp.ne.s32.totalorder %s222, %s236
    %p238 = scmp.eq.s32.totalorder %s31, 0
    %p239 = por %p237, %p238
    %s241 = sadd.s32 %s240, 1
    %p244 = scmp.eq.s32.totalorder %s25, 3
    %p245 = scmp.ne.s32.totalorder %s240, %s242
    %p246 = scmp.eq.s32.totalorder %s25, 0
    %p247 = por %p245, %p246
    %p248 = scmp.ne.s32.totalorder %s240, %s242
    %p249 = scmp.eq.s32.totalorder %s30, 3
    %p250 = por %p248, %p249
    %p251 = scmp.ne.s32.totalorder %s242, %s243
    %p252 = scmp.eq.s32.totalorder %s30, 0
    %p253 = por %p251, %p252
    %p254 = scmp.ne.s32.totalorder %s242, %s243
    %p255 = scmp.eq.s32.totalorder %s31, 3
    %p256 = por %p254, %p255
    %p258 = scmp.ne.s32.totalorder %s243, %s257
    %p259 = scmp.eq.s32.totalorder %s31, 0
    %p260 = por %p258, %p259
    %s262 = sadd.s32 %s261, 1
    %p265 = scmp.eq.s32.totalorder %s25, 3
    %p266 = scmp.ne.s32.totalorder %s261, %s263
    %p267 = scmp.eq.s32.totalorder %s25, 0
    %p268 = por %p266, %p267
    %p269 = scmp.ne.s32.totalorder %s261, %s263
    %p270 = scmp.eq.s32.totalorder %s30, 3
    %p271 = por %p269, %p270
    %p272 = scmp.ne.s32.totalorder %s263, %s264
    %p273 = scmp.eq.s32.totalorder %s30, 0
    %p274 = por %p272, %p273
    %p275 = scmp.ne.s32.totalorder %s263, %s264
    %p276 = scmp.eq.s32.totalorder %s31, 3
    %p277 = por %p275, %p276
    %p279 = scmp.ne.s32.totalorder %s264, %s278
    %p280 = scmp.eq.s32.totalorder %s31, 0
    %p281 = por %p279, %p280
    %s283 = sadd.s32 %s282, 1
    %p286 = scmp.eq.s32.totalorder %s25, 3
    %p287 = scmp.ne.s32.totalorder %s282, %s284
    %p288 = scmp.eq.s32.totalorder %s25, 0
    %p289 = por %p287, %p288
    %p290 = scmp.ne.s32.totalorder %s282, %s284
    %p291 = scmp.eq.s32.totalorder %s30, 3
    %p292 = por %p290, %p291
    %p293 = scmp.ne.s32.totalorder %s284, %s285
    %p294 = scmp.eq.s32.totalorder %s30, 0
    %p295 = por %p293, %p294
    %p296 = scmp.ne.s32.totalorder %s284, %s285
    %p297 = scmp.eq.s32.totalorder %s31, 3
    %p298 = por %p296, %p297
    %p300 = scmp.ne.s32.totalorder %s285, %s299
    %p301 = scmp.eq.s32.totalorder %s31, 0
    %p302 = por %p300, %p301
    %s304 = sadd.s32 %s303, 1
    %p307 = scmp.eq.s32.totalorder %s25, 3
    %p308 = scmp.ne.s32.totalorder %s303, %s305
    %p309 = scmp.eq.s32.totalorder %s25, 0
    %p310 = por %p308, %p309
    %p311 = scmp.ne.s32.totalorder %s303, %s305
    %p312 = scmp.eq.s32.totalorder %s30, 3
    %p313 = por %p311, %p312
    %p314 = scmp.ne.s32.totalorder %s305, %s306
    %p315 = scmp.eq.s32.totalorder %s30, 0
    %p316 = por %p314, %p315
    %p317 = scmp.ne.s32.totalorder %s305, %s306
    %p318 = scmp.eq.s32.totalorder %s31, 3
    %p319 = por %p317, %p318
    %p321 = scmp.ne.s32.totalorder %s306, %s320
    %p322 = scmp.eq.s32.totalorder %s31, 0
    %p323 = por %p321, %p322
    %s325 = sadd.s32 %s324, 1
    %p328 = scmp.eq.s32.totalorder %s25, 3
    %p329 = scmp.ne.s32.totalorder %s324, %s326
    %p330 = scmp.eq.s32.totalorder %s25, 0
    %p331 = por %p329, %p330
    %p332 = scmp.ne.s32.totalorder %s324, %s326
    %p333 = scmp.eq.s32.totalorder %s30, 3
    %p334 = por %p332, %p333
    %p335 = scmp.ne.s32.totalorder %s326, %s327
    %p336 = scmp.eq.s32.totalorder %s30, 0
    %p337 = por %p335, %p336
    %p338 = scmp.ne.s32.totalorder %s326, %s327
    %p339 = scmp.eq.s32.totalorder %s31, 3
    %p340 = por %p338, %p339
    %p342 = scmp.ne.s32.totalorder %s327, %s341
    %p343 = scmp.eq.s32.totalorder %s31, 0
    %p344 = por %p342, %p343
    %s346 = sadd.s32 %s345, 1
    %p349 = scmp.eq.s32.totalorder %s25, 3
    %p350 = scmp.ne.s32.totalorder %s345, %s347
    %p351 = scmp.eq.s32.totalorder %s25, 0
    %p352 = por %p350, %p351
    %p353 = scmp.ne.s32.totalorder %s345, %s347
    %p354 = scmp.eq.s32.totalorder %s30, 3
    %p355 = por %p353, %p354
    %p356 = scmp.ne.s32.totalorder %s347, %s348
    %p357 = scmp.eq.s32.totalorder %s30, 0
    %p358 = por %p356, %p357
    %p359 = scmp.ne.s32.totalorder %s347, %s348
    %p360 = scmp.eq.s32.totalorder %s31, 3
    %p361 = por %p359, %p360
    %p363 = scmp.ne.s32.totalorder %s348, %s362
    %p364 = scmp.eq.s32.totalorder %s31, 0
    %p365 = por %p363, %p364
    %s367 = sadd.s32 %s366, 1
    %p370 = scmp.eq.s32.totalorder %s25, 3
    %p371 = scmp.ne.s32.totalorder %s366, %s368
    %p372 = scmp.eq.s32.totalorder %s25, 0
    %p373 = por %p371, %p372
    %p374 = scmp.ne.s32.totalorder %s366, %s368
    %p375 = scmp.eq.s32.totalorder %s30, 3
    %p376 = por %p374, %p375
    %p377 = scmp.ne.s32.totalorder %s368, %s369
    %p378 = scmp.eq.s32.totalorder %s30, 0
    %p379 = por %p377, %p378
    %p380 = scmp.ne.s32.totalorder %s368, %s369
    %p381 = scmp.eq.s32.totalorder %s31, 3
    %p382 = por %p380, %p381
    %p384 = scmp.ne.s32.totalorder %s369, %s383
    %p385 = scmp.eq.s32.totalorder %s31, 0
    %p386 = por %p384, %p385
    %s388 = sadd.s32 %s387, 1
    %p391 = scmp.eq.s32.totalorder %s25, 3
    %p392 = scmp.ne.s32.totalorder %s387, %s389
    %p393 = scmp.eq.s32.totalorder %s25, 0
    %p394 = por %p392, %p393
    %p395 = scmp.ne.s32.totalorder %s387, %s389
    %p396 = scmp.eq.s32.totalorder %s30, 3
    %p397 = por %p395, %p396
    %p398 = scmp.ne.s32.totalorder %s389, %s390
    %p399 = scmp.eq.s32.totalorder %s30, 0
    %p400 = por %p398, %p399
    %p401 = scmp.ne.s32.totalorder %s389, %s390
    %p402 = scmp.eq.s32.totalorder %s31, 3
    %p403 = por %p401, %p402
    %p405 = scmp.ne.s32.totalorder %s390, %s404
    %p406 = scmp.eq.s32.totalorder %s31, 0
    %p407 = por %p405, %p406
    %s408 = ssub.s32 %s32, %s44
    %s409 = ssub.s32 %s33, %s40
    %s410 = sor.u32 %s408, %s409
    %p411 = scmp.eq.s32.totalorder %s410, 0
    %s413 = sadd.s32 %s412, 1
    %s414 = scalar_select %p411, %s412, %s413
    %p417 = pneg %p411
    %p418 = scmp.eq.s32.totalorder %s25, 3
    %p419 = por %p417, %p418
    %p420 = scmp.ne.s32.totalorder %s412, %s415
    %p421 = scmp.eq.s32.totalorder %s25, 0
    %p422 = por %p420, %p421
    %p423 = scmp.ne.s32.totalorder %s412, %s415
    %p424 = scmp.eq.s32.totalorder %s30, 3
    %p425 = por %p423, %p424
    %p426 = scmp.ne.s32.totalorder %s415, %s416
    %p427 = scmp.eq.s32.totalorder %s30, 0
    %p428 = por %p426, %p427
    %p429 = scmp.ne.s32.totalorder %s415, %s416
    %p430 = scmp.eq.s32.totalorder %s31, 3
    %p431 = por %p429, %p430
    %p433 = scmp.ne.s32.totalorder %s416, %s432
    %p434 = scmp.eq.s32.totalorder %s31, 0
    %p435 = por %p433, %p434
    %s436 = ssub.s32 %s32, %s44
    %s437 = ssub.s32 %s33, %s40
    %s438 = sor.u32 %s436, %s437
    %p439 = scmp.eq.s32.totalorder %s438, 0
    %s441 = sadd.s32 %s440, 1
    %s442 = scalar_select %p439, %s440, %s441
    %p445 = pneg %p439
    %p446 = scmp.eq.s32.totalorder %s25, 3
    %p447 = por %p445, %p446
    %p448 = scmp.ne.s32.totalorder %s440, %s443
    %p449 = scmp.eq.s32.totalorder %s25, 0
    %p450 = por %p448, %p449
    %p451 = scmp.ne.s32.totalorder %s440, %s443
    %p452 = scmp.eq.s32.totalorder %s30, 3
    %p453 = por %p451, %p452
    %p454 = scmp.ne.s32.totalorder %s443, %s444
    %p455 = scmp.eq.s32.totalorder %s30, 0
    %p456 = por %p454, %p455
    %p457 = scmp.ne.s32.totalorder %s443, %s444
    %p458 = scmp.eq.s32.totalorder %s31, 3
    %p459 = por %p457, %p458
    %p461 = scmp.ne.s32.totalorder %s444, %s460
    %p462 = scmp.eq.s32.totalorder %s31, 0
    %p463 = por %p461, %p462
    %s464 = ssub.s32 %s32, %s44
    %s465 = ssub.s32 %s33, %s40
    %s466 = sor.u32 %s464, %s465
    %p467 = scmp.eq.s32.totalorder %s466, 0
    %s469 = sadd.s32 %s468, 1
    %s470 = scalar_select %p467, %s468, %s469
    %p473 = pneg %p467
    %p474 = scmp.eq.s32.totalorder %s25, 3
    %p475 = por %p473, %p474
    %p476 = scmp.ne.s32.totalorder %s468, %s471
    %p477 = scmp.eq.s32.totalorder %s25, 0
    %p478 = por %p476, %p477
    %p479 = scmp.ne.s32.totalorder %s468, %s471
    %p480 = scmp.eq.s32.totalorder %s30, 3
    %p481 = por %p479, %p480
    %p482 = scmp.ne.s32.totalorder %s471, %s472
    %p483 = scmp.eq.s32.totalorder %s30, 0
    %p484 = por %p482, %p483
    %p485 = scmp.ne.s32.totalorder %s471, %s472
    %p486 = scmp.eq.s32.totalorder %s31, 3
    %p487 = por %p485, %p486
    %p489 = scmp.ne.s32.totalorder %s472, %s488
    %p490 = scmp.eq.s32.totalorder %s31, 0
    %p491 = por %p489, %p490
    %p492 = scmp.le.s32.totalorder 1, %s25
    %p493 = scmp.lt.s32.totalorder %s25, 5
    %p494 = pnand %p492, %p493
    %p495 = pneg %p494
    // Predicated region
    $region9: #{cog_tau_block.3} parent=5 // pred_check
      _
    $region10: #{cog_tau_block.3} parent=5 // pred_check_branch
      %497 = sbr.rel (%p494) target = $region12
    $region11: #{cog_tau_block.3} parent=5 // pred_region
      %s498 = ssub.s32 %s25, 1
      // Predicated region
      $region13: #{cog_tau_block.3} parent=11 // pred_check
        %p499 = pneg %p190
      $region14: #{cog_tau_block.3} parent=11 // pred_check_branch
        %501 = sbr.rel (%p499) target = $region16
      $region15: #{cog_tau_block.3} parent=11 // pred_region
        _
      $region16: #{cog_tau_block.3} parent=11 // pred_fallthru
        _
      // Predicated region
      $region17: #{cog_tau_block.3} parent=11 // pred_check
        %p502 = pneg %p211
      $region18: #{cog_tau_block.3} parent=11 // pred_check_branch
        %504 = sbr.rel (%p502) target = $region20
      $region19: #{cog_tau_block.3} parent=11 // pred_region
        _
      $region20: #{cog_tau_block.3} parent=11 // pred_fallthru
        _
      // Predicated region
      $region21: #{cog_tau_block.3} parent=11 // pred_check
        %p505 = pneg %p232
      $region22: #{cog_tau_block.3} parent=11 // pred_check_branch
        %507 = sbr.rel (%p505) target = $region24
      $region23: #{cog_tau_block.3} parent=11 // pred_region
        _
      $region24: #{cog_tau_block.3} parent=11 // pred_fallthru
        _
      // Predicated region
      $region25: #{cog_tau_block.3} parent=11 // pred_check
        %p508 = pneg %p253
      $region26: #{cog_tau_block.3} parent=11 // pred_check_branch
        %510 = sbr.rel (%p508) target = $region28
      $region27: #{cog_tau_block.3} parent=11 // pred_region
        _
      $region28: #{cog_tau_block.3} parent=11 // pred_fallthru
        _
      // Predicated region
      $region29: #{cog_tau_block.3} parent=11 // pred_check
        %p511 = pneg %p274
      $region30: #{cog_tau_block.3} parent=11 // pred_check_branch
        %513 = sbr.rel (%p511) target = $region32
      $region31: #{cog_tau_block.3} parent=11 // pred_region
        _
      $region32: #{cog_tau_block.3} parent=11 // pred_fallthru
        _
      // Predicated region
      $region33: #{cog_tau_block.3} parent=11 // pred_check
        %p514 = pneg %p295
      $region34: #{cog_tau_block.3} parent=11 // pred_check_branch
        %516 = sbr.rel (%p514) target = $region36
      $region35: #{cog_tau_block.3} parent=11 // pred_region
        _
      $region36: #{cog_tau_block.3} parent=11 // pred_fallthru
        _
      // Predicated region
      $region37: #{cog_tau_block.3} parent=11 // pred_check
        %p517 = pneg %p316
      $region38: #{cog_tau_block.3} parent=11 // pred_check_branch
        %519 = sbr.rel (%p517) target = $region40
      $region39: #{cog_tau_block.3} parent=11 // pred_region
        _
      $region40: #{cog_tau_block.3} parent=11 // pred_fallthru
        _
      // Predicated region
      $region41: #{cog_tau_block.3} parent=11 // pred_check
        %p520 = pneg %p337
      $region42: #{cog_tau_block.3} parent=11 // pred_check_branch
        %522 = sbr.rel (%p520) target = $region44
      $region43: #{cog_tau_block.3} parent=11 // pred_region
        _
      $region44: #{cog_tau_block.3} parent=11 // pred_fallthru
        _
      // Predicated region
      $region45: #{cog_tau_block.3} parent=11 // pred_check
        %p523 = pneg %p358
      $region46: #{cog_tau_block.3} parent=11 // pred_check_branch
        %525 = sbr.rel (%p523) target = $region48
      $region47: #{cog_tau_block.3} parent=11 // pred_region
        _
      $region48: #{cog_tau_block.3} parent=11 // pred_fallthru
        _
      // Predicated region
      $region49: #{cog_tau_block.3} parent=11 // pred_check
        %p526 = pneg %p379
      $region50: #{cog_tau_block.3} parent=11 // pred_check_branch
        %528 = sbr.rel (%p526) target = $region52
      $region51: #{cog_tau_block.3} parent=11 // pred_region
        _
      $region52: #{cog_tau_block.3} parent=11 // pred_fallthru
        _
      // Predicated region
      $region53: #{cog_tau_block.3} parent=11 // pred_check
        %p529 = pneg %p400
      $region54: #{cog_tau_block.3} parent=11 // pred_check_branch
        %531 = sbr.rel (%p529) target = $region56
      $region55: #{cog_tau_block.3} parent=11 // pred_region
        _
      $region56: #{cog_tau_block.3} parent=11 // pred_fallthru
        _
    $region12: #{cog_tau_block.3} parent=5 // pred_fallthru
      _
    %p532 = scmp.lt.s32.totalorder %s25, 4
    // Predicated region
    $region57: #{cog_tau_block.3} parent=5 // pred_check
      %p533 = pneg %p532
    $region58: #{cog_tau_block.3} parent=5 // pred_check_branch
      %535 = sbr.rel (%p533) target = $region60
    $region59: #{cog_tau_block.3} parent=5 // pred_region
      // Predicated region
      $region61: #{cog_tau_block.3} parent=59 // pred_check
        %p536 = pneg %p59
      $region62: #{cog_tau_block.3} parent=59 // pred_check_branch
        %538 = sbr.rel (%p536) target = $region64
      $region63: #{cog_tau_block.3} parent=59 // pred_region
        %s539 = smul.u32 4, %s33
        %p540 = scmp.lt.s32.totalorder %s32, 1
        %s541 = scalar_select %p540, %s32, 1
        %p542 = scmp.lt.s32.totalorder %s539, 7
        %s543 = scalar_select %p542, %s539, 7
        %s544 = smul.addr %s541, 8
        %s545 = sadd.s32 %s543, %s544
        %s546 = smul.addr %s545, 8
        %s547 = scalar_lea.vmem %s0, %s546
        %s548 = smul.u32 4, %s33
      $region64: #{cog_tau_block.3} parent=59 // pred_fallthru
        _
      // Predicated region
      $region65: #{cog_tau_block.3} parent=59 // pred_check
        %p549 = pneg %p85
      $region66: #{cog_tau_block.3} parent=59 // pred_check_branch
        %551 = sbr.rel (%p549) target = $region68
      $region67: #{cog_tau_block.3} parent=59 // pred_region
        %p552 = scmp.lt.s32.totalorder %s32, 1
        %s553 = scalar_select %p552, %s32, 1
        %s554 = scalar_lea.vmem %s1, %s553
      $region68: #{cog_tau_block.3} parent=59 // pred_fallthru
        _
      // Predicated region
      $region69: #{cog_tau_block.3} parent=59 // pred_check
        %p555 = pneg %p111
      $region70: #{cog_tau_block.3} parent=59 // pred_check_branch
        %557 = sbr.rel (%p555) target = $region72
      $region71: #{cog_tau_block.3} parent=59 // pred_region
        %p558 = scmp.lt.s32.totalorder %s32, 1
        %s559 = scalar_select %p558, %s32, 1
        %s560 = scalar_lea.vmem %s2, %s559
      $region72: #{cog_tau_block.3} parent=59 // pred_fallthru
        _
      // Predicated region
      $region73: #{cog_tau_block.3} parent=59 // pred_check
        %p561 = pneg %p137
      $region74: #{cog_tau_block.3} parent=59 // pred_check_branch
        %563 = sbr.rel (%p561) target = $region76
      $region75: #{cog_tau_block.3} parent=59 // pred_region
        %p564 = scmp.lt.s32.totalorder %s32, 1
        %s565 = scalar_select %p564, %s32, 1
        %s566 = scalar_lea.vmem %s3, %s565
      $region76: #{cog_tau_block.3} parent=59 // pred_fallthru
        _
      // Predicated region
      $region77: #{cog_tau_block.3} parent=59 // pred_check
        %p567 = pneg %p163
      $region78: #{cog_tau_block.3} parent=59 // pred_check_branch
        %569 = sbr.rel (%p567) target = $region80
      $region79: #{cog_tau_block.3} parent=59 // pred_region
        %p570 = scmp.lt.s32.totalorder %s32, 1
        %s571 = scalar_select %p570, %s32, 1
        %s572 = scalar_lea.vmem %s4, %s571
      $region80: #{cog_tau_block.3} parent=59 // pred_fallthru
        _
    $region60: #{cog_tau_block.3} parent=5 // pred_fallthru
      _
    %p573 = scmp.le.s32.totalorder 1, %s25
    %p574 = scmp.lt.s32.totalorder %s25, 5
    %p575 = pnand %p573, %p574
    %p576 = pneg %p575
    // Predicated region
    $region81: #{cog_tau_block.3} parent=5 // pred_check
      _
    $region82: #{cog_tau_block.3} parent=5 // pred_check_branch
      %578 = sbr.rel (%p575) target = $region84
    $region83: #{cog_tau_block.3} parent=5 // pred_region
      %s579 = ssub.s32 %s25, 1
      %s580 = smul.u32 4, %s35
      %p581 = scmp.lt.s32.totalorder %s34, 1
      %s582 = scalar_select %p581, %s34, 1
      %p583 = scmp.lt.s32.totalorder %s580, 7
      %s584 = scalar_select %p583, %s580, 7
      %s585 = smul.addr %s582, 8
      %s586 = sadd.s32 %s584, %s585
      %s587 = smul.addr %s586, 8
      %s588 = scalar_lea.vmem %s0, %s587
      %p589 = pneg %p65
      %p590 = pneg %p62
      %p591 = scmp.lt.s32.totalorder %s34, 1
      %s592 = scalar_select %p591, %s34, 1
      %s593 = scalar_lea.vmem %s1, %s592
      %p594 = pneg %p91
      %p595 = pneg %p88
      %p596 = scmp.lt.s32.totalorder %s34, 1
      %s597 = scalar_select %p596, %s34, 1
      %s598 = scalar_lea.vmem %s2, %s597
      %p599 = pneg %p117
      %p600 = pneg %p114
      %p601 = scmp.lt.s32.totalorder %s34, 1
      %s602 = scalar_select %p601, %s34, 1
      %s603 = scalar_lea.vmem %s3, %s602
      %p604 = pneg %p143
      %p605 = pneg %p140
      %p606 = scmp.lt.s32.totalorder %s34, 1
      %s607 = scalar_select %p606, %s34, 1
      %s608 = scalar_lea.vmem %s4, %s607
      %p609 = pneg %p169
      %p610 = pneg %p166
      %p611 = pneg %p190
      %p612 = pneg %p187
      %p613 = pneg %p211
      %p614 = pneg %p208
      %p615 = pneg %p232
      %p616 = pneg %p229
      %p617 = pneg %p253
      %p618 = pneg %p250
      %p619 = pneg %p274
      %p620 = pneg %p271
      %p621 = pneg %p295
      %p622 = pneg %p292
      %p623 = pneg %p316
      %p624 = pneg %p313
      %p625 = pneg %p337
      %p626 = pneg %p334
      %p627 = pneg %p358
      %p628 = pneg %p355
      %p629 = pneg %p379
      %p630 = pneg %p376
      %p631 = pneg %p400
      %p632 = pneg %p397
      %p633 = pneg %p428
      %p634 = pneg %p425
      %s635 = smul.u32 4, %s35
      %p636 = scmp.lt.s32.totalorder %s34, 1
      %s637 = scalar_select %p636, %s34, 1
      %p638 = scmp.lt.s32.totalorder %s635, 7
      %s639 = scalar_select %p638, %s635, 7
      %s640 = smul.addr %s637, 8
      %s641 = sadd.s32 %s639, %s640
      %s642 = smul.addr %s641, 8
      %s643 = scalar_lea.vmem %s16, %s642
      %p644 = pneg %p456
      %p645 = pneg %p453
      %s646 = smul.u32 4, %s35
      %p647 = scmp.lt.s32.totalorder %s34, 1
      %s648 = scalar_select %p647, %s34, 1
      %p649 = scmp.lt.s32.totalorder %s646, 7
      %s650 = scalar_select %p649, %s646, 7
      %s651 = smul.addr %s648, 8
      %s652 = sadd.s32 %s650, %s651
      %s653 = smul.addr %s652, 8
      %s654 = scalar_lea.vmem %s17, %s653
      %p655 = pneg %p484
      %p656 = pneg %p481
      %s657 = smul.u32 4, %s35
      %p658 = scmp.lt.s32.totalorder %s34, 1
      %s659 = scalar_select %p658, %s34, 1
      %p660 = scmp.lt.s32.totalorder %s657, 7
      %s661 = scalar_select %p660, %s657, 7
      %s662 = smul.addr %s659, 8
      %s663 = sadd.s32 %s661, %s662
      %s664 = smul.addr %s663, 8
      %s665 = scalar_lea.vmem %s18, %s664
      %s666 = smul.u32 4, %s35
      %p667 = scmp.lt.s32.totalorder %s34, 1
      %s668 = scalar_select %p667, %s34, 1
      %p669 = scmp.lt.s32.totalorder %s666, 7
      %s670 = scalar_select %p669, %s666, 7
      %s671 = smul.addr %s668, 8
      %s672 = sadd.s32 %s670, %s671
      %s673 = smul.addr %s672, 8
      %s674 = scalar_lea.vmem %s0, %s673
      %s675 = smul.u32 4, %s35
      %p676 = scmp.lt.s32.totalorder %s34, 1
      %s677 = scalar_select %p676, %s34, 1
      %s678 = scalar_lea.vmem %s1, %s677
      %p679 = scmp.lt.s32.totalorder %s34, 1
      %s680 = scalar_select %p679, %s34, 1
      %s681 = scalar_lea.vmem %s2, %s680
      %p682 = scmp.lt.s32.totalorder %s34, 1
      %s683 = scalar_select %p682, %s34, 1
      %s684 = scalar_lea.vmem %s3, %s683
      %p685 = scmp.lt.s32.totalorder %s34, 1
      %s686 = scalar_select %p685, %s34, 1
      %s687 = scalar_lea.vmem %s4, %s686
      %s688 = smul.u32 4, %s35
      %p689 = scmp.lt.s32.totalorder %s34, 1
      %s690 = scalar_select %p689, %s34, 1
      %p691 = scmp.lt.s32.totalorder %s688, 7
      %s692 = scalar_select %p691, %s688, 7
      %s693 = smul.addr %s690, 8
      %s694 = sadd.s32 %s692, %s693
      %s695 = smul.addr %s694, 8
      %s696 = scalar_lea.vmem %s16, %s695
      %s697 = smul.u32 4, %s35
      %s698 = smul.u32 4, %s35
      %p699 = scmp.lt.s32.totalorder %s34, 1
      %s700 = scalar_select %p699, %s34, 1
      %p701 = scmp.lt.s32.totalorder %s698, 7
      %s702 = scalar_select %p701, %s698, 7
      %s703 = smul.addr %s700, 8
      %s704 = sadd.s32 %s702, %s703
      %s705 = smul.addr %s704, 8
      %s706 = scalar_lea.vmem %s17, %s705
      %s707 = smul.u32 4, %s35
      %s708 = smul.u32 4, %s35
      %p709 = scmp.lt.s32.totalorder %s34, 1
      %s710 = scalar_select %p709, %s34, 1
      %p711 = scmp.lt.s32.totalorder %s708, 7
      %s712 = scalar_select %p711, %s708, 7
      %s713 = smul.addr %s710, 8
      %s714 = sadd.s32 %s712, %s713
      %s715 = smul.addr %s714, 8
      %s716 = scalar_lea.vmem %s18, %s715
      %s717 = smul.u32 4, %s35
      %v718 = vld [vmem:[%s674] sm:$0xff]
      %v719 = vld [vmem:[%s674 + $0x8] sm:$0xff]
      %v720 = vld [vmem:[%s674 + $0x10] sm:$0xff]
      %v721 = vld [vmem:[%s674 + $0x18] sm:$0xff]
      %s722 = smul.u32 %s35, 32
      %v723 = vlaneseq
      %v724 = vshrl.u32 %v723, 7
      %v725 = vadd.s32 %v724, 8
      %v726 = vadd.s32 %v724, 16
      %v727 = vadd.s32 %v724, 24
      %v728 = vstv %s722
      %v729 = vadd.s32 %v728, %v724
      %v730 = vadd.s32 %v728, %v725
      %v731 = vadd.s32 %v728, %v726
      %v732 = vadd.s32 %v728, %v727
      %vm733 = vcmp.lt.s32.totalorder %v729, 11
      %vm734 = vcmp.lt.s32.totalorder %v730, 11
      %vm735 = vcmp.lt.s32.totalorder %v731, 11
      %vm736 = vcmp.lt.s32.totalorder %v732, 11
      %v737 = vld [vmem:[%s684] sm:$0x1]
      %v738 = vld [vmem:[%s678] sm:$0x1]
      %v739 = vsel %vm733, 1, 0
      %v740 = vsel %vm734, 1, 0
      %v741 = vsel %vm735, 1, 0
      %v742 = vsel %vm736, 1, 0
      %vm743 = vcmp.eq.s32.totalorder %v739, 1
      %vm744 = vcmp.eq.s32.totalorder %v740, 1
      %vm745 = vcmp.eq.s32.totalorder %v741, 1
      %vm746 = vcmp.eq.s32.totalorder %v742, 1
      %v748 = vperm.slane %v737, 0
      %v751 = vperm.slane %v738, 0
      %v753 = vsel %vm743, %v748, %v751
      %v754 = vsel %vm744, %v748, %v751
      %v755 = vsel %vm745, %v748, %v751
      %v756 = vsel %vm746, %v748, %v751
      %v757 = vld [vmem:[%s687] sm:$0x1]
      %v758 = vld [vmem:[%s681] sm:$0x1]
      %v760 = vperm.slane %v757, 0
      %v763 = vperm.slane %v758, 0
      %v765 = vsel %vm743, %v760, %v763
      %v766 = vsel %vm744, %v760, %v763
      %v767 = vsel %vm745, %v760, %v763
      %v768 = vsel %vm746, %v760, %v763
      %769 = vadd.xlane.f32.xlu0 %v718
      %v770 = vpop.xlane.xlu0 %769
      %771 = vadd.xlane.f32.xlu0 %v719
      %v772 = vpop.xlane.xlu0 %771
      %773 = vadd.xlane.f32.xlu0 %v720
      %v774 = vpop.xlane.xlu0 %773
      %775 = vadd.xlane.f32.xlu0 %v721
      %v776 = vpop.xlane.xlu0 %775
      %v777 = vrcp.pop 128.0
      %v778 = vmul.f32 128.0, %v777
      %v779 = vsub.f32 1.0, %v778
      %v780 = vmul.f32 %v777, %v779
      %v781 = vadd.f32 %v777, %v780
      %vm782 = vweird.f32 %v777
      %v783 = vsel %vm782, %v777, %v781
      %v784 = vmul.f32 %v770, %v783
      %v785 = vmul.f32 %v772, %v783
      %v786 = vmul.f32 %v774, %v783
      %v787 = vmul.f32 %v776, %v783
      %v788 = vsub.f32 %v718, %v784
      %v789 = vsub.f32 %v719, %v785
      %v790 = vsub.f32 %v720, %v786
      %v791 = vsub.f32 %v721, %v787
      %v792 = vmul.f32 %v788, %v788
      %v793 = vmul.f32 %v789, %v789
      %v794 = vmul.f32 %v790, %v790
      %v795 = vmul.f32 %v791, %v791
      %796 = vadd.xlane.f32.xlu0 %v792
      %v797 = vpop.xlane.xlu0 %796
      %798 = vadd.xlane.f32.xlu0 %v793
      %v799 = vpop.xlane.xlu0 %798
      %800 = vadd.xlane.f32.xlu0 %v794
      %v801 = vpop.xlane.xlu0 %800
      %802 = vadd.xlane.f32.xlu0 %v795
      %v803 = vpop.xlane.xlu0 %802
      %v804 = vmul.f32 %v797, %v783
      %v805 = vmul.f32 %v799, %v783
      %v806 = vmul.f32 %v801, %v783
      %v807 = vmul.f32 %v803, %v783
      %v808 = vadd.f32 %v804, 1e-05
      %v809 = vadd.f32 %v805, 1e-05
      %v810 = vadd.f32 %v806, 1e-05
      %v811 = vadd.f32 %v807, 1e-05
      %v812 = vrsqrt.pop %v808
      %v813 = vmul.f32 %v812, %v808
      %v814 = vmul.f32 %v813, %v812
      %v815 = vmul.f32 0.5, %v814
      %v816 = vsub.f32 1.5, %v815
      %v817 = vmul.f32 %v812, %v816
      %vm818 = vweird.f32 %v808
      %vm819 = vweird.f32 %v812
      %vm820 = vmor %vm818, %vm819
      %v821 = vsel %vm820, %v812, %v817
      %v822 = vrsqrt.pop %v809
      %v823 = vmul.f32 %v822, %v809
      %v824 = vmul.f32 %v823, %v822
      %v825 = vmul.f32 0.5, %v824
      %v826 = vsub.f32 1.5, %v825
      %v827 = vmul.f32 %v822, %v826
      %vm828 = vweird.f32 %v809
      %vm829 = vweird.f32 %v822
      %vm830 = vmor %vm828, %vm829
      %v831 = vsel %vm830, %v822, %v827
      %v832 = vrsqrt.pop %v810
      %v833 = vmul.f32 %v832, %v810
      %v834 = vmul.f32 %v833, %v832
      %v835 = vmul.f32 0.5, %v834
      %v836 = vsub.f32 1.5, %v835
      %v837 = vmul.f32 %v832, %v836
      %vm838 = vweird.f32 %v810
      %vm839 = vweird.f32 %v832
      %vm840 = vmor %vm838, %vm839
      %v841 = vsel %vm840, %v832, %v837
      %v842 = vrsqrt.pop %v811
      %v843 = vmul.f32 %v842, %v811
      %v844 = vmul.f32 %v843, %v842
      %v845 = vmul.f32 0.5, %v844
      %v846 = vsub.f32 1.5, %v845
      %v847 = vmul.f32 %v842, %v846
      %vm848 = vweird.f32 %v811
      %vm849 = vweird.f32 %v842
      %vm850 = vmor %vm848, %vm849
      %v851 = vsel %vm850, %v842, %v847
      %v852 = vmul.f32 %v788, %v821
      %v853 = vmul.f32 %v789, %v831
      %v854 = vmul.f32 %v790, %v841
      %v855 = vmul.f32 %v791, %v851
      %v856 = vld [vmem:[%s5] sm:$0x1]
      %v858 = vperm.slane %v856, 0
      %v860 = vmul.f32 %v852, %v858
      %v861 = vmul.f32 %v853, %v858
      %v862 = vmul.f32 %v854, %v858
      %v863 = vmul.f32 %v855, %v858
      %v864 = vld [vmem:[%s6] sm:$0x1]
      %v866 = vperm.slane %v864, 0
      %v868 = vadd.f32 %v860, %v866
      %v869 = vadd.f32 %v861, %v866
      %v870 = vadd.f32 %v862, %v866
      %v871 = vadd.f32 %v863, %v866
      %v872 = vadd.f32 %v765, 1.0
      %v873 = vadd.f32 %v766, 1.0
      %v874 = vadd.f32 %v767, 1.0
      %v875 = vadd.f32 %v768, 1.0
      %v876 = vmul.f32 %v868, %v872
      %v877 = vmul.f32 %v869, %v873
      %v878 = vmul.f32 %v870, %v874
      %v879 = vmul.f32 %v871, %v875
      %v880 = vadd.f32 %v876, %v753
      %v881 = vadd.f32 %v877, %v754
      %v882 = vadd.f32 %v878, %v755
      %v883 = vadd.f32 %v879, %v756
      %v884 = vld [vmem:[%s7] sm:$0xff]
      %v885 = vld [vmem:[%s7 + $0x8] sm:$0xff]
      %v886 = vld [vmem:[%s7 + $0x10] sm:$0xff]
      %v887 = vld [vmem:[%s7 + $0x18] sm:$0xff]
      %v888 = vld [vmem:[%s7 + $0x20] sm:$0xff]
      %v889 = vld [vmem:[%s7 + $0x28] sm:$0xff]
      %v890 = vld [vmem:[%s7 + $0x30] sm:$0xff]
      %v891 = vld [vmem:[%s7 + $0x38] sm:$0xff]
      %v892 = vld [vmem:[%s7 + $0x40] sm:$0xff]
      %v893 = vld [vmem:[%s7 + $0x48] sm:$0xff]
      %v894 = vld [vmem:[%s7 + $0x50] sm:$0xff]
      %v895 = vld [vmem:[%s7 + $0x58] sm:$0xff]
      %v896 = vld [vmem:[%s7 + $0x60] sm:$0xff]
      %v897 = vld [vmem:[%s7 + $0x68] sm:$0xff]
      %v898 = vld [vmem:[%s7 + $0x70] sm:$0xff]
      %v899 = vld [vmem:[%s7 + $0x78] sm:$0xff]
      %900 = vmatpush.msra.mxu0 %v899
      %901 = vmatpush.msra.mxu0 %v898
      %902 = vmatpush.msra.mxu0 %v897
      %903 = vmatpush.msra.mxu0 %v896
      %904 = vmatpush.msra.mxu0 %v895
      %905 = vmatpush.msra.mxu0 %v894
      %906 = vmatpush.msra.mxu0 %v893
      %907 = vmatpush.msra.mxu0 %v892
      %908 = vmatpush.msra.mxu0 %v891
      %909 = vmatpush.msra.mxu0 %v890
      %910 = vmatpush.msra.mxu0 %v889
      %911 = vmatpush.msra.mxu0 %v888
      %912 = vmatpush.msra.mxu0 %v887
      %913 = vmatpush.msra.mxu0 %v886
      %914 = vmatpush.msra.mxu0 %v885
      %915 = vmatpush.msra.mxu0 %v884
      %916 = vmatmul.f32.gmra.mxu0 %v880
      %v917 = vpop.f32.mrf.mxu0
      %v918 = vadd.f32 0.0, %v917
      %919 = vmatmul.f32.gmra.mxu0 %v881
      %v920 = vpop.f32.mrf.mxu0
      %v921 = vadd.f32 0.0, %v920
      %922 = vmatmul.f32.gmra.mxu0 %v882
      %v923 = vpop.f32.mrf.mxu0
      %v924 = vadd.f32 0.0, %v923
      %925 = vmatmul.f32.gmra.mxu0 %v883
      %v926 = vpop.f32.mrf.mxu0
      %v927 = vadd.f32 0.0, %v926
      %928 = vdwg.mxu0
      %v929 = vld [vmem:[%s8] sm:$0xff]
      %v930 = vld [vmem:[%s8 + $0x8] sm:$0xff]
      %v931 = vld [vmem:[%s8 + $0x10] sm:$0xff]
      %v932 = vld [vmem:[%s8 + $0x18] sm:$0xff]
      %v933 = vld [vmem:[%s8 + $0x20] sm:$0xff]
      %v934 = vld [vmem:[%s8 + $0x28] sm:$0xff]
      %v935 = vld [vmem:[%s8 + $0x30] sm:$0xff]
      %v936 = vld [vmem:[%s8 + $0x38] sm:$0xff]
      %v937 = vld [vmem:[%s8 + $0x40] sm:$0xff]
      %v938 = vld [vmem:[%s8 + $0x48] sm:$0xff]
      %v939 = vld [vmem:[%s8 + $0x50] sm:$0xff]
      %v940 = vld [vmem:[%s8 + $0x58] sm:$0xff]
      %v941 = vld [vmem:[%s8 + $0x60] sm:$0xff]
      %v942 = vld [vmem:[%s8 + $0x68] sm:$0xff]
      %v943 = vld [vmem:[%s8 + $0x70] sm:$0xff]
      %v944 = vld [vmem:[%s8 + $0x78] sm:$0xff]
      %945 = vmatpush.msra.mxu0 %v944
      %946 = vmatpush.msra.mxu0 %v943
      %947 = vmatpush.msra.mxu0 %v942
      %948 = vmatpush.msra.mxu0 %v941
      %949 = vmatpush.msra.mxu0 %v940
      %950 = vmatpush.msra.mxu0 %v939
      %951 = vmatpush.msra.mxu0 %v938
      %952 = vmatpush.msra.mxu0 %v937
      %953 = vmatpush.msra.mxu0 %v936
      %954 = vmatpush.msra.mxu0 %v935
      %955 = vmatpush.msra.mxu0 %v934
      %956 = vmatpush.msra.mxu0 %v933
      %957 = vmatpush.msra.mxu0 %v932
      %958 = vmatpush.msra.mxu0 %v931
      %959 = vmatpush.msra.mxu0 %v930
      %960 = vmatpush.msra.mxu0 %v929
      %961 = vmatmul.f32.gmra.mxu0 %v880
      %v962 = vpop.f32.mrf.mxu0
      %v963 = vadd.f32 0.0, %v962
      %964 = vmatmul.f32.gmra.mxu0 %v881
      %v965 = vpop.f32.mrf.mxu0
      %v966 = vadd.f32 0.0, %v965
      %967 = vmatmul.f32.gmra.mxu0 %v882
      %v968 = vpop.f32.mrf.mxu0
      %v969 = vadd.f32 0.0, %v968
      %970 = vmatmul.f32.gmra.mxu0 %v883
      %v971 = vpop.f32.mrf.mxu0
      %v972 = vadd.f32 0.0, %v971
      %973 = vdwg.mxu0
      %v974 = vld [vmem:[%s9] sm:$0xff]
      %v975 = vld [vmem:[%s9 + $0x8] sm:$0xff]
      %v976 = vld [vmem:[%s9 + $0x10] sm:$0xff]
      %v977 = vld [vmem:[%s9 + $0x18] sm:$0xff]
      %v978 = vld [vmem:[%s9 + $0x20] sm:$0xff]
      %v979 = vld [vmem:[%s9 + $0x28] sm:$0xff]
      %v980 = vld [vmem:[%s9 + $0x30] sm:$0xff]
      %v981 = vld [vmem:[%s9 + $0x38] sm:$0xff]
      %v982 = vld [vmem:[%s9 + $0x40] sm:$0xff]
      %v983 = vld [vmem:[%s9 + $0x48] sm:$0xff]
      %v984 = vld [vmem:[%s9 + $0x50] sm:$0xff]
      %v985 = vld [vmem:[%s9 + $0x58] sm:$0xff]
      %v986 = vld [vmem:[%s9 + $0x60] sm:$0xff]
      %v987 = vld [vmem:[%s9 + $0x68] sm:$0xff]
      %v988 = vld [vmem:[%s9 + $0x70] sm:$0xff]
      %v989 = vld [vmem:[%s9 + $0x78] sm:$0xff]
      %990 = vmatpush.msra.mxu0 %v989
      %991 = vmatpush.msra.mxu0 %v988
      %992 = vmatpush.msra.mxu0 %v987
      %993 = vmatpush.msra.mxu0 %v986
      %994 = vmatpush.msra.mxu0 %v985
      %995 = vmatpush.msra.mxu0 %v984
      %996 = vmatpush.msra.mxu0 %v983
      %997 = vmatpush.msra.mxu0 %v982
      %998 = vmatpush.msra.mxu0 %v981
      %999 = vmatpush.msra.mxu0 %v980
      %1000 = vmatpush.msra.mxu0 %v979
      %1001 = vmatpush.msra.mxu0 %v978
      %1002 = vmatpush.msra.mxu0 %v977
      %1003 = vmatpush.msra.mxu0 %v976
      %1004 = vmatpush.msra.mxu0 %v975
      %1005 = vmatpush.msra.mxu0 %v974
      %1006 = vmatmul.f32.gmra.mxu0 %v880
      %v1007 = vpop.f32.mrf.mxu0
      %v1008 = vadd.f32 0.0, %v1007
      %1009 = vmatmul.f32.gmra.mxu0 %v881
      %v1010 = vpop.f32.mrf.mxu0
      %v1011 = vadd.f32 0.0, %v1010
      %1012 = vmatmul.f32.gmra.mxu0 %v882
      %v1013 = vpop.f32.mrf.mxu0
      %v1014 = vadd.f32 0.0, %v1013
      %1015 = vmatmul.f32.gmra.mxu0 %v883
      %v1016 = vpop.f32.mrf.mxu0
      %v1017 = vadd.f32 0.0, %v1016
      %1018 = vdwg.mxu0
      %v1019 = vld [vmem:[%s10] sm:$0xff]
      %v1020 = vld [vmem:[%s10 + $0x8] sm:$0xff]
      %v1021 = vld [vmem:[%s10 + $0x10] sm:$0xff]
      %v1022 = vld [vmem:[%s10 + $0x18] sm:$0xff]
      %v1023 = vld [vmem:[%s10 + $0x20] sm:$0xff]
      %v1024 = vld [vmem:[%s10 + $0x28] sm:$0xff]
      %v1025 = vld [vmem:[%s10 + $0x30] sm:$0xff]
      %v1026 = vld [vmem:[%s10 + $0x38] sm:$0xff]
      %v1027 = vld [vmem:[%s10 + $0x40] sm:$0xff]
      %v1028 = vld [vmem:[%s10 + $0x48] sm:$0xff]
      %v1029 = vld [vmem:[%s10 + $0x50] sm:$0xff]
      %v1030 = vld [vmem:[%s10 + $0x58] sm:$0xff]
      %v1031 = vld [vmem:[%s10 + $0x60] sm:$0xff]
      %v1032 = vld [vmem:[%s10 + $0x68] sm:$0xff]
      %v1033 = vld [vmem:[%s10 + $0x70] sm:$0xff]
      %v1034 = vld [vmem:[%s10 + $0x78] sm:$0xff]
      %v1035 = vld [vmem:[%s11] sm:$0xf]
      %v1036 = vld [vmem:[%s12] sm:$0x1]
      %v1037 = vld [vmem:[%s13] sm:$0x1]
      %1038 = vmatpush.msra.mxu0 %v1034
      %1039 = vmatpush.msra.mxu0 %v1033
      %1040 = vmatpush.msra.mxu0 %v1032
      %1041 = vmatpush.msra.mxu0 %v1031
      %1042 = vmatpush.msra.mxu0 %v1030
      %1043 = vmatpush.msra.mxu0 %v1029
      %1044 = vmatpush.msra.mxu0 %v1028
      %1045 = vmatpush.msra.mxu0 %v1027
      %1046 = vmatpush.msra.mxu0 %v1026
      %1047 = vmatpush.msra.mxu0 %v1025
      %1048 = vmatpush.msra.mxu0 %v1024
      %1049 = vmatpush.msra.mxu0 %v1023
      %1050 = vmatpush.msra.mxu0 %v1022
      %1051 = vmatpush.msra.mxu0 %v1021
      %1052 = vmatpush.msra.mxu0 %v1020
      %1053 = vmatpush.msra.mxu0 %v1019
      %1054 = vmatmul.f32.gmra.mxu0 %v918
      %v1055 = vpop.f32.mrf.mxu0
      %v1056 = vadd.f32 0.0, %v1055
      %1057 = vmatmul.f32.gmra.mxu0 %v921
      %v1058 = vpop.f32.mrf.mxu0
      %v1059 = vadd.f32 0.0, %v1058
      %1060 = vmatmul.f32.gmra.mxu0 %v924
      %v1061 = vpop.f32.mrf.mxu0
      %v1062 = vadd.f32 0.0, %v1061
      %1063 = vmatmul.f32.gmra.mxu0 %v927
      %v1064 = vpop.f32.mrf.mxu0
      %v1065 = vadd.f32 0.0, %v1064
      %1066 = vdwg.mxu0
      %v1067 = vmul.f32 %v1056, 0.03125
      %v1068 = vmul.f32 %v1059, 0.03125
      %v1069 = vmul.f32 %v1062, 0.03125
      %v1070 = vmul.f32 %v1065, 0.03125
      %vm1071 = vcmask 31744
      %v1073 = vsel %vm1071, %v1067, 0
      %v1076 = vsel %vm1071, %v1068, 0
      %v1079 = vsel %vm1071, %v1069, 0
      %v1082 = vsel %vm1071, %v1070, 0
      %vm1084 = vcmask 1043456
      %v1086 = vsel %vm1084, %v1035, 0
      %1088 = vmatpush.msra.mxu0 0.0
      %1089 = vmatpush.msra.mxu0 0.0
      %1090 = vmatpush.msra.mxu0 0.0
      %1091 = vmatpush.msra.mxu0 0.0
      %1092 = vmatpush.msra.mxu0 0.0
      %1093 = vmatpush.msra.mxu0 0.0
      %1094 = vmatpush.msra.mxu0 0.0
      %1095 = vmatpush.msra.mxu0 0.0
      %1096 = vmatpush.msra.mxu0 0.0
      %1097 = vmatpush.msra.mxu0 0.0
      %1098 = vmatpush.msra.mxu0 0.0
      %1099 = vmatpush.msra.mxu0 0.0
      %1100 = vmatpush.msra.mxu0 0.0
      %1101 = vmatpush.msra.mxu0 0.0
      %1102 = vmatpush.msra.mxu0 0.0
      %1103 = vmatpush.msra.mxu0 %v1086
      %1104 = vmatmul.f32.gmra.mxu0 %v1073
      %v1105 = vpop.f32.mrf.mxu0
      %v1106 = vadd.f32 0.0, %v1105
      %1107 = vmatmul.f32.gmra.mxu0 %v1076
      %v1108 = vpop.f32.mrf.mxu0
      %v1109 = vadd.f32 0.0, %v1108
      %1110 = vmatmul.f32.gmra.mxu0 %v1079
      %v1111 = vpop.f32.mrf.mxu0
      %v1112 = vadd.f32 0.0, %v1111
      %1113 = vmatmul.f32.gmra.mxu0 %v1082
      %v1114 = vpop.f32.mrf.mxu0
      %v1115 = vadd.f32 0.0, %v1114
      %1116 = vdwg.mxu0
      %v1117 = vsub.f32 %v918, %v1106
      %v1118 = vsub.f32 %v921, %v1109
      %v1119 = vsub.f32 %v924, %v1112
      %v1120 = vsub.f32 %v927, %v1115
      %v1121 = vmul.f32 %v1117, %v1117
      %v1122 = vmul.f32 %v1118, %v1118
      %v1123 = vmul.f32 %v1119, %v1119
      %v1124 = vmul.f32 %v1120, %v1120
      %1125 = vmatpush.msra.mxu0 %v1034
      %1126 = vmatpush.msra.mxu0 %v1033
      %1127 = vmatpush.msra.mxu0 %v1032
      %1128 = vmatpush.msra.mxu0 %v1031
      %1129 = vmatpush.msra.mxu0 %v1030
      %1130 = vmatpush.msra.mxu0 %v1029
      %1131 = vmatpush.msra.mxu0 %v1028
      %1132 = vmatpush.msra.mxu0 %v1027
      %1133 = vmatpush.msra.mxu0 %v1026
      %1134 = vmatpush.msra.mxu0 %v1025
      %1135 = vmatpush.msra.mxu0 %v1024
      %1136 = vmatpush.msra.mxu0 %v1023
      %1137 = vmatpush.msra.mxu0 %v1022
      %1138 = vmatpush.msra.mxu0 %v1021
      %1139 = vmatpush.msra.mxu0 %v1020
      %1140 = vmatpush.msra.mxu0 %v1019
      %1141 = vmatmul.f32.gmra.mxu0 %v1121
      %v1142 = vpop.f32.mrf.mxu0
      %v1143 = vadd.f32 0.0, %v1142
      %1144 = vmatmul.f32.gmra.mxu0 %v1122
      %v1145 = vpop.f32.mrf.mxu0
      %v1146 = vadd.f32 0.0, %v1145
      %1147 = vmatmul.f32.gmra.mxu0 %v1123
      %v1148 = vpop.f32.mrf.mxu0
      %v1149 = vadd.f32 0.0, %v1148
      %1150 = vmatmul.f32.gmra.mxu0 %v1124
      %v1151 = vpop.f32.mrf.mxu0
      %v1152 = vadd.f32 0.0, %v1151
      %1153 = vdwg.mxu0
      %v1154 = vmul.f32 %v1143, 0.03125
      %v1155 = vmul.f32 %v1146, 0.03125
      %v1156 = vmul.f32 %v1149, 0.03125
      %v1157 = vmul.f32 %v1152, 0.03125
      %v1159 = vsel %vm1071, %v1154, 0
      %v1162 = vsel %vm1071, %v1155, 0
      %v1165 = vsel %vm1071, %v1156, 0
      %v1168 = vsel %vm1071, %v1157, 0
      %1170 = vmatpush.msra.mxu0 0.0
      %1171 = vmatpush.msra.mxu0 0.0
      %1172 = vmatpush.msra.mxu0 0.0
      %1173 = vmatpush.msra.mxu0 0.0
      %1174 = vmatpush.msra.mxu0 0.0
      %1175 = vmatpush.msra.mxu0 0.0
      %1176 = vmatpush.msra.mxu0 0.0
      %1177 = vmatpush.msra.mxu0 0.0
      %1178 = vmatpush.msra.mxu0 0.0
      %1179 = vmatpush.msra.mxu0 0.0
      %1180 = vmatpush.msra.mxu0 0.0
      %1181 = vmatpush.msra.mxu0 0.0
      %1182 = vmatpush.msra.mxu0 0.0
      %1183 = vmatpush.msra.mxu0 0.0
      %1184 = vmatpush.msra.mxu0 0.0
      %1185 = vmatpush.msra.mxu0 %v1086
      %1186 = vmatmul.f32.gmra.mxu0 %v1159
      %v1187 = vpop.f32.mrf.mxu0
      %v1188 = vadd.f32 1e-06, %v1187
      %1189 = vmatmul.f32.gmra.mxu0 %v1162
      %v1190 = vpop.f32.mrf.mxu0
      %v1191 = vadd.f32 1e-06, %v1190
      %1192 = vmatmul.f32.gmra.mxu0 %v1165
      %v1193 = vpop.f32.mrf.mxu0
      %v1194 = vadd.f32 1e-06, %v1193
      %1195 = vmatmul.f32.gmra.mxu0 %v1168
      %v1196 = vpop.f32.mrf.mxu0
      %v1197 = vadd.f32 1e-06, %v1196
      %1198 = vdwg.mxu0
      %v1199 = vrsqrt.pop %v1188
      %v1200 = vmul.f32 %v1199, %v1188
      %v1201 = vmul.f32 %v1200, %v1199
      %v1202 = vmul.f32 0.5, %v1201
      %v1203 = vsub.f32 1.5, %v1202
      %v1204 = vmul.f32 %v1199, %v1203
      %vm1205 = vweird.f32 %v1188
      %vm1206 = vweird.f32 %v1199
      %vm1207 = vmor %vm1205, %vm1206
      %v1208 = vsel %vm1207, %v1199, %v1204
      %v1209 = vrsqrt.pop %v1191
      %v1210 = vmul.f32 %v1209, %v1191
      %v1211 = vmul.f32 %v1210, %v1209
      %v1212 = vmul.f32 0.5, %v1211
      %v1213 = vsub.f32 1.5, %v1212
      %v1214 = vmul.f32 %v1209, %v1213
      %vm1215 = vweird.f32 %v1191
      %vm1216 = vweird.f32 %v1209
      %vm1217 = vmor %vm1215, %vm1216
      %v1218 = vsel %vm1217, %v1209, %v1214
      %v1219 = vrsqrt.pop %v1194
      %v1220 = vmul.f32 %v1219, %v1194
      %v1221 = vmul.f32 %v1220, %v1219
      %v1222 = vmul.f32 0.5, %v1221
      %v1223 = vsub.f32 1.5, %v1222
      %v1224 = vmul.f32 %v1219, %v1223
      %vm1225 = vweird.f32 %v1194
      %vm1226 = vweird.f32 %v1219
      %vm1227 = vmor %vm1225, %vm1226
      %v1228 = vsel %vm1227, %v1219, %v1224
      %v1229 = vrsqrt.pop %v1197
      %v1230 = vmul.f32 %v1229, %v1197
      %v1231 = vmul.f32 %v1230, %v1229
      %v1232 = vmul.f32 0.5, %v1231
      %v1233 = vsub.f32 1.5, %v1232
      %v1234 = vmul.f32 %v1229, %v1233
      %vm1235 = vweird.f32 %v1197
      %vm1236 = vweird.f32 %v1229
      %vm1237 = vmor %vm1235, %vm1236
      %v1238 = vsel %vm1237, %v1229, %v1234
      %v1239 = vmul.f32 %v1117, %v1208
      %v1240 = vmul.f32 %v1118, %v1218
      %v1241 = vmul.f32 %v1119, %v1228
      %v1242 = vmul.f32 %v1120, %v1238
      %v1244 = vperm.slane %v1036, 0
      %v1246 = vmul.f32 %v1239, %v1244
      %v1247 = vmul.f32 %v1240, %v1244
      %v1248 = vmul.f32 %v1241, %v1244
      %v1249 = vmul.f32 %v1242, %v1244
      %v1251 = vperm.slane %v1037, 0
      %v1253 = vadd.f32 %v1246, %v1251
      %v1254 = vadd.f32 %v1247, %v1251
      %v1255 = vadd.f32 %v1248, %v1251
      %v1256 = vadd.f32 %v1249, %v1251
      %1257 = vst [vmem:[%s696] sm:$0xff] %v1253
      %1258 = vst [vmem:[%s696 + $0x8] sm:$0xff] %v1254
      %1259 = vst [vmem:[%s696 + $0x10] sm:$0xff] %v1255
      %1260 = vst [vmem:[%s696 + $0x18] sm:$0xff] %v1256
      %v1261 = vld [vmem:[%s14] sm:$0x1]
      %v1262 = vld [vmem:[%s15] sm:$0x1]
      %1263 = vmatpush.msra.mxu0 %v1034
      %1264 = vmatpush.msra.mxu0 %v1033
      %1265 = vmatpush.msra.mxu0 %v1032
      %1266 = vmatpush.msra.mxu0 %v1031
      %1267 = vmatpush.msra.mxu0 %v1030
      %1268 = vmatpush.msra.mxu0 %v1029
      %1269 = vmatpush.msra.mxu0 %v1028
      %1270 = vmatpush.msra.mxu0 %v1027
      %1271 = vmatpush.msra.mxu0 %v1026
      %1272 = vmatpush.msra.mxu0 %v1025
      %1273 = vmatpush.msra.mxu0 %v1024
      %1274 = vmatpush.msra.mxu0 %v1023
      %1275 = vmatpush.msra.mxu0 %v1022
      %1276 = vmatpush.msra.mxu0 %v1021
      %1277 = vmatpush.msra.mxu0 %v1020
      %1278 = vmatpush.msra.mxu0 %v1019
      %1279 = vmatmul.f32.gmra.mxu0 %v963
      %v1280 = vpop.f32.mrf.mxu0
      %v1281 = vadd.f32 0.0, %v1280
      %1282 = vmatmul.f32.gmra.mxu0 %v966
      %v1283 = vpop.f32.mrf.mxu0
      %v1284 = vadd.f32 0.0, %v1283
      %1285 = vmatmul.f32.gmra.mxu0 %v969
      %v1286 = vpop.f32.mrf.mxu0
      %v1287 = vadd.f32 0.0, %v1286
      %1288 = vmatmul.f32.gmra.mxu0 %v972
      %v1289 = vpop.f32.mrf.mxu0
      %v1290 = vadd.f32 0.0, %v1289
      %1291 = vdwg.mxu0
      %v1292 = vmul.f32 %v1281, 0.03125
      %v1293 = vmul.f32 %v1284, 0.03125
      %v1294 = vmul.f32 %v1287, 0.03125
      %v1295 = vmul.f32 %v1290, 0.03125
      %v1297 = vsel %vm1071, %v1292, 0
      %v1300 = vsel %vm1071, %v1293, 0
      %v1303 = vsel %vm1071, %v1294, 0
      %v1306 = vsel %vm1071, %v1295, 0
      %1308 = vmatpush.msra.mxu0 0.0
      %1309 = vmatpush.msra.mxu0 0.0
      %1310 = vmatpush.msra.mxu0 0.0
      %1311 = vmatpush.msra.mxu0 0.0
      %1312 = vmatpush.msra.mxu0 0.0
      %1313 = vmatpush.msra.mxu0 0.0
      %1314 = vmatpush.msra.mxu0 0.0
      %1315 = vmatpush.msra.mxu0 0.0
      %1316 = vmatpush.msra.mxu0 0.0
      %1317 = vmatpush.msra.mxu0 0.0
      %1318 = vmatpush.msra.mxu0 0.0
      %1319 = vmatpush.msra.mxu0 0.0
      %1320 = vmatpush.msra.mxu0 0.0
      %1321 = vmatpush.msra.mxu0 0.0
      %1322 = vmatpush.msra.mxu0 0.0
      %1323 = vmatpush.msra.mxu0 %v1086
      %1324 = vmatmul.f32.gmra.mxu0 %v1297
      %v1325 = vpop.f32.mrf.mxu0
      %v1326 = vadd.f32 0.0, %v1325
      %1327 = vmatmul.f32.gmra.mxu0 %v1300
      %v1328 = vpop.f32.mrf.mxu0
      %v1329 = vadd.f32 0.0, %v1328
      %1330 = vmatmul.f32.gmra.mxu0 %v1303
      %v1331 = vpop.f32.mrf.mxu0
      %v1332 = vadd.f32 0.0, %v1331
      %1333 = vmatmul.f32.gmra.mxu0 %v1306
      %v1334 = vpop.f32.mrf.mxu0
      %v1335 = vadd.f32 0.0, %v1334
      %1336 = vdwg.mxu0
      %v1337 = vsub.f32 %v963, %v1326
      %v1338 = vsub.f32 %v966, %v1329
      %v1339 = vsub.f32 %v969, %v1332
      %v1340 = vsub.f32 %v972, %v1335
      %v1341 = vmul.f32 %v1337, %v1337
      %v1342 = vmul.f32 %v1338, %v1338
      %v1343 = vmul.f32 %v1339, %v1339
      %v1344 = vmul.f32 %v1340, %v1340
      %1345 = vmatpush.msra.mxu0 %v1034
      %1346 = vmatpush.msra.mxu0 %v1033
      %1347 = vmatpush.msra.mxu0 %v1032
      %1348 = vmatpush.msra.mxu0 %v1031
      %1349 = vmatpush.msra.mxu0 %v1030
      %1350 = vmatpush.msra.mxu0 %v1029
      %1351 = vmatpush.msra.mxu0 %v1028
      %1352 = vmatpush.msra.mxu0 %v1027
      %1353 = vmatpush.msra.mxu0 %v1026
      %1354 = vmatpush.msra.mxu0 %v1025
      %1355 = vmatpush.msra.mxu0 %v1024
      %1356 = vmatpush.msra.mxu0 %v1023
      %1357 = vmatpush.msra.mxu0 %v1022
      %1358 = vmatpush.msra.mxu0 %v1021
      %1359 = vmatpush.msra.mxu0 %v1020
      %1360 = vmatpush.msra.mxu0 %v1019
      %1361 = vmatmul.f32.gmra.mxu0 %v1341
      %v1362 = vpop.f32.mrf.mxu0
      %v1363 = vadd.f32 0.0, %v1362
      %1364 = vmatmul.f32.gmra.mxu0 %v1342
      %v1365 = vpop.f32.mrf.mxu0
      %v1366 = vadd.f32 0.0, %v1365
      %1367 = vmatmul.f32.gmra.mxu0 %v1343
      %v1368 = vpop.f32.mrf.mxu0
      %v1369 = vadd.f32 0.0, %v1368
      %1370 = vmatmul.f32.gmra.mxu0 %v1344
      %v1371 = vpop.f32.mrf.mxu0
      %v1372 = vadd.f32 0.0, %v1371
      %1373 = vdwg.mxu0
      %v1374 = vmul.f32 %v1363, 0.03125
      %v1375 = vmul.f32 %v1366, 0.03125
      %v1376 = vmul.f32 %v1369, 0.03125
      %v1377 = vmul.f32 %v1372, 0.03125
      %v1379 = vsel %vm1071, %v1374, 0
      %v1382 = vsel %vm1071, %v1375, 0
      %v1385 = vsel %vm1071, %v1376, 0
      %v1388 = vsel %vm1071, %v1377, 0
      %1390 = vmatpush.msra.mxu0 0.0
      %1391 = vmatpush.msra.mxu0 0.0
      %1392 = vmatpush.msra.mxu0 0.0
      %1393 = vmatpush.msra.mxu0 0.0
      %1394 = vmatpush.msra.mxu0 0.0
      %1395 = vmatpush.msra.mxu0 0.0
      %1396 = vmatpush.msra.mxu0 0.0
      %1397 = vmatpush.msra.mxu0 0.0
      %1398 = vmatpush.msra.mxu0 0.0
      %1399 = vmatpush.msra.mxu0 0.0
      %1400 = vmatpush.msra.mxu0 0.0
      %1401 = vmatpush.msra.mxu0 0.0
      %1402 = vmatpush.msra.mxu0 0.0
      %1403 = vmatpush.msra.mxu0 0.0
      %1404 = vmatpush.msra.mxu0 0.0
      %1405 = vmatpush.msra.mxu0 %v1086
      %1406 = vmatmul.f32.gmra.mxu0 %v1379
      %v1407 = vpop.f32.mrf.mxu0
      %v1408 = vadd.f32 1e-06, %v1407
      %1409 = vmatmul.f32.gmra.mxu0 %v1382
      %v1410 = vpop.f32.mrf.mxu0
      %v1411 = vadd.f32 1e-06, %v1410
      %1412 = vmatmul.f32.gmra.mxu0 %v1385
      %v1413 = vpop.f32.mrf.mxu0
      %v1414 = vadd.f32 1e-06, %v1413
      %1415 = vmatmul.f32.gmra.mxu0 %v1388
      %v1416 = vpop.f32.mrf.mxu0
      %v1417 = vadd.f32 1e-06, %v1416
      %1418 = vdwg.mxu0
      %v1419 = vrsqrt.pop %v1408
      %v1420 = vmul.f32 %v1419, %v1408
      %v1421 = vmul.f32 %v1420, %v1419
      %v1422 = vmul.f32 0.5, %v1421
      %v1423 = vsub.f32 1.5, %v1422
      %v1424 = vmul.f32 %v1419, %v1423
      %vm1425 = vweird.f32 %v1408
      %vm1426 = vweird.f32 %v1419
      %vm1427 = vmor %vm1425, %vm1426
      %v1428 = vsel %vm1427, %v1419, %v1424
      %v1429 = vrsqrt.pop %v1411
      %v1430 = vmul.f32 %v1429, %v1411
      %v1431 = vmul.f32 %v1430, %v1429
      %v1432 = vmul.f32 0.5, %v1431
      %v1433 = vsub.f32 1.5, %v1432
      %v1434 = vmul.f32 %v1429, %v1433
      %vm1435 = vweird.f32 %v1411
      %vm1436 = vweird.f32 %v1429
      %vm1437 = vmor %vm1435, %vm1436
      %v1438 = vsel %vm1437, %v1429, %v1434
      %v1439 = vrsqrt.pop %v1414
      %v1440 = vmul.f32 %v1439, %v1414
      %v1441 = vmul.f32 %v1440, %v1439
      %v1442 = vmul.f32 0.5, %v1441
      %v1443 = vsub.f32 1.5, %v1442
      %v1444 = vmul.f32 %v1439, %v1443
      %vm1445 = vweird.f32 %v1414
      %vm1446 = vweird.f32 %v1439
      %vm1447 = vmor %vm1445, %vm1446
      %v1448 = vsel %vm1447, %v1439, %v1444
      %v1449 = vrsqrt.pop %v1417
      %v1450 = vmul.f32 %v1449, %v1417
      %v1451 = vmul.f32 %v1450, %v1449
      %v1452 = vmul.f32 0.5, %v1451
      %v1453 = vsub.f32 1.5, %v1452
      %v1454 = vmul.f32 %v1449, %v1453
      %vm1455 = vweird.f32 %v1417
      %vm1456 = vweird.f32 %v1449
      %vm1457 = vmor %vm1455, %vm1456
      %v1458 = vsel %vm1457, %v1449, %v1454
      %v1459 = vmul.f32 %v1337, %v1428
      %v1460 = vmul.f32 %v1338, %v1438
      %v1461 = vmul.f32 %v1339, %v1448
      %v1462 = vmul.f32 %v1340, %v1458
      %v1464 = vperm.slane %v1261, 0
      %v1466 = vmul.f32 %v1459, %v1464
      %v1467 = vmul.f32 %v1460, %v1464
      %v1468 = vmul.f32 %v1461, %v1464
      %v1469 = vmul.f32 %v1462, %v1464
      %v1471 = vperm.slane %v1262, 0
      %v1473 = vadd.f32 %v1466, %v1471
      %v1474 = vadd.f32 %v1467, %v1471
      %v1475 = vadd.f32 %v1468, %v1471
      %v1476 = vadd.f32 %v1469, %v1471
      %1477 = vst [vmem:[%s706] sm:$0xff] %v1473
      %1478 = vst [vmem:[%s706 + $0x8] sm:$0xff] %v1474
      %1479 = vst [vmem:[%s706 + $0x10] sm:$0xff] %v1475
      %1480 = vst [vmem:[%s706 + $0x18] sm:$0xff] %v1476
      %1481 = vst [vmem:[%s716] sm:$0xff] %v1008
      %1482 = vst [vmem:[%s716 + $0x8] sm:$0xff] %v1011
      %1483 = vst [vmem:[%s716 + $0x10] sm:$0xff] %v1014
      %1484 = vst [vmem:[%s716 + $0x18] sm:$0xff] %v1017
      %s1485 = smul.u32 4, %s35
      %p1486 = scmp.lt.s32.totalorder %s34, 1
      %s1487 = scalar_select %p1486, %s34, 1
      %p1488 = scmp.lt.s32.totalorder %s1485, 7
      %s1489 = scalar_select %p1488, %s1485, 7
      %s1490 = smul.addr %s1487, 8
      %s1491 = sadd.s32 %s1489, %s1490
      %s1492 = smul.addr %s1491, 8
      %s1493 = scalar_lea.vmem %s16, %s1492
      %s1494 = smul.u32 4, %s35
      %p1495 = scmp.lt.s32.totalorder %s34, 1
      %s1496 = scalar_select %p1495, %s34, 1
      %p1497 = scmp.lt.s32.totalorder %s1494, 7
      %s1498 = scalar_select %p1497, %s1494, 7
      %s1499 = smul.addr %s1496, 8
      %s1500 = sadd.s32 %s1498, %s1499
      %s1501 = smul.addr %s1500, 8
      %s1502 = scalar_lea.vmem %s17, %s1501
      %s1503 = smul.u32 4, %s35
      %p1504 = scmp.lt.s32.totalorder %s34, 1
      %s1505 = scalar_select %p1504, %s34, 1
      %p1506 = scmp.lt.s32.totalorder %s1503, 7
      %s1507 = scalar_select %p1506, %s1503, 7
      %s1508 = smul.addr %s1505, 8
      %s1509 = sadd.s32 %s1507, %s1508
      %s1510 = smul.addr %s1509, 8
      %s1511 = scalar_lea.vmem %s18, %s1510
      // Predicated region
      $region85: #{cog_tau_block.3} parent=83 // pred_check
        %p1512 = pneg %p425
      $region86: #{cog_tau_block.3} parent=83 // pred_check_branch
        %1514 = sbr.rel (%p1512) target = $region88
      $region87: #{cog_tau_block.3} parent=83 // pred_region
        %s1515 = smul.u32 4, %s35
      $region88: #{cog_tau_block.3} parent=83 // pred_fallthru
        _
      // Predicated region
      $region89: #{cog_tau_block.3} parent=83 // pred_check
        %p1516 = pneg %p453
      $region90: #{cog_tau_block.3} parent=83 // pred_check_branch
        %1518 = sbr.rel (%p1516) target = $region92
      $region91: #{cog_tau_block.3} parent=83 // pred_region
        %s1519 = smul.u32 4, %s35
      $region92: #{cog_tau_block.3} parent=83 // pred_fallthru
        _
      // Predicated region
      $region93: #{cog_tau_block.3} parent=83 // pred_check
        %p1520 = pneg %p481
      $region94: #{cog_tau_block.3} parent=83 // pred_check_branch
        %1522 = sbr.rel (%p1520) target = $region96
      $region95: #{cog_tau_block.3} parent=83 // pred_region
        %s1523 = smul.u32 4, %s35
      $region96: #{cog_tau_block.3} parent=83 // pred_fallthru
        _
    $region84: #{cog_tau_block.3} parent=5 // pred_fallthru
      _
    %p1524 = scmp.le.s32.totalorder 2, %s25
    // Predicated region
    $region97: #{cog_tau_block.3} parent=5 // pred_check
      %p1525 = pneg %p1524
    $region98: #{cog_tau_block.3} parent=5 // pred_check_branch
      %1527 = sbr.rel (%p1525) target = $region100
    $region99: #{cog_tau_block.3} parent=5 // pred_region
      %s1528 = ssub.s32 %s25, 2
      // Predicated region
      $region101: #{cog_tau_block.3} parent=99 // pred_check
        %p1529 = pneg %p431
      $region102: #{cog_tau_block.3} parent=99 // pred_check_branch
        %1531 = sbr.rel (%p1529) target = $region104
      $region103: #{cog_tau_block.3} parent=99 // pred_region
        %s1532 = smul.u32 4, %s37
        %p1533 = scmp.lt.s32.totalorder %s36, 1
        %s1534 = scalar_select %p1533, %s36, 1
        %p1535 = scmp.lt.s32.totalorder %s1532, 7
        %s1536 = scalar_select %p1535, %s1532, 7
        %s1537 = smul.addr %s1534, 8
        %s1538 = sadd.s32 %s1536, %s1537
        %s1539 = smul.addr %s1538, 8
        %s1540 = scalar_lea.vmem %s16, %s1539
      $region104: #{cog_tau_block.3} parent=99 // pred_fallthru
        _
      // Predicated region
      $region105: #{cog_tau_block.3} parent=99 // pred_check
        %p1541 = pneg %p459
      $region106: #{cog_tau_block.3} parent=99 // pred_check_branch
        %1543 = sbr.rel (%p1541) target = $region108
      $region107: #{cog_tau_block.3} parent=99 // pred_region
        %s1544 = smul.u32 4, %s37
        %p1545 = scmp.lt.s32.totalorder %s36, 1
        %s1546 = scalar_select %p1545, %s36, 1
        %p1547 = scmp.lt.s32.totalorder %s1544, 7
        %s1548 = scalar_select %p1547, %s1544, 7
        %s1549 = smul.addr %s1546, 8
        %s1550 = sadd.s32 %s1548, %s1549
        %s1551 = smul.addr %s1550, 8
        %s1552 = scalar_lea.vmem %s17, %s1551
      $region108: #{cog_tau_block.3} parent=99 // pred_fallthru
        _
      // Predicated region
      $region109: #{cog_tau_block.3} parent=99 // pred_check
        %p1553 = pneg %p487
      $region110: #{cog_tau_block.3} parent=99 // pred_check_branch
        %1555 = sbr.rel (%p1553) target = $region112
      $region111: #{cog_tau_block.3} parent=99 // pred_region
        %s1556 = smul.u32 4, %s37
        %p1557 = scmp.lt.s32.totalorder %s36, 1
        %s1558 = scalar_select %p1557, %s36, 1
        %p1559 = scmp.lt.s32.totalorder %s1556, 7
        %s1560 = scalar_select %p1559, %s1556, 7
        %s1561 = smul.addr %s1558, 8
        %s1562 = sadd.s32 %s1560, %s1561
        %s1563 = smul.addr %s1562, 8
        %s1564 = scalar_lea.vmem %s18, %s1563
      $region112: #{cog_tau_block.3} parent=99 // pred_fallthru
        _
    $region100: #{cog_tau_block.3} parent=5 // pred_fallthru
      _
  $region6: #{cog_tau_block.3} parent=0 // loop_footer
    %s29 = sadd.s32 1, %s25
  $region7: #{cog_tau_block.3} parent=0 // loop_footer_branch
    %24 = sbr.rel target = $region3
  $region8: #{cog_tau_block.3} parent=0 // loop_exit
    _

// kernel: cog_tau_block.5
$region0: #{cog_tau_block.5}
  #allocation0 [shape = 'u32[]', space=smem, size = 0x4, offset = 0x4, fixed_abs, tag = 'smem constant byte address 0x4 - core index']
  #allocation1 [shape = 'u32[72,128]{1,0:T(1,128)}', space=vmem, size = 0x9000, scoped, tag = 'internal scratch']
  #allocation2 [shape = 'f32[32,128]{1,0:T(8,128)}', space=vmem, size = 0x4000, scoped, tag = 'scratch operand']
  #allocation3 [shape = 'f32[32,128]{1,0:T(8,128)}', space=vmem, size = 0x4000, scoped, tag = 'scratch operand']
  #allocation4 [shape = 'f32[32,128]{1,0:T(8,128)}', space=vmem, size = 0x4000, scoped, tag = 'scratch operand']
  %s0 = inlined_call_operand.vmem [shape: f32[2,64,128], index: 0, kind: input, shape index: {}]
  %s1 = inlined_call_operand.vmem [shape: f32[2,64,128], index: 1, kind: input, shape index: {}, may-alias: {1,18}]
  %s2 = inlined_call_operand.vmem [shape: f32[128,128], index: 2, kind: input, shape index: {}]
  %s3 = inlined_call_operand.vmem [shape: f32[1,128], index: 3, kind: input, shape index: {}]
  %s4 = inlined_call_operand.vmem [shape: f32[2,1,128], index: 4, kind: input, shape index: {}]
  %s5 = inlined_call_operand.vmem [shape: f32[2,1,128], index: 5, kind: input, shape index: {}]
  %s6 = inlined_call_operand.vmem [shape: f32[2,1,128], index: 6, kind: input, shape index: {}]
  %s7 = inlined_call_operand.vmem [shape: f32[2,1,128], index: 7, kind: input, shape index: {}]
  %s8 = inlined_call_operand.vmem [shape: f32[2,1,128], index: 8, kind: input, shape index: {}]
  %s9 = inlined_call_operand.vmem [shape: f32[2,1,128], index: 9, kind: input, shape index: {}]
  %s10 = inlined_call_operand.vmem [shape: f32[2,1,128], index: 10, kind: input, shape index: {}]
  %s11 = inlined_call_operand.vmem [shape: f32[2,1,128], index: 11, kind: input, shape index: {}]
  %s12 = inlined_call_operand.vmem [shape: f32[1,128], index: 12, kind: input, shape index: {}]
  %s13 = inlined_call_operand.vmem [shape: f32[1,128], index: 13, kind: input, shape index: {}]
  %s14 = inlined_call_operand.vmem [shape: f32[128,512], index: 14, kind: input, shape index: {}]
  %s15 = inlined_call_operand.vmem [shape: f32[1,512], index: 15, kind: input, shape index: {}]
  %s16 = inlined_call_operand.vmem [shape: f32[512,128], index: 16, kind: input, shape index: {}]
  %s17 = inlined_call_operand.vmem [shape: f32[1,128], index: 17, kind: input, shape index: {}]
  %s18 = inlined_call_operand.vmem [shape: f32[2,64,128], index: 18, kind: output, shape index: {}, may-alias: {1,18}]
  %s19 = sld [smem:[#allocation0]]
  $region151: #{cog_tau_block.5} parent=0
    _
  %s21 = ssub.s32 1, %s19
  %s22 = scalar_select 0, %s21, %s19
  $region1: #{cog_tau_block.5} parent=0
    #allocation5 [shape = 'u8[131072]{0}', space=vmem, size = 0x20000, scoped, tag = 'input window, operand 14']
    loop: start=0, step=1, limit=18
    $region2: #{cog_tau_block.5} parent=1 // loop_pre_header
      _
    $region3: #{cog_tau_block.5} parent=1 // loop_header
      %s24 = sphi 0, %s28
      %p25 = scmp.ge.s32.totalorder %s24, 18
      %s31 = sphi 0, %s50
      %s32 = sphi 0, %s46
      %s33 = sphi 0, %s42
      %s34 = sphi 0, %s31
      %s35 = sphi 0, %s32
      %s36 = sphi 0, %s33
      %s37 = sphi 0, %s34
      %s38 = sphi 0, %s35
      %s39 = sphi 0, %s36
      %s55 = sphi 0, %s57
      %s58 = sphi 0, %s55
      %s59 = sphi 0, %s58
      %s75 = sphi 0, %s59
      %s83 = sphi 0, %s85
      %s86 = sphi 0, %s83
      %s87 = sphi 0, %s86
      %s103 = sphi 0, %s87
      %s107 = sphi 0, %s107
      %s109 = sphi 0, %s107
      %s110 = sphi 0, %s109
      %s124 = sphi 0, %s110
      %s128 = sphi 0, %s128
      %s130 = sphi 0, %s128
      %s131 = sphi 0, %s130
      %s145 = sphi 0, %s131
      %s151 = sphi 0, %s153
      %s154 = sphi 0, %s151
      %s155 = sphi 0, %s154
      %s171 = sphi 0, %s155
      %s177 = sphi 0, %s179
      %s180 = sphi 0, %s177
      %s181 = sphi 0, %s180
      %s197 = sphi 0, %s181
      %s203 = sphi 0, %s205
      %s206 = sphi 0, %s203
      %s207 = sphi 0, %s206
      %s223 = sphi 0, %s207
      %s229 = sphi 0, %s231
      %s232 = sphi 0, %s229
      %s233 = sphi 0, %s232
      %s249 = sphi 0, %s233
      %s255 = sphi 0, %s257
      %s258 = sphi 0, %s255
      %s259 = sphi 0, %s258
      %s275 = sphi 0, %s259
      %s281 = sphi 0, %s283
      %s284 = sphi 0, %s281
      %s285 = sphi 0, %s284
      %s301 = sphi 0, %s285
      %s307 = sphi 0, %s309
      %s310 = sphi 0, %s307
      %s311 = sphi 0, %s310
      %s327 = sphi 0, %s311
      %s333 = sphi 0, %s335
      %s336 = sphi 0, %s333
      %s337 = sphi 0, %s336
      %s353 = sphi 0, %s337
      %s357 = sphi 0, %s357
      %s359 = sphi 0, %s357
      %s360 = sphi 0, %s359
      %s374 = sphi 0, %s360
      %s378 = sphi 0, %s378
      %s380 = sphi 0, %s378
      %s381 = sphi 0, %s380
      %s395 = sphi 0, %s381
      %s401 = sphi 0, %s403
      %s404 = sphi 0, %s401
      %s405 = sphi 0, %s404
      %s421 = sphi 0, %s405
      %s427 = sphi 0, %s429
      %s430 = sphi 0, %s427
      %s431 = sphi 0, %s430
      %s447 = sphi 0, %s431
      %s453 = sphi 0, %s455
      %s456 = sphi 0, %s453
      %s457 = sphi 0, %s456
      %s473 = sphi 0, %s457
      %s477 = sphi 0, %s477
      %s479 = sphi 0, %s477
      %s480 = sphi 0, %s479
      %s494 = sphi 0, %s480
      %s502 = sphi 0, %s504
      %s505 = sphi 0, %s502
      %s506 = sphi 0, %s505
      %s522 = sphi 0, %s506
    $region4: #{cog_tau_block.5} parent=1 // loop_header_branch
      %27 = sbr.rel (%p25) target = $region8
    $region5: #{cog_tau_block.5} parent=1 // loop_body
      %s29 = ssub.s32 %s24, 1
      %s30 = ssub.s32 %s24, 2
      %s40 = sadd.s32 1, %s33
      %p41 = scmp.ge.s32.totalorder %s40, 4
      %s42 = scalar_select %p41, 0, %s40
      %s43 = sadd.s32 1, %s32
      %s44 = scalar_select %p41, %s43, %s32
      %p45 = scmp.ge.s32.totalorder %s44, 2
      %s46 = scalar_select %p45, 0, %s44
      %s47 = sadd.s32 1, %s31
      %s48 = scalar_select %p45, %s47, %s31
      %p49 = scmp.ge.s32.totalorder %s48, 2
      %s50 = scalar_select %p49, 0, %s48
      %s51 = ssub.s32 %s31, %s50
      %s52 = ssub.s32 %s32, %s46
      %s53 = sor.u32 %s51, %s52
      %p54 = scmp.eq.s32.totalorder %s53, 0
      %s56 = sadd.s32 %s55, 1
      %s57 = scalar_select %p54, %s55, %s56
      %p60 = pneg %p54
      %p61 = scmp.eq.s32.totalorder %s24, 15
      %p62 = por %p60, %p61
      %p63 = scmp.ne.s32.totalorder %s55, %s58
      %p64 = scmp.eq.s32.totalorder %s24, 0
      %p65 = por %p63, %p64
      %p66 = scmp.ne.s32.totalorder %s55, %s58
      %p67 = scmp.eq.s32.totalorder %s29, 15
      %p68 = por %p66, %p67
      %p69 = scmp.ne.s32.totalorder %s58, %s59
      %p70 = scmp.eq.s32.totalorder %s29, 0
      %p71 = por %p69, %p70
      %p72 = scmp.ne.s32.totalorder %s58, %s59
      %p73 = scmp.eq.s32.totalorder %s30, 15
      %p74 = por %p72, %p73
      %p76 = scmp.ne.s32.totalorder %s59, %s75
      %p77 = scmp.eq.s32.totalorder %s30, 0
      %p78 = por %p76, %p77
      %s79 = ssub.s32 %s31, %s50
      %s80 = ssub.s32 %s32, %s46
      %s81 = sor.u32 %s79, %s80
      %p82 = scmp.eq.s32.totalorder %s81, 0
      %s84 = sadd.s32 %s83, 1
      %s85 = scalar_select %p82, %s83, %s84
      %p88 = pneg %p82
      %p89 = scmp.eq.s32.totalorder %s24, 15
      %p90 = por %p88, %p89
      %p91 = scmp.ne.s32.totalorder %s83, %s86
      %p92 = scmp.eq.s32.totalorder %s24, 0
      %p93 = por %p91, %p92
      %p94 = scmp.ne.s32.totalorder %s83, %s86
      %p95 = scmp.eq.s32.totalorder %s29, 15
      %p96 = por %p94, %p95
      %p97 = scmp.ne.s32.totalorder %s86, %s87
      %p98 = scmp.eq.s32.totalorder %s29, 0
      %p99 = por %p97, %p98
      %p100 = scmp.ne.s32.totalorder %s86, %s87
      %p101 = scmp.eq.s32.totalorder %s30, 15
      %p102 = por %p100, %p101
      %p104 = scmp.ne.s32.totalorder %s87, %s103
      %p105 = scmp.eq.s32.totalorder %s30, 0
      %p106 = por %p104, %p105
      %s108 = sadd.s32 %s107, 1
      %p111 = scmp.eq.s32.totalorder %s24, 15
      %p112 = scmp.ne.s32.totalorder %s107, %s109
      %p113 = scmp.eq.s32.totalorder %s24, 0
      %p114 = por %p112, %p113
      %p115 = scmp.ne.s32.totalorder %s107, %s109
      %p116 = scmp.eq.s32.totalorder %s29, 15
      %p117 = por %p115, %p116
      %p118 = scmp.ne.s32.totalorder %s109, %s110
      %p119 = scmp.eq.s32.totalorder %s29, 0
      %p120 = por %p118, %p119
      %p121 = scmp.ne.s32.totalorder %s109, %s110
      %p122 = scmp.eq.s32.totalorder %s30, 15
      %p123 = por %p121, %p122
      %p125 = scmp.ne.s32.totalorder %s110, %s124
      %p126 = scmp.eq.s32.totalorder %s30, 0
      %p127 = por %p125, %p126
      %s129 = sadd.s32 %s128, 1
      %p132 = scmp.eq.s32.totalorder %s24, 15
      %p133 = scmp.ne.s32.totalorder %s128, %s130
      %p134 = scmp.eq.s32.totalorder %s24, 0
      %p135 = por %p133, %p134
      %p136 = scmp.ne.s32.totalorder %s128, %s130
      %p137 = scmp.eq.s32.totalorder %s29, 15
      %p138 = por %p136, %p137
      %p139 = scmp.ne.s32.totalorder %s130, %s131
      %p140 = scmp.eq.s32.totalorder %s29, 0
      %p141 = por %p139, %p140
      %p142 = scmp.ne.s32.totalorder %s130, %s131
      %p143 = scmp.eq.s32.totalorder %s30, 15
      %p144 = por %p142, %p143
      %p146 = scmp.ne.s32.totalorder %s131, %s145
      %p147 = scmp.eq.s32.totalorder %s30, 0
      %p148 = por %p146, %p147
      %s149 = ssub.s32 %s31, %s50
      %p150 = scmp.eq.s32.totalorder %s149, 0
      %s152 = sadd.s32 %s151, 1
      %s153 = scalar_select %p150, %s151, %s152
      %p156 = pneg %p150
      %p157 = scmp.eq.s32.totalorder %s24, 15
      %p158 = por %p156, %p157
      %p159 = scmp.ne.s32.totalorder %s151, %s154
      %p160 = scmp.eq.s32.totalorder %s24, 0
      %p161 = por %p159, %p160
      %p162 = scmp.ne.s32.totalorder %s151, %s154
      %p163 = scmp.eq.s32.totalorder %s29, 15
      %p164 = por %p162, %p163
      %p165 = scmp.ne.s32.totalorder %s154, %s155
      %p166 = scmp.eq.s32.totalorder %s29, 0
      %p167 = por %p165, %p166
      %p168 = scmp.ne.s32.totalorder %s154, %s155
      %p169 = scmp.eq.s32.totalorder %s30, 15
      %p170 = por %p168, %p169
      %p172 = scmp.ne.s32.totalorder %s155, %s171
      %p173 = scmp.eq.s32.totalorder %s30, 0
      %p174 = por %p172, %p173
      %s175 = ssub.s32 %s31, %s50
      %p176 = scmp.eq.s32.totalorder %s175, 0
      %s178 = sadd.s32 %s177, 1
      %s179 = scalar_select %p176, %s177, %s178
      %p182 = pneg %p176
      %p183 = scmp.eq.s32.totalorder %s24, 15
      %p184 = por %p182, %p183
      %p185 = scmp.ne.s32.totalorder %s177, %s180
      %p186 = scmp.eq.s32.totalorder %s24, 0
      %p187 = por %p185, %p186
      %p188 = scmp.ne.s32.totalorder %s177, %s180
      %p189 = scmp.eq.s32.totalorder %s29, 15
      %p190 = por %p188, %p189
      %p191 = scmp.ne.s32.totalorder %s180, %s181
      %p192 = scmp.eq.s32.totalorder %s29, 0
      %p193 = por %p191, %p192
      %p194 = scmp.ne.s32.totalorder %s180, %s181
      %p195 = scmp.eq.s32.totalorder %s30, 15
      %p196 = por %p194, %p195
      %p198 = scmp.ne.s32.totalorder %s181, %s197
      %p199 = scmp.eq.s32.totalorder %s30, 0
      %p200 = por %p198, %p199
      %s201 = ssub.s32 %s31, %s50
      %p202 = scmp.eq.s32.totalorder %s201, 0
      %s204 = sadd.s32 %s203, 1
      %s205 = scalar_select %p202, %s203, %s204
      %p208 = pneg %p202
      %p209 = scmp.eq.s32.totalorder %s24, 15
      %p210 = por %p208, %p209
      %p211 = scmp.ne.s32.totalorder %s203, %s206
      %p212 = scmp.eq.s32.totalorder %s24, 0
      %p213 = por %p211, %p212
      %p214 = scmp.ne.s32.totalorder %s203, %s206
      %p215 = scmp.eq.s32.totalorder %s29, 15
      %p216 = por %p214, %p215
      %p217 = scmp.ne.s32.totalorder %s206, %s207
      %p218 = scmp.eq.s32.totalorder %s29, 0
      %p219 = por %p217, %p218
      %p220 = scmp.ne.s32.totalorder %s206, %s207
      %p221 = scmp.eq.s32.totalorder %s30, 15
      %p222 = por %p220, %p221
      %p224 = scmp.ne.s32.totalorder %s207, %s223
      %p225 = scmp.eq.s32.totalorder %s30, 0
      %p226 = por %p224, %p225
      %s227 = ssub.s32 %s31, %s50
      %p228 = scmp.eq.s32.totalorder %s227, 0
      %s230 = sadd.s32 %s229, 1
      %s231 = scalar_select %p228, %s229, %s230
      %p234 = pneg %p228
      %p235 = scmp.eq.s32.totalorder %s24, 15
      %p236 = por %p234, %p235
      %p237 = scmp.ne.s32.totalorder %s229, %s232
      %p238 = scmp.eq.s32.totalorder %s24, 0
      %p239 = por %p237, %p238
      %p240 = scmp.ne.s32.totalorder %s229, %s232
      %p241 = scmp.eq.s32.totalorder %s29, 15
      %p242 = por %p240, %p241
      %p243 = scmp.ne.s32.totalorder %s232, %s233
      %p244 = scmp.eq.s32.totalorder %s29, 0
      %p245 = por %p243, %p244
      %p246 = scmp.ne.s32.totalorder %s232, %s233
      %p247 = scmp.eq.s32.totalorder %s30, 15
      %p248 = por %p246, %p247
      %p250 = scmp.ne.s32.totalorder %s233, %s249
      %p251 = scmp.eq.s32.totalorder %s30, 0
      %p252 = por %p250, %p251
      %s253 = ssub.s32 %s31, %s50
      %p254 = scmp.eq.s32.totalorder %s253, 0
      %s256 = sadd.s32 %s255, 1
      %s257 = scalar_select %p254, %s255, %s256
      %p260 = pneg %p254
      %p261 = scmp.eq.s32.totalorder %s24, 15
      %p262 = por %p260, %p261
      %p263 = scmp.ne.s32.totalorder %s255, %s258
      %p264 = scmp.eq.s32.totalorder %s24, 0
      %p265 = por %p263, %p264
      %p266 = scmp.ne.s32.totalorder %s255, %s258
      %p267 = scmp.eq.s32.totalorder %s29, 15
      %p268 = por %p266, %p267
      %p269 = scmp.ne.s32.totalorder %s258, %s259
      %p270 = scmp.eq.s32.totalorder %s29, 0
      %p271 = por %p269, %p270
      %p272 = scmp.ne.s32.totalorder %s258, %s259
      %p273 = scmp.eq.s32.totalorder %s30, 15
      %p274 = por %p272, %p273
      %p276 = scmp.ne.s32.totalorder %s259, %s275
      %p277 = scmp.eq.s32.totalorder %s30, 0
      %p278 = por %p276, %p277
      %s279 = ssub.s32 %s31, %s50
      %p280 = scmp.eq.s32.totalorder %s279, 0
      %s282 = sadd.s32 %s281, 1
      %s283 = scalar_select %p280, %s281, %s282
      %p286 = pneg %p280
      %p287 = scmp.eq.s32.totalorder %s24, 15
      %p288 = por %p286, %p287
      %p289 = scmp.ne.s32.totalorder %s281, %s284
      %p290 = scmp.eq.s32.totalorder %s24, 0
      %p291 = por %p289, %p290
      %p292 = scmp.ne.s32.totalorder %s281, %s284
      %p293 = scmp.eq.s32.totalorder %s29, 15
      %p294 = por %p292, %p293
      %p295 = scmp.ne.s32.totalorder %s284, %s285
      %p296 = scmp.eq.s32.totalorder %s29, 0
      %p297 = por %p295, %p296
      %p298 = scmp.ne.s32.totalorder %s284, %s285
      %p299 = scmp.eq.s32.totalorder %s30, 15
      %p300 = por %p298, %p299
      %p302 = scmp.ne.s32.totalorder %s285, %s301
      %p303 = scmp.eq.s32.totalorder %s30, 0
      %p304 = por %p302, %p303
      %s305 = ssub.s32 %s31, %s50
      %p306 = scmp.eq.s32.totalorder %s305, 0
      %s308 = sadd.s32 %s307, 1
      %s309 = scalar_select %p306, %s307, %s308
      %p312 = pneg %p306
      %p313 = scmp.eq.s32.totalorder %s24, 15
      %p314 = por %p312, %p313
      %p315 = scmp.ne.s32.totalorder %s307, %s310
      %p316 = scmp.eq.s32.totalorder %s24, 0
      %p317 = por %p315, %p316
      %p318 = scmp.ne.s32.totalorder %s307, %s310
      %p319 = scmp.eq.s32.totalorder %s29, 15
      %p320 = por %p318, %p319
      %p321 = scmp.ne.s32.totalorder %s310, %s311
      %p322 = scmp.eq.s32.totalorder %s29, 0
      %p323 = por %p321, %p322
      %p324 = scmp.ne.s32.totalorder %s310, %s311
      %p325 = scmp.eq.s32.totalorder %s30, 15
      %p326 = por %p324, %p325
      %p328 = scmp.ne.s32.totalorder %s311, %s327
      %p329 = scmp.eq.s32.totalorder %s30, 0
      %p330 = por %p328, %p329
      %s331 = ssub.s32 %s31, %s50
      %p332 = scmp.eq.s32.totalorder %s331, 0
      %s334 = sadd.s32 %s333, 1
      %s335 = scalar_select %p332, %s333, %s334
      %p338 = pneg %p332
      %p339 = scmp.eq.s32.totalorder %s24, 15
      %p340 = por %p338, %p339
      %p341 = scmp.ne.s32.totalorder %s333, %s336
      %p342 = scmp.eq.s32.totalorder %s24, 0
      %p343 = por %p341, %p342
      %p344 = scmp.ne.s32.totalorder %s333, %s336
      %p345 = scmp.eq.s32.totalorder %s29, 15
      %p346 = por %p344, %p345
      %p347 = scmp.ne.s32.totalorder %s336, %s337
      %p348 = scmp.eq.s32.totalorder %s29, 0
      %p349 = por %p347, %p348
      %p350 = scmp.ne.s32.totalorder %s336, %s337
      %p351 = scmp.eq.s32.totalorder %s30, 15
      %p352 = por %p350, %p351
      %p354 = scmp.ne.s32.totalorder %s337, %s353
      %p355 = scmp.eq.s32.totalorder %s30, 0
      %p356 = por %p354, %p355
      %s358 = sadd.s32 %s357, 1
      %p361 = scmp.eq.s32.totalorder %s24, 15
      %p362 = scmp.ne.s32.totalorder %s357, %s359
      %p363 = scmp.eq.s32.totalorder %s24, 0
      %p364 = por %p362, %p363
      %p365 = scmp.ne.s32.totalorder %s357, %s359
      %p366 = scmp.eq.s32.totalorder %s29, 15
      %p367 = por %p365, %p366
      %p368 = scmp.ne.s32.totalorder %s359, %s360
      %p369 = scmp.eq.s32.totalorder %s29, 0
      %p370 = por %p368, %p369
      %p371 = scmp.ne.s32.totalorder %s359, %s360
      %p372 = scmp.eq.s32.totalorder %s30, 15
      %p373 = por %p371, %p372
      %p375 = scmp.ne.s32.totalorder %s360, %s374
      %p376 = scmp.eq.s32.totalorder %s30, 0
      %p377 = por %p375, %p376
      %s379 = sadd.s32 %s378, 1
      %p382 = scmp.eq.s32.totalorder %s24, 15
      %p383 = scmp.ne.s32.totalorder %s378, %s380
      %p384 = scmp.eq.s32.totalorder %s24, 0
      %p385 = por %p383, %p384
      %p386 = scmp.ne.s32.totalorder %s378, %s380
      %p387 = scmp.eq.s32.totalorder %s29, 15
      %p388 = por %p386, %p387
      %p389 = scmp.ne.s32.totalorder %s380, %s381
      %p390 = scmp.eq.s32.totalorder %s29, 0
      %p391 = por %p389, %p390
      %p392 = scmp.ne.s32.totalorder %s380, %s381
      %p393 = scmp.eq.s32.totalorder %s30, 15
      %p394 = por %p392, %p393
      %p396 = scmp.ne.s32.totalorder %s381, %s395
      %p397 = scmp.eq.s32.totalorder %s30, 0
      %p398 = por %p396, %p397
      %s399 = ssub.s32 %s33, %s42
      %p400 = scmp.eq.s32.totalorder %s399, 0
      %s402 = sadd.s32 %s401, 1
      %s403 = scalar_select %p400, %s401, %s402
      %p406 = pneg %p400
      %p407 = scmp.eq.s32.totalorder %s24, 15
      %p408 = por %p406, %p407
      %p409 = scmp.ne.s32.totalorder %s401, %s404
      %p410 = scmp.eq.s32.totalorder %s24, 0
      %p411 = por %p409, %p410
      %p412 = scmp.ne.s32.totalorder %s401, %s404
      %p413 = scmp.eq.s32.totalorder %s29, 15
      %p414 = por %p412, %p413
      %p415 = scmp.ne.s32.totalorder %s404, %s405
      %p416 = scmp.eq.s32.totalorder %s29, 0
      %p417 = por %p415, %p416
      %p418 = scmp.ne.s32.totalorder %s404, %s405
      %p419 = scmp.eq.s32.totalorder %s30, 15
      %p420 = por %p418, %p419
      %p422 = scmp.ne.s32.totalorder %s405, %s421
      %p423 = scmp.eq.s32.totalorder %s30, 0
      %p424 = por %p422, %p423
      %s425 = ssub.s32 %s33, %s42
      %p426 = scmp.eq.s32.totalorder %s425, 0
      %s428 = sadd.s32 %s427, 1
      %s429 = scalar_select %p426, %s427, %s428
      %p432 = pneg %p426
      %p433 = scmp.eq.s32.totalorder %s24, 15
      %p434 = por %p432, %p433
      %p435 = scmp.ne.s32.totalorder %s427, %s430
      %p436 = scmp.eq.s32.totalorder %s24, 0
      %p437 = por %p435, %p436
      %p438 = scmp.ne.s32.totalorder %s427, %s430
      %p439 = scmp.eq.s32.totalorder %s29, 15
      %p440 = por %p438, %p439
      %p441 = scmp.ne.s32.totalorder %s430, %s431
      %p442 = scmp.eq.s32.totalorder %s29, 0
      %p443 = por %p441, %p442
      %p444 = scmp.ne.s32.totalorder %s430, %s431
      %p445 = scmp.eq.s32.totalorder %s30, 15
      %p446 = por %p444, %p445
      %p448 = scmp.ne.s32.totalorder %s431, %s447
      %p449 = scmp.eq.s32.totalorder %s30, 0
      %p450 = por %p448, %p449
      %s451 = ssub.s32 %s33, %s42
      %p452 = scmp.eq.s32.totalorder %s451, 0
      %s454 = sadd.s32 %s453, 1
      %s455 = scalar_select %p452, %s453, %s454
      %p458 = pneg %p452
      %p459 = scmp.eq.s32.totalorder %s24, 15
      %p460 = por %p458, %p459
      %p461 = scmp.ne.s32.totalorder %s453, %s456
      %p462 = scmp.eq.s32.totalorder %s24, 0
      %p463 = por %p461, %p462
      %p464 = scmp.ne.s32.totalorder %s453, %s456
      %p465 = scmp.eq.s32.totalorder %s29, 15
      %p466 = por %p464, %p465
      %p467 = scmp.ne.s32.totalorder %s456, %s457
      %p468 = scmp.eq.s32.totalorder %s29, 0
      %p469 = por %p467, %p468
      %p470 = scmp.ne.s32.totalorder %s456, %s457
      %p471 = scmp.eq.s32.totalorder %s30, 15
      %p472 = por %p470, %p471
      %p474 = scmp.ne.s32.totalorder %s457, %s473
      %p475 = scmp.eq.s32.totalorder %s30, 0
      %p476 = por %p474, %p475
      %s478 = sadd.s32 %s477, 1
      %p481 = scmp.eq.s32.totalorder %s24, 15
      %p482 = scmp.ne.s32.totalorder %s477, %s479
      %p483 = scmp.eq.s32.totalorder %s24, 0
      %p484 = por %p482, %p483
      %p485 = scmp.ne.s32.totalorder %s477, %s479
      %p486 = scmp.eq.s32.totalorder %s29, 15
      %p487 = por %p485, %p486
      %p488 = scmp.ne.s32.totalorder %s479, %s480
      %p489 = scmp.eq.s32.totalorder %s29, 0
      %p490 = por %p488, %p489
      %p491 = scmp.ne.s32.totalorder %s479, %s480
      %p492 = scmp.eq.s32.totalorder %s30, 15
      %p493 = por %p491, %p492
      %p495 = scmp.ne.s32.totalorder %s480, %s494
      %p496 = scmp.eq.s32.totalorder %s30, 0
      %p497 = por %p495, %p496
      %s498 = ssub.s32 %s31, %s50
      %s499 = ssub.s32 %s32, %s46
      %s500 = sor.u32 %s498, %s499
      %p501 = scmp.eq.s32.totalorder %s500, 0
      %s503 = sadd.s32 %s502, 1
      %s504 = scalar_select %p501, %s502, %s503
      %p507 = pneg %p501
      %p508 = scmp.eq.s32.totalorder %s24, 15
      %p509 = por %p507, %p508
      %p510 = scmp.ne.s32.totalorder %s502, %s505
      %p511 = scmp.eq.s32.totalorder %s24, 0
      %p512 = por %p510, %p511
      %p513 = scmp.ne.s32.totalorder %s502, %s505
      %p514 = scmp.eq.s32.totalorder %s29, 15
      %p515 = por %p513, %p514
      %p516 = scmp.ne.s32.totalorder %s505, %s506
      %p517 = scmp.eq.s32.totalorder %s29, 0
      %p518 = por %p516, %p517
      %p519 = scmp.ne.s32.totalorder %s505, %s506
      %p520 = scmp.eq.s32.totalorder %s30, 15
      %p521 = por %p519, %p520
      %p523 = scmp.ne.s32.totalorder %s506, %s522
      %p524 = scmp.eq.s32.totalorder %s30, 0
      %p525 = por %p523, %p524
      %p526 = scmp.le.s32.totalorder 1, %s24
      %p527 = scmp.lt.s32.totalorder %s24, 17
      %p528 = pnand %p526, %p527
      %p529 = pneg %p528
      // Predicated region
      $region9: #{cog_tau_block.5} parent=5 // pred_check
        _
      $region10: #{cog_tau_block.5} parent=5 // pred_check_branch
        %531 = sbr.rel (%p528) target = $region12
      $region11: #{cog_tau_block.5} parent=5 // pred_region
        %s532 = ssub.s32 %s24, 1
        // Predicated region
        $region13: #{cog_tau_block.5} parent=11 // pred_check
          %p533 = pneg %p120
        $region14: #{cog_tau_block.5} parent=11 // pred_check_branch
          %535 = sbr.rel (%p533) target = $region16
        $region15: #{cog_tau_block.5} parent=11 // pred_region
          _
        $region16: #{cog_tau_block.5} parent=11 // pred_fallthru
          _
        // Predicated region
        $region17: #{cog_tau_block.5} parent=11 // pred_check
          %p536 = pneg %p141
        $region18: #{cog_tau_block.5} parent=11 // pred_check_branch
          %538 = sbr.rel (%p536) target = $region20
        $region19: #{cog_tau_block.5} parent=11 // pred_region
          _
        $region20: #{cog_tau_block.5} parent=11 // pred_fallthru
          _
        // Predicated region
        $region21: #{cog_tau_block.5} parent=11 // pred_check
          %p539 = pneg %p370
        $region22: #{cog_tau_block.5} parent=11 // pred_check_branch
          %541 = sbr.rel (%p539) target = $region24
        $region23: #{cog_tau_block.5} parent=11 // pred_region
          _
        $region24: #{cog_tau_block.5} parent=11 // pred_fallthru
          _
        // Predicated region
        $region25: #{cog_tau_block.5} parent=11 // pred_check
          %p542 = pneg %p391
        $region26: #{cog_tau_block.5} parent=11 // pred_check_branch
          %544 = sbr.rel (%p542) target = $region28
        $region27: #{cog_tau_block.5} parent=11 // pred_region
          _
        $region28: #{cog_tau_block.5} parent=11 // pred_fallthru
          _
        // Predicated region
        $region29: #{cog_tau_block.5} parent=11 // pred_check
          %p545 = pneg %p490
        $region30: #{cog_tau_block.5} parent=11 // pred_check_branch
          %547 = sbr.rel (%p545) target = $region32
        $region31: #{cog_tau_block.5} parent=11 // pred_region
          _
        $region32: #{cog_tau_block.5} parent=11 // pred_fallthru
          _
      $region12: #{cog_tau_block.5} parent=5 // pred_fallthru
        _
      %p548 = scmp.lt.s32.totalorder %s24, 16
      // Predicated region
      $region33: #{cog_tau_block.5} parent=5 // pred_check
        %p549 = pneg %p548
      $region34: #{cog_tau_block.5} parent=5 // pred_check_branch
        %551 = sbr.rel (%p549) target = $region36
      $region35: #{cog_tau_block.5} parent=5 // pred_region
        // Predicated region
        $region37: #{cog_tau_block.5} parent=35 // pred_check
          %p552 = pneg %p65
        $region38: #{cog_tau_block.5} parent=35 // pred_check_branch
          %554 = sbr.rel (%p552) target = $region40
        $region39: #{cog_tau_block.5} parent=35 // pred_region
          %s555 = smul.u32 4, %s32
          %p556 = scmp.lt.s32.totalorder %s31, 1
          %s557 = scalar_select %p556, %s31, 1
          %p558 = scmp.lt.s32.totalorder %s555, 7
          %s559 = scalar_select %p558, %s555, 7
          %s560 = smul.addr %s557, 8
          %s561 = sadd.s32 %s559, %s560
          %s562 = smul.addr %s561, 8
          %s563 = scalar_lea.vmem %s0, %s562
          %s564 = smul.u32 4, %s32
        $region40: #{cog_tau_block.5} parent=35 // pred_fallthru
          _
        // Predicated region
        $region41: #{cog_tau_block.5} parent=35 // pred_check
          %p565 = pneg %p93
        $region42: #{cog_tau_block.5} parent=35 // pred_check_branch
          %567 = sbr.rel (%p565) target = $region44
        $region43: #{cog_tau_block.5} parent=35 // pred_region
          %s568 = smul.u32 4, %s32
          %p569 = scmp.lt.s32.totalorder %s31, 1
          %s570 = scalar_select %p569, %s31, 1
          %p571 = scmp.lt.s32.totalorder %s568, 7
          %s572 = scalar_select %p571, %s568, 7
          %s573 = smul.addr %s570, 8
          %s574 = sadd.s32 %s572, %s573
          %s575 = smul.addr %s574, 8
          %s576 = scalar_lea.vmem %s1, %s575
          %s577 = smul.u32 4, %s32
        $region44: #{cog_tau_block.5} parent=35 // pred_fallthru
          _
        // Predicated region
        $region45: #{cog_tau_block.5} parent=35 // pred_check
          %p578 = pneg %p161
        $region46: #{cog_tau_block.5} parent=35 // pred_check_branch
          %580 = sbr.rel (%p578) target = $region48
        $region47: #{cog_tau_block.5} parent=35 // pred_region
          %p581 = scmp.lt.s32.totalorder %s31, 1
          %s582 = scalar_select %p581, %s31, 1
          %s583 = scalar_lea.vmem %s4, %s582
        $region48: #{cog_tau_block.5} parent=35 // pred_fallthru
          _
        // Predicated region
        $region49: #{cog_tau_block.5} parent=35 // pred_check
          %p584 = pneg %p187
        $region50: #{cog_tau_block.5} parent=35 // pred_check_branch
          %586 = sbr.rel (%p584) target = $region52
        $region51: #{cog_tau_block.5} parent=35 // pred_region
          %p587 = scmp.lt.s32.totalorder %s31, 1
          %s588 = scalar_select %p587, %s31, 1
          %s589 = scalar_lea.vmem %s5, %s588
        $region52: #{cog_tau_block.5} parent=35 // pred_fallthru
          _
        // Predicated region
        $region53: #{cog_tau_block.5} parent=35 // pred_check
          %p590 = pneg %p213
        $region54: #{cog_tau_block.5} parent=35 // pred_check_branch
          %592 = sbr.rel (%p590) target = $region56
        $region55: #{cog_tau_block.5} parent=35 // pred_region
          %p593 = scmp.lt.s32.totalorder %s31, 1
          %s594 = scalar_select %p593, %s31, 1
          %s595 = scalar_lea.vmem %s6, %s594
        $region56: #{cog_tau_block.5} parent=35 // pred_fallthru
          _
        // Predicated region
        $region57: #{cog_tau_block.5} parent=35 // pred_check
          %p596 = pneg %p239
        $region58: #{cog_tau_block.5} parent=35 // pred_check_branch
          %598 = sbr.rel (%p596) target = $region60
        $region59: #{cog_tau_block.5} parent=35 // pred_region
          %p599 = scmp.lt.s32.totalorder %s31, 1
          %s600 = scalar_select %p599, %s31, 1
          %s601 = scalar_lea.vmem %s7, %s600
        $region60: #{cog_tau_block.5} parent=35 // pred_fallthru
          _
        // Predicated region
        $region61: #{cog_tau_block.5} parent=35 // pred_check
          %p602 = pneg %p265
        $region62: #{cog_tau_block.5} parent=35 // pred_check_branch
          %604 = sbr.rel (%p602) target = $region64
        $region63: #{cog_tau_block.5} parent=35 // pred_region
          %p605 = scmp.lt.s32.totalorder %s31, 1
          %s606 = scalar_select %p605, %s31, 1
          %s607 = scalar_lea.vmem %s8, %s606
        $region64: #{cog_tau_block.5} parent=35 // pred_fallthru
          _
        // Predicated region
        $region65: #{cog_tau_block.5} parent=35 // pred_check
          %p608 = pneg %p291
        $region66: #{cog_tau_block.5} parent=35 // pred_check_branch
          %610 = sbr.rel (%p608) target = $region68
        $region67: #{cog_tau_block.5} parent=35 // pred_region
          %p611 = scmp.lt.s32.totalorder %s31, 1
          %s612 = scalar_select %p611, %s31, 1
          %s613 = scalar_lea.vmem %s9, %s612
        $region68: #{cog_tau_block.5} parent=35 // pred_fallthru
          _
        // Predicated region
        $region69: #{cog_tau_block.5} parent=35 // pred_check
          %p614 = pneg %p317
        $region70: #{cog_tau_block.5} parent=35 // pred_check_branch
          %616 = sbr.rel (%p614) target = $region72
        $region71: #{cog_tau_block.5} parent=35 // pred_region
          %p617 = scmp.lt.s32.totalorder %s31, 1
          %s618 = scalar_select %p617, %s31, 1
          %s619 = scalar_lea.vmem %s10, %s618
        $region72: #{cog_tau_block.5} parent=35 // pred_fallthru
          _
        // Predicated region
        $region73: #{cog_tau_block.5} parent=35 // pred_check
          %p620 = pneg %p343
        $region74: #{cog_tau_block.5} parent=35 // pred_check_branch
          %622 = sbr.rel (%p620) target = $region76
        $region75: #{cog_tau_block.5} parent=35 // pred_region
          %p623 = scmp.lt.s32.totalorder %s31, 1
          %s624 = scalar_select %p623, %s31, 1
          %s625 = scalar_lea.vmem %s11, %s624
        $region76: #{cog_tau_block.5} parent=35 // pred_fallthru
          _
        // Predicated region
        $region77: #{cog_tau_block.5} parent=35 // pred_check
          %p626 = pneg %p411
        $region78: #{cog_tau_block.5} parent=35 // pred_check_branch
          %628 = sbr.rel (%p626) target = $region80
        $region79: #{cog_tau_block.5} parent=35 // pred_region
          %s629 = sand.u32 %s401, 1
          %s630 = sand.u32 %s401, 1
          %s631 = smul.addr %s630, 128
          %s632 = scalar_lea.vmem [#allocation5], %s631
          %s633 = smul.addr %s33, 8
          %s634 = scalar_lea.vmem %s14, %s633
          // Predicated region
          $region81: #{cog_tau_block.5} parent=79 // pred_check
            _
          $region82: #{cog_tau_block.5} parent=79 // pred_check_branch
            %636 = sbr.rel (0) target = $region84
          $region83: #{cog_tau_block.5} parent=79 // pred_region
            // Predicated region
            $region85: #{cog_tau_block.5} parent=83 // pred_check
              _
            $region86: #{cog_tau_block.5} parent=83 // pred_check_branch
              %638 = sbr.rel (0) target = $region88
            $region87: #{cog_tau_block.5} parent=83 // pred_region
              // Predicated region
              $region100: #{cog_tau_block.5} parent=87 // pred_check
                _
              $region101: #{cog_tau_block.5} parent=87 // pred_check_branch
                %684 = sbr.rel (0) target = $region103
              $region102: #{cog_tau_block.5} parent=87 // pred_region
                loop: start=0, step=1, limit=1
                $region104: #{cog_tau_block.5} parent=102 // loop_pre_header
                  _
                $region105: #{cog_tau_block.5} parent=102 // loop_header
                  %s686 = sphi 0, %s690
                  %p687 = scmp.ge.s32.totalorder %s686, 1
                  %s691 = sphi %s634, %s634
                  %s692 = sphi %s632, %s632
                $region106: #{cog_tau_block.5} parent=102 // loop_header_branch
                  %689 = sbr.rel (%p687) target = $region110
                $region107: #{cog_tau_block.5} parent=102 // loop_body
                  %v693 = vld [vmem:[%s691] sm:$0xff]
                  %694 = vst [vmem:[%s692] sm:$0xff] %v693
                  %v695 = vld [vmem:[%s691 + $0x20] sm:$0xff]
                  %696 = vst [vmem:[%s692 + $0x8] sm:$0xff] %v695
                  %v697 = vld [vmem:[%s691 + $0x40] sm:$0xff]
                  %698 = vst [vmem:[%s692 + $0x10] sm:$0xff] %v697
                  %v699 = vld [vmem:[%s691 + $0x60] sm:$0xff]
                  %700 = vst [vmem:[%s692 + $0x18] sm:$0xff] %v699
                  %v701 = vld [vmem:[%s691 + $0x80] sm:$0xff]
                  %702 = vst [vmem:[%s692 + $0x20] sm:$0xff] %v701
                  %v703 = vld [vmem:[%s691 + $0xa0] sm:$0xff]
                  %704 = vst [vmem:[%s692 + $0x28] sm:$0xff] %v703
                  %v705 = vld [vmem:[%s691 + $0xc0] sm:$0xff]
                  %706 = vst [vmem:[%s692 + $0x30] sm:$0xff] %v705
                  %v707 = vld [vmem:[%s691 + $0xe0] sm:$0xff]
                  %708 = vst [vmem:[%s692 + $0x38] sm:$0xff] %v707
                  %v709 = vld [vmem:[%s691 + $0x100] sm:$0xff]
                  %710 = vst [vmem:[%s692 + $0x40] sm:$0xff] %v709
                  %v711 = vld [vmem:[%s691 + $0x120] sm:$0xff]
                  %712 = vst [vmem:[%s692 + $0x48] sm:$0xff] %v711
                  %v713 = vld [vmem:[%s691 + $0x140] sm:$0xff]
                  %714 = vst [vmem:[%s692 + $0x50] sm:$0xff] %v713
                  %v715 = vld [vmem:[%s691 + $0x160] sm:$0xff]
                  %716 = vst [vmem:[%s692 + $0x58] sm:$0xff] %v715
                  %v717 = vld [vmem:[%s691 + $0x180] sm:$0xff]
                  %718 = vst [vmem:[%s692 + $0x60] sm:$0xff] %v717
                  %v719 = vld [vmem:[%s691 + $0x1a0] sm:$0xff]
                  %720 = vst [vmem:[%s692 + $0x68] sm:$0xff] %v719
                  %v721 = vld [vmem:[%s691 + $0x1c0] sm:$0xff]
                  %722 = vst [vmem:[%s692 + $0x70] sm:$0xff] %v721
                  %v723 = vld [vmem:[%s691 + $0x1e0] sm:$0xff]
                  %724 = vst [vmem:[%s692 + $0x78] sm:$0xff] %v723
                $region108: #{cog_tau_block.5} parent=102 // loop_footer
                  %s690 = sadd.s32 1, %s686
                $region109: #{cog_tau_block.5} parent=102 // loop_footer_branch
                  %685 = sbr.rel target = $region105
                $region110: #{cog_tau_block.5} parent=102 // loop_exit
                  _
              $region103: #{cog_tau_block.5} parent=87 // pred_fallthru
                _
              // Predicated region
              $region111: #{cog_tau_block.5} parent=87 // pred_check
                _
              $region112: #{cog_tau_block.5} parent=87 // pred_check_branch
                %726 = sbr.rel target = $region114
              $region113: #{cog_tau_block.5} parent=87 // pred_region
                _
              $region114: #{cog_tau_block.5} parent=87 // pred_fallthru
                _
            $region88: #{cog_tau_block.5} parent=83 // pred_fallthru
              _
            // Predicated region
            $region89: #{cog_tau_block.5} parent=83 // pred_check
              _
            $region90: #{cog_tau_block.5} parent=83 // pred_check_branch
              %640 = sbr.rel target = $region92
            $region91: #{cog_tau_block.5} parent=83 // pred_region
              %s642 = ssub.s32 256, 1
              loop: start=0, step=1, limit=1
              $region93: #{cog_tau_block.5} parent=91 // loop_pre_header
                _
              $region94: #{cog_tau_block.5} parent=91 // loop_header
                %s644 = sphi 0, %s648
                %p645 = scmp.ge.s32.totalorder %s644, 1
                %s649 = sphi %s634, %s634
                %s650 = sphi %s632, %s632
              $region95: #{cog_tau_block.5} parent=91 // loop_header_branch
                %647 = sbr.rel (%p645) target = $region99
              $region96: #{cog_tau_block.5} parent=91 // loop_body
                %v651 = vld [vmem:[%s649] sm:%s642]
                %652 = vst [vmem:[%s650] sm:%s642] %v651
                %v653 = vld [vmem:[%s649 + $0x20] sm:%s642]
                %654 = vst [vmem:[%s650 + $0x8] sm:%s642] %v653
                %v655 = vld [vmem:[%s649 + $0x40] sm:%s642]
                %656 = vst [vmem:[%s650 + $0x10] sm:%s642] %v655
                %v657 = vld [vmem:[%s649 + $0x60] sm:%s642]
                %658 = vst [vmem:[%s650 + $0x18] sm:%s642] %v657
                %v659 = vld [vmem:[%s649 + $0x80] sm:%s642]
                %660 = vst [vmem:[%s650 + $0x20] sm:%s642] %v659
                %v661 = vld [vmem:[%s649 + $0xa0] sm:%s642]
                %662 = vst [vmem:[%s650 + $0x28] sm:%s642] %v661
                %v663 = vld [vmem:[%s649 + $0xc0] sm:%s642]
                %664 = vst [vmem:[%s650 + $0x30] sm:%s642] %v663
                %v665 = vld [vmem:[%s649 + $0xe0] sm:%s642]
                %666 = vst [vmem:[%s650 + $0x38] sm:%s642] %v665
                %v667 = vld [vmem:[%s649 + $0x100] sm:%s642]
                %668 = vst [vmem:[%s650 + $0x40] sm:%s642] %v667
                %v669 = vld [vmem:[%s649 + $0x120] sm:%s642]
                %670 = vst [vmem:[%s650 + $0x48] sm:%s642] %v669
                %v671 = vld [vmem:[%s649 + $0x140] sm:%s642]
                %672 = vst [vmem:[%s650 + $0x50] sm:%s642] %v671
                %v673 = vld [vmem:[%s649 + $0x160] sm:%s642]
                %674 = vst [vmem:[%s650 + $0x58] sm:%s642] %v673
                %v675 = vld [vmem:[%s649 + $0x180] sm:%s642]
                %676 = vst [vmem:[%s650 + $0x60] sm:%s642] %v675
                %v677 = vld [vmem:[%s649 + $0x1a0] sm:%s642]
                %678 = vst [vmem:[%s650 + $0x68] sm:%s642] %v677
                %v679 = vld [vmem:[%s649 + $0x1c0] sm:%s642]
                %680 = vst [vmem:[%s650 + $0x70] sm:%s642] %v679
                %v681 = vld [vmem:[%s649 + $0x1e0] sm:%s642]
                %682 = vst [vmem:[%s650 + $0x78] sm:%s642] %v681
              $region97: #{cog_tau_block.5} parent=91 // loop_footer
                %s648 = sadd.s32 1, %s644
              $region98: #{cog_tau_block.5} parent=91 // loop_footer_branch
                %643 = sbr.rel target = $region94
              $region99: #{cog_tau_block.5} parent=91 // loop_exit
                _
            $region92: #{cog_tau_block.5} parent=83 // pred_fallthru
              _
          $region84: #{cog_tau_block.5} parent=79 // pred_fallthru
            _
          %727 = vnop
        $region80: #{cog_tau_block.5} parent=35 // pred_fallthru
          _
        // Predicated region
        $region115: #{cog_tau_block.5} parent=35 // pred_check
          %p728 = pneg %p437
        $region116: #{cog_tau_block.5} parent=35 // pred_check_branch
          %730 = sbr.rel (%p728) target = $region118
        $region117: #{cog_tau_block.5} parent=35 // pred_region
          %p731 = scmp.lt.s32.totalorder %s33, 3
          %s732 = scalar_select %p731, %s33, 3
          %s733 = scalar_lea.vmem %s15, %s732
        $region118: #{cog_tau_block.5} parent=35 // pred_fallthru
          _
        // Predicated region
        $region119: #{cog_tau_block.5} parent=35 // pred_check
          %p734 = pneg %p463
        $region120: #{cog_tau_block.5} parent=35 // pred_check_branch
          %736 = sbr.rel (%p734) target = $region122
        $region121: #{cog_tau_block.5} parent=35 // pred_region
          %s737 = smul.u32 16, %s33
          %p738 = scmp.lt.s32.totalorder %s737, 63
          %s739 = scalar_select %p738, %s737, 63
          %s740 = smul.addr %s739, 8
          %s741 = scalar_lea.vmem %s16, %s740
          %s742 = smul.u32 16, %s33
        $region122: #{cog_tau_block.5} parent=35 // pred_fallthru
          _
      $region36: #{cog_tau_block.5} parent=5 // pred_fallthru
        _
      %p743 = scmp.le.s32.totalorder 1, %s24
      %p744 = scmp.lt.s32.totalorder %s24, 17
      %p745 = pnand %p743, %p744
      %p746 = pneg %p745
      // Predicated region
      $region123: #{cog_tau_block.5} parent=5 // pred_check
        _
      $region124: #{cog_tau_block.5} parent=5 // pred_check_branch
        %748 = sbr.rel (%p745) target = $region126
      $region125: #{cog_tau_block.5} parent=5 // pred_region
        %s749 = ssub.s32 %s24, 1
        %s750 = sand.u32 %s404, 1
        %s751 = sand.u32 %s404, 1
        %s752 = smul.addr %s751, 128
        %s753 = scalar_lea.vmem [#allocation5], %s752
        // Predicated region
        $region127: #{cog_tau_block.5} parent=125 // pred_check
          %p754 = pneg %p417
        $region128: #{cog_tau_block.5} parent=125 // pred_check_branch
          %756 = sbr.rel (%p754) target = $region130
        $region129: #{cog_tau_block.5} parent=125 // pred_region
          _
        $region130: #{cog_tau_block.5} parent=125 // pred_fallthru
          _
        %s757 = smul.u32 4, %s35
        %p758 = scmp.lt.s32.totalorder %s34, 1
        %s759 = scalar_select %p758, %s34, 1
        %p760 = scmp.lt.s32.totalorder %s757, 7
        %s761 = scalar_select %p760, %s757, 7
        %s762 = smul.addr %s759, 8
        %s763 = sadd.s32 %s761, %s762
        %s764 = smul.addr %s763, 8
        %s765 = scalar_lea.vmem %s0, %s764
        %p766 = pneg %p71
        %p767 = pneg %p68
        %s768 = smul.u32 4, %s35
        %p769 = scmp.lt.s32.totalorder %s34, 1
        %s770 = scalar_select %p769, %s34, 1
        %p771 = scmp.lt.s32.totalorder %s768, 7
        %s772 = scalar_select %p771, %s768, 7
        %s773 = smul.addr %s770, 8
        %s774 = sadd.s32 %s772, %s773
        %s775 = smul.addr %s774, 8
        %s776 = scalar_lea.vmem %s1, %s775
        %p777 = pneg %p99
        %p778 = pneg %p96
        %p779 = pneg %p120
        %p780 = pneg %p117
        %p781 = pneg %p141
        %p782 = pneg %p138
        %p783 = scmp.lt.s32.totalorder %s34, 1
        %s784 = scalar_select %p783, %s34, 1
        %s785 = scalar_lea.vmem %s4, %s784
        %p786 = pneg %p167
        %p787 = pneg %p164
        %p788 = scmp.lt.s32.totalorder %s34, 1
        %s789 = scalar_select %p788, %s34, 1
        %s790 = scalar_lea.vmem %s5, %s789
        %p791 = pneg %p193
        %p792 = pneg %p190
        %p793 = scmp.lt.s32.totalorder %s34, 1
        %s794 = scalar_select %p793, %s34, 1
        %s795 = scalar_lea.vmem %s6, %s794
        %p796 = pneg %p219
        %p797 = pneg %p216
        %p798 = scmp.lt.s32.totalorder %s34, 1
        %s799 = scalar_select %p798, %s34, 1
        %s800 = scalar_lea.vmem %s7, %s799
        %p801 = pneg %p245
        %p802 = pneg %p242
        %p803 = scmp.lt.s32.totalorder %s34, 1
        %s804 = scalar_select %p803, %s34, 1
        %s805 = scalar_lea.vmem %s8, %s804
        %p806 = pneg %p271
        %p807 = pneg %p268
        %p808 = scmp.lt.s32.totalorder %s34, 1
        %s809 = scalar_select %p808, %s34, 1
        %s810 = scalar_lea.vmem %s9, %s809
        %p811 = pneg %p297
        %p812 = pneg %p294
        %p813 = scmp.lt.s32.totalorder %s34, 1
        %s814 = scalar_select %p813, %s34, 1
        %s815 = scalar_lea.vmem %s10, %s814
        %p816 = pneg %p323
        %p817 = pneg %p320
        %p818 = scmp.lt.s32.totalorder %s34, 1
        %s819 = scalar_select %p818, %s34, 1
        %s820 = scalar_lea.vmem %s11, %s819
        %p821 = pneg %p349
        %p822 = pneg %p346
        %p823 = pneg %p370
        %p824 = pneg %p367
        %p825 = pneg %p391
        %p826 = pneg %p388
        %s827 = sand.u32 %s404, 1
        %s828 = sand.u32 %s404, 1
        %s829 = smul.addr %s828, 128
        %s830 = scalar_lea.vmem [#allocation5], %s829
        %p831 = pneg %p417
        %p832 = pneg %p414
        %p833 = scmp.lt.s32.totalorder %s36, 3
        %s834 = scalar_select %p833, %s36, 3
        %s835 = scalar_lea.vmem %s15, %s834
        %p836 = pneg %p443
        %p837 = pneg %p440
        %s838 = smul.u32 16, %s36
        %p839 = scmp.lt.s32.totalorder %s838, 63
        %s840 = scalar_select %p839, %s838, 63
        %s841 = smul.addr %s840, 8
        %s842 = scalar_lea.vmem %s16, %s841
        %p843 = pneg %p469
        %p844 = pneg %p466
        %p845 = pneg %p490
        %p846 = pneg %p487
        %p847 = pneg %p518
        %p848 = pneg %p515
        %s849 = smul.u32 4, %s35
        %p850 = scmp.lt.s32.totalorder %s34, 1
        %s851 = scalar_select %p850, %s34, 1
        %p852 = scmp.lt.s32.totalorder %s849, 7
        %s853 = scalar_select %p852, %s849, 7
        %s854 = smul.addr %s851, 8
        %s855 = sadd.s32 %s853, %s854
        %s856 = smul.addr %s855, 8
        %s857 = scalar_lea.vmem %s18, %s856
        %s858 = smul.u32 4, %s35
        %p859 = scmp.lt.s32.totalorder %s34, 1
        %s860 = scalar_select %p859, %s34, 1
        %p861 = scmp.lt.s32.totalorder %s858, 7
        %s862 = scalar_select %p861, %s858, 7
        %s863 = smul.addr %s860, 8
        %s864 = sadd.s32 %s862, %s863
        %s865 = smul.addr %s864, 8
        %s866 = scalar_lea.vmem %s0, %s865
        %s867 = smul.u32 4, %s35
        %s868 = smul.u32 4, %s35
        %p869 = scmp.lt.s32.totalorder %s34, 1
        %s870 = scalar_select %p869, %s34, 1
        %p871 = scmp.lt.s32.totalorder %s868, 7
        %s872 = scalar_select %p871, %s868, 7
        %s873 = smul.addr %s870, 8
        %s874 = sadd.s32 %s872, %s873
        %s875 = smul.addr %s874, 8
        %s876 = scalar_lea.vmem %s1, %s875
        %s877 = smul.u32 4, %s35
        %p878 = scmp.lt.s32.totalorder %s34, 1
        %s879 = scalar_select %p878, %s34, 1
        %s880 = scalar_lea.vmem %s4, %s879
        %p881 = scmp.lt.s32.totalorder %s34, 1
        %s882 = scalar_select %p881, %s34, 1
        %s883 = scalar_lea.vmem %s5, %s882
        %p884 = scmp.lt.s32.totalorder %s34, 1
        %s885 = scalar_select %p884, %s34, 1
        %s886 = scalar_lea.vmem %s6, %s885
        %p887 = scmp.lt.s32.totalorder %s34, 1
        %s888 = scalar_select %p887, %s34, 1
        %s889 = scalar_lea.vmem %s7, %s888
        %p890 = scmp.lt.s32.totalorder %s34, 1
        %s891 = scalar_select %p890, %s34, 1
        %s892 = scalar_lea.vmem %s8, %s891
        %p893 = scmp.lt.s32.totalorder %s34, 1
        %s894 = scalar_select %p893, %s34, 1
        %s895 = scalar_lea.vmem %s9, %s894
        %p896 = scmp.lt.s32.totalorder %s34, 1
        %s897 = scalar_select %p896, %s34, 1
        %s898 = scalar_lea.vmem %s10, %s897
        %p899 = scmp.lt.s32.totalorder %s34, 1
        %s900 = scalar_select %p899, %s34, 1
        %s901 = scalar_lea.vmem %s11, %s900
        %p902 = scmp.lt.s32.totalorder %s36, 3
        %s903 = scalar_select %p902, %s36, 3
        %s904 = scalar_lea.vmem %s15, %s903
        %s905 = smul.u32 16, %s36
        %p906 = scmp.lt.s32.totalorder %s905, 63
        %s907 = scalar_select %p906, %s905, 63
        %s908 = smul.addr %s907, 8
        %s909 = scalar_lea.vmem %s16, %s908
        %s910 = smul.u32 16, %s36
        %s911 = smul.u32 4, %s35
        %p912 = scmp.lt.s32.totalorder %s34, 1
        %s913 = scalar_select %p912, %s34, 1
        %p914 = scmp.lt.s32.totalorder %s911, 7
        %s915 = scalar_select %p914, %s911, 7
        %s916 = smul.addr %s913, 8
        %s917 = sadd.s32 %s915, %s916
        %s918 = smul.addr %s917, 8
        %s919 = scalar_lea.vmem %s18, %s918
        %s920 = smul.u32 4, %s35
        %s921 = smul.u32 %s35, 32
        %v922 = vlaneseq
        %v923 = vshrl.u32 %v922, 7
        %v924 = vadd.s32 %v923, 8
        %v925 = vadd.s32 %v923, 16
        %v926 = vadd.s32 %v923, 24
        %v927 = vstv %s921
        %v928 = vadd.s32 %v927, %v923
        %v929 = vadd.s32 %v927, %v924
        %v930 = vadd.s32 %v927, %v925
        %v931 = vadd.s32 %v927, %v926
        %vm932 = vcmp.lt.s32.totalorder %v928, 11
        %vm933 = vcmp.lt.s32.totalorder %v929, 11
        %vm934 = vcmp.lt.s32.totalorder %v930, 11
        %vm935 = vcmp.lt.s32.totalorder %v931, 11
        %p936 = scmp.eq.s32.totalorder %s36, 0
        // Predicated region
        $region131: #{cog_tau_block.5} parent=125 // pred_check
          %p937 = pneg %p936
        $region132: #{cog_tau_block.5} parent=125 // pred_check_branch
          %939 = sbr.rel (%p937) target = $region134
        $region133: #{cog_tau_block.5} parent=125 // pred_region
          %v940 = vld [vmem:[%s866] sm:$0xff]
          %v941 = vld [vmem:[%s866 + $0x8] sm:$0xff]
          %v942 = vld [vmem:[%s866 + $0x10] sm:$0xff]
          %v943 = vld [vmem:[%s866 + $0x18] sm:$0xff]
          %v944 = vld [vmem:[%s2] sm:$0xff]
          %v945 = vld [vmem:[%s2 + $0x8] sm:$0xff]
          %v946 = vld [vmem:[%s2 + $0x10] sm:$0xff]
          %v947 = vld [vmem:[%s2 + $0x18] sm:$0xff]
          %v948 = vld [vmem:[%s2 + $0x20] sm:$0xff]
          %v949 = vld [vmem:[%s2 + $0x28] sm:$0xff]
          %v950 = vld [vmem:[%s2 + $0x30] sm:$0xff]
          %v951 = vld [vmem:[%s2 + $0x38] sm:$0xff]
          %v952 = vld [vmem:[%s2 + $0x40] sm:$0xff]
          %v953 = vld [vmem:[%s2 + $0x48] sm:$0xff]
          %v954 = vld [vmem:[%s2 + $0x50] sm:$0xff]
          %v955 = vld [vmem:[%s2 + $0x58] sm:$0xff]
          %v956 = vld [vmem:[%s2 + $0x60] sm:$0xff]
          %v957 = vld [vmem:[%s2 + $0x68] sm:$0xff]
          %v958 = vld [vmem:[%s2 + $0x70] sm:$0xff]
          %v959 = vld [vmem:[%s2 + $0x78] sm:$0xff]
          %v960 = vld [vmem:[%s3] sm:$0x1]
          %v962 = vperm.slane %v960, 0
          %964 = vmatpush.msra.mxu0 %v959
          %965 = vmatpush.msra.mxu0 %v958
          %966 = vmatpush.msra.mxu0 %v957
          %967 = vmatpush.msra.mxu0 %v956
          %968 = vmatpush.msra.mxu0 %v955
          %969 = vmatpush.msra.mxu0 %v954
          %970 = vmatpush.msra.mxu0 %v953
          %971 = vmatpush.msra.mxu0 %v952
          %972 = vmatpush.msra.mxu0 %v951
          %973 = vmatpush.msra.mxu0 %v950
          %974 = vmatpush.msra.mxu0 %v949
          %975 = vmatpush.msra.mxu0 %v948
          %976 = vmatpush.msra.mxu0 %v947
          %977 = vmatpush.msra.mxu0 %v946
          %978 = vmatpush.msra.mxu0 %v945
          %979 = vmatpush.msra.mxu0 %v944
          %980 = vmatmul.f32.gmra.mxu0 %v940
          %v981 = vpop.f32.mrf.mxu0
          %v982 = vadd.f32 %v962, %v981
          %983 = vmatmul.f32.gmra.mxu0 %v941
          %v984 = vpop.f32.mrf.mxu0
          %v985 = vadd.f32 %v962, %v984
          %986 = vmatmul.f32.gmra.mxu0 %v942
          %v987 = vpop.f32.mrf.mxu0
          %v988 = vadd.f32 %v962, %v987
          %989 = vmatmul.f32.gmra.mxu0 %v943
          %v990 = vpop.f32.mrf.mxu0
          %v991 = vadd.f32 %v962, %v990
          %992 = vdwg.mxu0
          %v993 = vld [vmem:[%s883] sm:$0x1]
          %v994 = vld [vmem:[%s880] sm:$0x1]
          %v995 = vsel %vm932, 1, 0
          %v996 = vsel %vm933, 1, 0
          %v997 = vsel %vm934, 1, 0
          %v998 = vsel %vm935, 1, 0
          %vm999 = vcmp.eq.s32.totalorder %v995, 1
          %vm1000 = vcmp.eq.s32.totalorder %v996, 1
          %vm1001 = vcmp.eq.s32.totalorder %v997, 1
          %vm1002 = vcmp.eq.s32.totalorder %v998, 1
          %v1004 = vperm.slane %v993, 0
          %v1007 = vperm.slane %v994, 0
          %v1009 = vsel %vm999, %v1004, %v1007
          %v1010 = vsel %vm1000, %v1004, %v1007
          %v1011 = vsel %vm1001, %v1004, %v1007
          %v1012 = vsel %vm1002, %v1004, %v1007
          %v1013 = vld [vmem:[%s876] sm:$0xff]
          %v1014 = vld [vmem:[%s876 + $0x8] sm:$0xff]
          %v1015 = vld [vmem:[%s876 + $0x10] sm:$0xff]
          %v1016 = vld [vmem:[%s876 + $0x18] sm:$0xff]
          %v1017 = vmul.f32 %v1009, %v982
          %v1018 = vmul.f32 %v1010, %v985
          %v1019 = vmul.f32 %v1011, %v988
          %v1020 = vmul.f32 %v1012, %v991
          %v1021 = vadd.f32 %v1013, %v1017
          %v1022 = vadd.f32 %v1014, %v1018
          %v1023 = vadd.f32 %v1015, %v1019
          %v1024 = vadd.f32 %v1016, %v1020
          %1025 = vst [vmem:[#allocation2] sm:$0xff] %v1021
          %1026 = vst [vmem:[#allocation2 + $0x8] sm:$0xff] %v1022
          %1027 = vst [vmem:[#allocation2 + $0x10] sm:$0xff] %v1023
          %1028 = vst [vmem:[#allocation2 + $0x18] sm:$0xff] %v1024
          %1029 = vadd.xlane.f32.xlu0 %v1021
          %v1030 = vpop.xlane.xlu0 %1029
          %1031 = vadd.xlane.f32.xlu0 %v1022
          %v1032 = vpop.xlane.xlu0 %1031
          %1033 = vadd.xlane.f32.xlu0 %v1023
          %v1034 = vpop.xlane.xlu0 %1033
          %1035 = vadd.xlane.f32.xlu0 %v1024
          %v1036 = vpop.xlane.xlu0 %1035
          %v1037 = vrcp.pop 128.0
          %v1038 = vmul.f32 128.0, %v1037
          %v1039 = vsub.f32 1.0, %v1038
          %v1040 = vmul.f32 %v1037, %v1039
          %v1041 = vadd.f32 %v1037, %v1040
          %vm1042 = vweird.f32 %v1037
          %v1043 = vsel %vm1042, %v1037, %v1041
          %v1044 = vmul.f32 %v1030, %v1043
          %v1045 = vmul.f32 %v1032, %v1043
          %v1046 = vmul.f32 %v1034, %v1043
          %v1047 = vmul.f32 %v1036, %v1043
          %v1048 = vsub.f32 %v1021, %v1044
          %v1049 = vsub.f32 %v1022, %v1045
          %v1050 = vsub.f32 %v1023, %v1046
          %v1051 = vsub.f32 %v1024, %v1047
          %v1052 = vmul.f32 %v1048, %v1048
          %v1053 = vmul.f32 %v1049, %v1049
          %v1054 = vmul.f32 %v1050, %v1050
          %v1055 = vmul.f32 %v1051, %v1051
          %1056 = vadd.xlane.f32.xlu0 %v1052
          %v1057 = vpop.xlane.xlu0 %1056
          %1058 = vadd.xlane.f32.xlu0 %v1053
          %v1059 = vpop.xlane.xlu0 %1058
          %1060 = vadd.xlane.f32.xlu0 %v1054
          %v1061 = vpop.xlane.xlu0 %1060
          %1062 = vadd.xlane.f32.xlu0 %v1055
          %v1063 = vpop.xlane.xlu0 %1062
          %v1064 = vmul.f32 %v1057, %v1043
          %v1065 = vmul.f32 %v1059, %v1043
          %v1066 = vmul.f32 %v1061, %v1043
          %v1067 = vmul.f32 %v1063, %v1043
          %v1068 = vld [vmem:[%s895] sm:$0x1]
          %v1069 = vld [vmem:[%s886] sm:$0x1]
          %v1071 = vperm.slane %v1068, 0
          %v1074 = vperm.slane %v1069, 0
          %v1076 = vsel %vm999, %v1071, %v1074
          %v1077 = vsel %vm1000, %v1071, %v1074
          %v1078 = vsel %vm1001, %v1071, %v1074
          %v1079 = vsel %vm1002, %v1071, %v1074
          %v1080 = vld [vmem:[%s898] sm:$0x1]
          %v1081 = vld [vmem:[%s889] sm:$0x1]
          %v1083 = vperm.slane %v1080, 0
          %v1086 = vperm.slane %v1081, 0
          %v1088 = vsel %vm999, %v1083, %v1086
          %v1089 = vsel %vm1000, %v1083, %v1086
          %v1090 = vsel %vm1001, %v1083, %v1086
          %v1091 = vsel %vm1002, %v1083, %v1086
          %v1092 = vadd.f32 %v1064, 1e-05
          %v1093 = vadd.f32 %v1065, 1e-05
          %v1094 = vadd.f32 %v1066, 1e-05
          %v1095 = vadd.f32 %v1067, 1e-05
          %v1096 = vrsqrt.pop %v1092
          %v1097 = vmul.f32 %v1096, %v1092
          %v1098 = vmul.f32 %v1097, %v1096
          %v1099 = vmul.f32 0.5, %v1098
          %v1100 = vsub.f32 1.5, %v1099
          %v1101 = vmul.f32 %v1096, %v1100
          %vm1102 = vweird.f32 %v1092
          %vm1103 = vweird.f32 %v1096
          %vm1104 = vmor %vm1102, %vm1103
          %v1105 = vsel %vm1104, %v1096, %v1101
          %v1106 = vrsqrt.pop %v1093
          %v1107 = vmul.f32 %v1106, %v1093
          %v1108 = vmul.f32 %v1107, %v1106
          %v1109 = vmul.f32 0.5, %v1108
          %v1110 = vsub.f32 1.5, %v1109
          %v1111 = vmul.f32 %v1106, %v1110
          %vm1112 = vweird.f32 %v1093
          %vm1113 = vweird.f32 %v1106
          %vm1114 = vmor %vm1112, %vm1113
          %v1115 = vsel %vm1114, %v1106, %v1111
          %v1116 = vrsqrt.pop %v1094
          %v1117 = vmul.f32 %v1116, %v1094
          %v1118 = vmul.f32 %v1117, %v1116
          %v1119 = vmul.f32 0.5, %v1118
          %v1120 = vsub.f32 1.5, %v1119
          %v1121 = vmul.f32 %v1116, %v1120
          %vm1122 = vweird.f32 %v1094
          %vm1123 = vweird.f32 %v1116
          %vm1124 = vmor %vm1122, %vm1123
          %v1125 = vsel %vm1124, %v1116, %v1121
          %v1126 = vrsqrt.pop %v1095
          %v1127 = vmul.f32 %v1126, %v1095
          %v1128 = vmul.f32 %v1127, %v1126
          %v1129 = vmul.f32 0.5, %v1128
          %v1130 = vsub.f32 1.5, %v1129
          %v1131 = vmul.f32 %v1126, %v1130
          %vm1132 = vweird.f32 %v1095
          %vm1133 = vweird.f32 %v1126
          %vm1134 = vmor %vm1132, %vm1133
          %v1135 = vsel %vm1134, %v1126, %v1131
          %v1136 = vmul.f32 %v1048, %v1105
          %v1137 = vmul.f32 %v1049, %v1115
          %v1138 = vmul.f32 %v1050, %v1125
          %v1139 = vmul.f32 %v1051, %v1135
          %v1140 = vld [vmem:[%s12] sm:$0x1]
          %v1142 = vperm.slane %v1140, 0
          %v1144 = vmul.f32 %v1136, %v1142
          %v1145 = vmul.f32 %v1137, %v1142
          %v1146 = vmul.f32 %v1138, %v1142
          %v1147 = vmul.f32 %v1139, %v1142
          %v1148 = vld [vmem:[%s13] sm:$0x1]
          %v1150 = vperm.slane %v1148, 0
          %v1152 = vadd.f32 %v1144, %v1150
          %v1153 = vadd.f32 %v1145, %v1150
          %v1154 = vadd.f32 %v1146, %v1150
          %v1155 = vadd.f32 %v1147, %v1150
          %v1156 = vadd.f32 %v1088, 1.0
          %v1157 = vadd.f32 %v1089, 1.0
          %v1158 = vadd.f32 %v1090, 1.0
          %v1159 = vadd.f32 %v1091, 1.0
          %v1160 = vmul.f32 %v1152, %v1156
          %v1161 = vmul.f32 %v1153, %v1157
          %v1162 = vmul.f32 %v1154, %v1158
          %v1163 = vmul.f32 %v1155, %v1159
          %v1164 = vadd.f32 %v1160, %v1076
          %v1165 = vadd.f32 %v1161, %v1077
          %v1166 = vadd.f32 %v1162, %v1078
          %v1167 = vadd.f32 %v1163, %v1079
          %1168 = vst [vmem:[#allocation3] sm:$0xff] %v1164
          %1169 = vst [vmem:[#allocation3 + $0x8] sm:$0xff] %v1165
          %1170 = vst [vmem:[#allocation3 + $0x10] sm:$0xff] %v1166
          %1171 = vst [vmem:[#allocation3 + $0x18] sm:$0xff] %v1167
          %1172 = vst [vmem:[#allocation4] sm:$0xff] 0.0
          %1173 = vst [vmem:[#allocation4 + $0x8] sm:$0xff] 0.0
          %1174 = vst [vmem:[#allocation4 + $0x10] sm:$0xff] 0.0
          %1175 = vst [vmem:[#allocation4 + $0x18] sm:$0xff] 0.0
        $region134: #{cog_tau_block.5} parent=125 // pred_fallthru
          _
        %v1176 = vld [vmem:[#allocation3] sm:$0xff]
        %v1177 = vld [vmem:[#allocation3 + $0x8] sm:$0xff]
        %v1178 = vld [vmem:[#allocation3 + $0x10] sm:$0xff]
        %v1179 = vld [vmem:[#allocation3 + $0x18] sm:$0xff]
        %v1180 = vld [vmem:[%s753] sm:$0xff]
        %v1181 = vld [vmem:[%s753 + $0x8] sm:$0xff]
        %v1182 = vld [vmem:[%s753 + $0x10] sm:$0xff]
        %v1183 = vld [vmem:[%s753 + $0x18] sm:$0xff]
        %v1184 = vld [vmem:[%s753 + $0x20] sm:$0xff]
        %v1185 = vld [vmem:[%s753 + $0x28] sm:$0xff]
        %v1186 = vld [vmem:[%s753 + $0x30] sm:$0xff]
        %v1187 = vld [vmem:[%s753 + $0x38] sm:$0xff]
        %v1188 = vld [vmem:[%s753 + $0x40] sm:$0xff]
        %v1189 = vld [vmem:[%s753 + $0x48] sm:$0xff]
        %v1190 = vld [vmem:[%s753 + $0x50] sm:$0xff]
        %v1191 = vld [vmem:[%s753 + $0x58] sm:$0xff]
        %v1192 = vld [vmem:[%s753 + $0x60] sm:$0xff]
        %v1193 = vld [vmem:[%s753 + $0x68] sm:$0xff]
        %v1194 = vld [vmem:[%s753 + $0x70] sm:$0xff]
        %v1195 = vld [vmem:[%s753 + $0x78] sm:$0xff]
        %v1196 = vld [vmem:[%s904] sm:$0x1]
        %v1198 = vperm.slane %v1196, 0
        %1200 = vmatpush.msra.mxu0 %v1195
        %1201 = vmatpush.msra.mxu0 %v1194
        %1202 = vmatpush.msra.mxu0 %v1193
        %1203 = vmatpush.msra.mxu0 %v1192
        %1204 = vmatpush.msra.mxu0 %v1191
        %1205 = vmatpush.msra.mxu0 %v1190
        %1206 = vmatpush.msra.mxu0 %v1189
        %1207 = vmatpush.msra.mxu0 %v1188
        %1208 = vmatpush.msra.mxu0 %v1187
        %1209 = vmatpush.msra.mxu0 %v1186
        %1210 = vmatpush.msra.mxu0 %v1185
        %1211 = vmatpush.msra.mxu0 %v1184
        %1212 = vmatpush.msra.mxu0 %v1183
        %1213 = vmatpush.msra.mxu0 %v1182
        %1214 = vmatpush.msra.mxu0 %v1181
        %1215 = vmatpush.msra.mxu0 %v1180
        %1216 = vmatmul.f32.gmra.mxu0 %v1176
        %v1217 = vpop.f32.mrf.mxu0
        %v1218 = vadd.f32 %v1198, %v1217
        %1219 = vmatmul.f32.gmra.mxu0 %v1177
        %v1220 = vpop.f32.mrf.mxu0
        %v1221 = vadd.f32 %v1198, %v1220
        %1222 = vmatmul.f32.gmra.mxu0 %v1178
        %v1223 = vpop.f32.mrf.mxu0
        %v1224 = vadd.f32 %v1198, %v1223
        %1225 = vmatmul.f32.gmra.mxu0 %v1179
        %v1226 = vpop.f32.mrf.mxu0
        %v1227 = vadd.f32 %v1198, %v1226
        %1228 = vdwg.mxu0
        %v1229 = vmul.f32 %v1218, %v1218
        %v1230 = vmul.f32 %v1221, %v1221
        %v1231 = vmul.f32 %v1224, %v1224
        %v1232 = vmul.f32 %v1227, %v1227
        %v1233 = vmul.f32 %v1218, %v1229
        %v1234 = vmul.f32 %v1221, %v1230
        %v1235 = vmul.f32 %v1224, %v1231
        %v1236 = vmul.f32 %v1227, %v1232
        %v1237 = vmul.f32 %v1233, 0.044715
        %v1238 = vmul.f32 %v1234, 0.044715
        %v1239 = vmul.f32 %v1235, 0.044715
        %v1240 = vmul.f32 %v1236, 0.044715
        %v1241 = vadd.f32 %v1218, %v1237
        %v1242 = vadd.f32 %v1221, %v1238
        %v1243 = vadd.f32 %v1224, %v1239
        %v1244 = vadd.f32 %v1227, %v1240
        %v1245 = vmul.f32 %v1241, 0.7978846
        %v1246 = vmul.f32 %v1242, 0.7978846
        %v1247 = vmul.f32 %v1243, 0.7978846
        %v1248 = vmul.f32 %v1244, 0.7978846
        %v1249 = vtanh.pop %v1245
        %v1250 = vtanh.pop %v1246
        %v1251 = vtanh.pop %v1247
        %v1252 = vtanh.pop %v1248
        %v1253 = vadd.f32 %v1249, 1.0
        %v1254 = vadd.f32 %v1250, 1.0
        %v1255 = vadd.f32 %v1251, 1.0
        %v1256 = vadd.f32 %v1252, 1.0
        %v1257 = vmul.f32 %v1253, 0.5
        %v1258 = vmul.f32 %v1254, 0.5
        %v1259 = vmul.f32 %v1255, 0.5
        %v1260 = vmul.f32 %v1256, 0.5
        %v1261 = vmul.f32 %v1218, %v1257
        %v1262 = vmul.f32 %v1221, %v1258
        %v1263 = vmul.f32 %v1224, %v1259
        %v1264 = vmul.f32 %v1227, %v1260
        %v1265 = vld [vmem:[#allocation4] sm:$0xff]
        %v1266 = vld [vmem:[#allocation4 + $0x8] sm:$0xff]
        %v1267 = vld [vmem:[#allocation4 + $0x10] sm:$0xff]
        %v1268 = vld [vmem:[#allocation4 + $0x18] sm:$0xff]
        %v1269 = vld [vmem:[%s909] sm:$0xff]
        %v1270 = vld [vmem:[%s909 + $0x8] sm:$0xff]
        %v1271 = vld [vmem:[%s909 + $0x10] sm:$0xff]
        %v1272 = vld [vmem:[%s909 + $0x18] sm:$0xff]
        %v1273 = vld [vmem:[%s909 + $0x20] sm:$0xff]
        %v1274 = vld [vmem:[%s909 + $0x28] sm:$0xff]
        %v1275 = vld [vmem:[%s909 + $0x30] sm:$0xff]
        %v1276 = vld [vmem:[%s909 + $0x38] sm:$0xff]
        %v1277 = vld [vmem:[%s909 + $0x40] sm:$0xff]
        %v1278 = vld [vmem:[%s909 + $0x48] sm:$0xff]
        %v1279 = vld [vmem:[%s909 + $0x50] sm:$0xff]
        %v1280 = vld [vmem:[%s909 + $0x58] sm:$0xff]
        %v1281 = vld [vmem:[%s909 + $0x60] sm:$0xff]
        %v1282 = vld [vmem:[%s909 + $0x68] sm:$0xff]
        %v1283 = vld [vmem:[%s909 + $0x70] sm:$0xff]
        %v1284 = vld [vmem:[%s909 + $0x78] sm:$0xff]
        %1285 = vmatpush.msra.mxu0 %v1284
        %1286 = vmatpush.msra.mxu0 %v1283
        %1287 = vmatpush.msra.mxu0 %v1282
        %1288 = vmatpush.msra.mxu0 %v1281
        %1289 = vmatpush.msra.mxu0 %v1280
        %1290 = vmatpush.msra.mxu0 %v1279
        %1291 = vmatpush.msra.mxu0 %v1278
        %1292 = vmatpush.msra.mxu0 %v1277
        %1293 = vmatpush.msra.mxu0 %v1276
        %1294 = vmatpush.msra.mxu0 %v1275
        %1295 = vmatpush.msra.mxu0 %v1274
        %1296 = vmatpush.msra.mxu0 %v1273
        %1297 = vmatpush.msra.mxu0 %v1272
        %1298 = vmatpush.msra.mxu0 %v1271
        %1299 = vmatpush.msra.mxu0 %v1270
        %1300 = vmatpush.msra.mxu0 %v1269
        %1301 = vmatmul.f32.gmra.mxu0 %v1261
        %v1302 = vpop.f32.mrf.mxu0
        %v1303 = vadd.f32 0.0, %v1302
        %1304 = vmatmul.f32.gmra.mxu0 %v1262
        %v1305 = vpop.f32.mrf.mxu0
        %v1306 = vadd.f32 0.0, %v1305
        %1307 = vmatmul.f32.gmra.mxu0 %v1263
        %v1308 = vpop.f32.mrf.mxu0
        %v1309 = vadd.f32 0.0, %v1308
        %1310 = vmatmul.f32.gmra.mxu0 %v1264
        %v1311 = vpop.f32.mrf.mxu0
        %v1312 = vadd.f32 0.0, %v1311
        %1313 = vdwg.mxu0
        %v1314 = vadd.f32 %v1265, %v1303
        %v1315 = vadd.f32 %v1266, %v1306
        %v1316 = vadd.f32 %v1267, %v1309
        %v1317 = vadd.f32 %v1268, %v1312
        %1318 = vst [vmem:[#allocation4] sm:$0xff] %v1314
        %1319 = vst [vmem:[#allocation4 + $0x8] sm:$0xff] %v1315
        %1320 = vst [vmem:[#allocation4 + $0x10] sm:$0xff] %v1316
        %1321 = vst [vmem:[#allocation4 + $0x18] sm:$0xff] %v1317
        %p1322 = scmp.eq.s32.totalorder %s36, 3
        // Predicated region
        $region135: #{cog_tau_block.5} parent=125 // pred_check
          %p1323 = pneg %p1322
        $region136: #{cog_tau_block.5} parent=125 // pred_check_branch
          %1325 = sbr.rel (%p1323) target = $region138
        $region137: #{cog_tau_block.5} parent=125 // pred_region
          %v1326 = vld [vmem:[%s901] sm:$0x1]
          %v1327 = vld [vmem:[%s892] sm:$0x1]
          %v1328 = vsel %vm932, 1, 0
          %v1329 = vsel %vm933, 1, 0
          %v1330 = vsel %vm934, 1, 0
          %v1331 = vsel %vm935, 1, 0
          %vm1332 = vcmp.eq.s32.totalorder %v1328, 1
          %vm1333 = vcmp.eq.s32.totalorder %v1329, 1
          %vm1334 = vcmp.eq.s32.totalorder %v1330, 1
          %vm1335 = vcmp.eq.s32.totalorder %v1331, 1
          %v1337 = vperm.slane %v1326, 0
          %v1340 = vperm.slane %v1327, 0
          %v1342 = vsel %vm1332, %v1337, %v1340
          %v1343 = vsel %vm1333, %v1337, %v1340
          %v1344 = vsel %vm1334, %v1337, %v1340
          %v1345 = vsel %vm1335, %v1337, %v1340
          %v1346 = vld [vmem:[#allocation2] sm:$0xff]
          %v1347 = vld [vmem:[#allocation2 + $0x8] sm:$0xff]
          %v1348 = vld [vmem:[#allocation2 + $0x10] sm:$0xff]
          %v1349 = vld [vmem:[#allocation2 + $0x18] sm:$0xff]
          %v1350 = vld [vmem:[#allocation4] sm:$0xff]
          %v1351 = vld [vmem:[#allocation4 + $0x8] sm:$0xff]
          %v1352 = vld [vmem:[#allocation4 + $0x10] sm:$0xff]
          %v1353 = vld [vmem:[#allocation4 + $0x18] sm:$0xff]
          %v1354 = vld [vmem:[%s17] sm:$0x1]
          %v1356 = vperm.slane %v1354, 0
          %v1358 = vadd.f32 %v1350, %v1356
          %v1359 = vadd.f32 %v1351, %v1356
          %v1360 = vadd.f32 %v1352, %v1356
          %v1361 = vadd.f32 %v1353, %v1356
          %v1362 = vmul.f32 %v1342, %v1358
          %v1363 = vmul.f32 %v1343, %v1359
          %v1364 = vmul.f32 %v1344, %v1360
          %v1365 = vmul.f32 %v1345, %v1361
          %v1366 = vadd.f32 %v1346, %v1362
          %v1367 = vadd.f32 %v1347, %v1363
          %v1368 = vadd.f32 %v1348, %v1364
          %v1369 = vadd.f32 %v1349, %v1365
          %1370 = vst [vmem:[%s919] sm:$0xff] %v1366
          %1371 = vst [vmem:[%s919 + $0x8] sm:$0xff] %v1367
          %1372 = vst [vmem:[%s919 + $0x10] sm:$0xff] %v1368
          %1373 = vst [vmem:[%s919 + $0x18] sm:$0xff] %v1369
        $region138: #{cog_tau_block.5} parent=125 // pred_fallthru
          _
        %s1374 = smul.u32 4, %s35
        %p1375 = scmp.lt.s32.totalorder %s34, 1
        %s1376 = scalar_select %p1375, %s34, 1
        %p1377 = scmp.lt.s32.totalorder %s1374, 7
        %s1378 = scalar_select %p1377, %s1374, 7
        %s1379 = smul.addr %s1376, 8
        %s1380 = sadd.s32 %s1378, %s1379
        %s1381 = smul.addr %s1380, 8
        %s1382 = scalar_lea.vmem %s18, %s1381
        // Predicated region
        $region139: #{cog_tau_block.5} parent=125 // pred_check
          %p1383 = pneg %p515
        $region140: #{cog_tau_block.5} parent=125 // pred_check_branch
          %1385 = sbr.rel (%p1383) target = $region142
        $region141: #{cog_tau_block.5} parent=125 // pred_region
          %s1386 = smul.u32 4, %s35
        $region142: #{cog_tau_block.5} parent=125 // pred_fallthru
          _
      $region126: #{cog_tau_block.5} parent=5 // pred_fallthru
        _
      %p1387 = scmp.le.s32.totalorder 2, %s24
      // Predicated region
      $region143: #{cog_tau_block.5} parent=5 // pred_check
        %p1388 = pneg %p1387
      $region144: #{cog_tau_block.5} parent=5 // pred_check_branch
        %1390 = sbr.rel (%p1388) target = $region146
      $region145: #{cog_tau_block.5} parent=5 // pred_region
        %s1391 = ssub.s32 %s24, 2
        // Predicated region
        $region147: #{cog_tau_block.5} parent=145 // pred_check
          %p1392 = pneg %p521
        $region148: #{cog_tau_block.5} parent=145 // pred_check_branch
          %1394 = sbr.rel (%p1392) target = $region150
        $region149: #{cog_tau_block.5} parent=145 // pred_region
          %s1395 = smul.u32 4, %s38
          %p1396 = scmp.lt.s32.totalorder %s37, 1
          %s1397 = scalar_select %p1396, %s37, 1
          %p1398 = scmp.lt.s32.totalorder %s1395, 7
          %s1399 = scalar_select %p1398, %s1395, 7
          %s1400 = smul.addr %s1397, 8
          %s1401 = sadd.s32 %s1399, %s1400
          %s1402 = smul.addr %s1401, 8
          %s1403 = scalar_lea.vmem %s18, %s1402
        $region150: #{cog_tau_block.5} parent=145 // pred_fallthru
          _
      $region146: #{cog_tau_block.5} parent=5 // pred_fallthru
        _
    $region6: #{cog_tau_block.5} parent=1 // loop_footer
      %s28 = sadd.s32 1, %s24
    $region7: #{cog_tau_block.5} parent=1 // loop_footer_branch
      %23 = sbr.rel target = $region3
    $region8: #{cog_tau_block.5} parent=1 // loop_exit
      _

</llo_original>
